<compile_context>
chip_gen: v5e
topology: v5e:2x2
jax: 0.10.0
libtpu: 0.0.40
codegen_flags: <defaults>
</compile_context>

<pallas_src>
import jax
import jax.numpy as jnp
from jax.experimental import pallas as pl
from jax.experimental.pallas import tpu as pltpu

# ---- model dims (from STaRNet.__init__) ----
C_IN = 22          # EEG electrodes
F_SP = 32          # spatial block output maps (temporal block expects 32)
D_FEAT = 1024      # LayerNorm / covariance feature dim
R_BI = 32          # BilinearMapping output dim
NUM_CLASSES = 4
K_T = 8            # TODO(synk): MultiScaleTemporalBlock undefined; single-scale strided conv
S_T = 4            # temporal conv stride
LN_EPS = 1e-5
COV_EPS = 1e-4
CK_PAD = 256       # contraction dim (C_IN*K_T = 176) zero-padded to a multiple of 128
BATCH_TILE = 32    # samples per grid step; live f32 temps ~16-20 MiB at T=32 (fits scoped VMEM)


# ---------------- fused Pallas kernel ----------------

def _fused_kernel(p_ref, w_ref, wbi_ref, gram_ref, o_ref):
    """Temporal conv matmul + LayerNorm(1024) + _cov + bilinear map, fused.

    p_ref   : (Bt*T, CKp) bf16  im2col patches of the raw EEG input (zero-padded K dim)
    w_ref   : (CKp, D)    bf16  spatial weight folded into temporal weight (zero-padded rows)
    wbi_ref : (D, R)      bf16  bilinear weight with LayerNorm gamma folded in
    gram_ref: (R, R)      f32   COV_EPS * (W_bi^T W_bi)   (original, un-scaled W_bi)
    o_ref   : (Bt, R, R)  f32   SPD matrix per sample
    """
    Bt, R, _ = o_ref.shape
    M = p_ref.shape[0]
    T = M // Bt

    # strided temporal conv (spatial folded in) as one big MXU matmul: bf16 in, f32 acc
    y = jnp.dot(p_ref[...], w_ref[...], preferred_element_type=jnp.float32)   # (M, D)

    # LayerNorm over D=1024: one-pass moments, elementwise math in f32 (v5e has no bf16 VPU).
    # gamma is folded into wbi_ref; beta cancels in the time-centering below, so no affine here.
    mu = jnp.mean(y, axis=-1, keepdims=True)
    var = jnp.mean(y * y, axis=-1, keepdims=True) - mu * mu
    xn = (y - mu) * jax.lax.rsqrt(var + LN_EPS)

    # Project onto W_bi BEFORE any covariance:
    #   W^T (Yc^T Yc/(T-1) + eps I) W == (Yc W)^T (Yc W)/(T-1) + eps (W^T W)
    # and centering over time commutes with the right-linear map, so center the
    # tiny (T, R) projection instead of the (T, D) activation.
    pr = jnp.dot(xn.astype(wbi_ref.dtype), wbi_ref[...],
                 preferred_element_type=jnp.float32)                          # (M, R)
    pr = pr.reshape(Bt, T, R)
    pc = pr - jnp.mean(pr, axis=1, keepdims=True)                             # center over time
    # explicit batched dot_general -> batched MXU matmul (not an XLU transpose loop)
    cov = jax.lax.dot_general(pc, pc,
                              dimension_numbers=(((1,), (1,)), ((0,), (0,))),
                              preferred_element_type=jnp.float32) / (T - 1)   # (Bt, R, R)
    o_ref[...] = cov + gram_ref[...]                                          # + eps * (W^T W)


def fused_spd(p, w_comb, w_bi_eff, gram):
    """p: (B, T, CK) bf16 -> (B, R_BI, R_BI) f32 SPD matrices."""
    B, T, CK = p.shape
    D, R = w_bi_eff.shape

    # zero-pad the contraction dim to a multiple of 128 lanes (exact: zero rows add nothing)
    ck = max(CK_PAD, ((CK + 127) // 128) * 128)
    if ck != CK:
        p = jnp.pad(p, ((0, 0), (0, 0), (0, ck - CK)))
        w_comb = jnp.pad(w_comb, ((0, ck - CK), (0, 0)))

    # batch tile: large enough to amortize the ~0.35us per-step overhead, small enough
    # for VMEM; for small B use ~ceil(B/2) so both v7x TensorCores get a grid step.
    bt = min(BATCH_TILE, max(1, pl.cdiv(B, 2)))
    if (bt * T) % 8 != 0:
        bt = B                       # single full-extent block (sublane rule satisfied trivially)
    nb = pl.cdiv(B, bt)
    Bp = nb * bt
    if Bp != B:                      # pad batch; padded samples give finite gram-only outputs
        p = jnp.pad(p, ((0, Bp - B), (0, 0), (0, 0)))
    p2 = p.reshape(Bp * T, ck)       # host-side flatten -> lane-dense 2-D block in the kernel

    out = pl.pallas_call(
        _fused_kernel,
        out_shape=jax.ShapeDtypeStruct((Bp, R, R), jnp.float32),
        grid=(nb,),
        in_specs=[pl.BlockSpec((bt * T, ck), lambda i: (i, 0)),
                  pl.BlockSpec((ck, D), lambda i: (0, 0)),
                  pl.BlockSpec((D, R), lambda i: (0, 0)),
                  pl.BlockSpec((R, R), lambda i: (0, 0))],
        out_specs=pl.BlockSpec((bt, R, R), lambda i: (i, 0, 0)),
        compiler_params=pltpu.CompilerParams(
            dimension_semantics=("parallel",),   # batch-tile axis shards across v7x's 2 TCs
            vmem_limit_bytes=48 << 20),          # headroom for Bt=32 temps; < v7x 64 MiB physical
    )(p2, w_comb, w_bi_eff, gram)
    return out[:B]


# ---------------- plain-JAX glue ----------------

def _im2col(x):
    # (B, C, L) -> (B, T, C*K_T) patches for the strided temporal conv,
    # built from K_T strided slices (no XLA gather).
    B, C, L = x.shape
    T = (L - K_T) // S_T + 1
    cols = [x[:, :, k:k + S_T * T:S_T] for k in range(K_T)]        # each (B, C, T)
    patches = jnp.stack(cols, axis=-1)                             # (B, C, T, K)
    return jnp.transpose(patches, (0, 2, 1, 3)).reshape(B, T, C * K_T)


def _fold_weights(w_sp, w_t):
    # W_comb[(c,k), d] = sum_f W_sp[f, c] * W_t[(f,k), d]   -> (C*K_T, D)
    F, C = w_sp.shape
    wt = w_t.reshape(F, K_T, D_FEAT)
    return jnp.einsum('fc,fkd->ckd', w_sp, wt).reshape(C * K_T, D_FEAT)


def log_eig(m):
    # TODO(synk): LogEig needs a symmetric eigendecomposition; no Pallas/Mosaic
    # eig primitive exists, so this stays in plain JAX (XLA eigh).
    lam, v = jnp.linalg.eigh(m)
    lam = jnp.log(jnp.maximum(lam, 1e-8))
    return jnp.einsum('...ij,...j,...kj->...ik', v, lam, v)


def forward_once(x, params):
    B = x.shape[0]
    p = _im2col(x).astype(jnp.bfloat16)
    w_comb = _fold_weights(params['w_sp'], params['w_t']).astype(jnp.bfloat16)
    w_bi = params['w_bi']                                   # f32 (D, R)
    gram = COV_EPS * jnp.dot(w_bi.T, w_bi)                  # exact eps-term after bilinear map
    # LayerNorm gamma commutes into the right-linear map; beta is constant over time and
    # cancels exactly in the time-centering, so it is dropped (provably a no-op here).
    w_bi_eff = (params['ln_g'].reshape(-1, 1) * w_bi).astype(jnp.bfloat16)
    m = fused_spd(p, w_comb, w_bi_eff, gram)                # (B, 32, 32) SPD
    z = log_eig(m)
    # RiemannianFC: (B,1024)x(1024,4)+bias is tiny -> plain JAX (a kernel would only add overhead)
    return jnp.dot(z.reshape(B, R_BI * R_BI), params['w_fc']) + params['b_fc']


def starnet_forward(x, params):
    if x.ndim == 3:
        return forward_once(x, params)
    if x.ndim != 4:
        raise RuntimeError('Input must be 3- or 4-D')
    if x.shape[1] == 22:
        # matches torch x.permute(0, 3, 1, 2): 4-D input is (B, C=22, L, K_crops)
        x = jnp.transpose(x, (0, 3, 1, 2))
    B, K, C, L = x.shape
    flat = x.reshape(B * K, C, L)
    out = forward_once(flat, params)       # torch CHUNK loop is pure memory management
    return jax.nn.softmax(out.reshape(B, K, -1), axis=-1).mean(axis=1)


def init_params(key):
    k1, k2, k3, k4 = jax.random.split(key, 4)
    w_sp = jax.random.normal(k1, (F_SP, C_IN), jnp.float32) / jnp.sqrt(float(C_IN))
    w_t = jax.random.normal(k2, (F_SP * K_T, D_FEAT), jnp.float32) / jnp.sqrt(float(F_SP * K_T))
    ln_g = jnp.ones((1, D_FEAT), jnp.float32)     # nn.LayerNorm default affine init
    ln_b = jnp.zeros((1, D_FEAT), jnp.float32)    # kept for interface parity; cancels exactly
    # BilinearMapping weight: semi-orthogonal (matches .orthogonalize() intent)
    w_bi = jnp.linalg.qr(jax.random.normal(k3, (D_FEAT, R_BI), jnp.float32))[0]
    w_fc = jax.random.normal(k4, (R_BI * R_BI, NUM_CLASSES), jnp.float32) / jnp.sqrt(float(R_BI * R_BI))
    b_fc = jnp.zeros((1, NUM_CLASSES), jnp.float32)
    return dict(w_sp=w_sp, w_t=w_t, ln_g=ln_g, ln_b=ln_b,
                w_bi=w_bi, w_fc=w_fc, b_fc=b_fc)


if __name__ == "__main__":
    key = jax.random.PRNGKey(0)
    pkey, xkey = jax.random.split(key)
    params = init_params(pkey)

    B, L = 2, 132                 # -> T = (132 - 8)//4 + 1 = 32 time samples
    x = jax.random.normal(xkey, (B, C_IN, L), jnp.float32)

    fwd = jax.jit(starnet_forward)
    out = jax.block_until_ready(fwd(x, params))
    assert out.shape == (B, NUM_CLASSES), out.shape
    assert bool(jnp.all(jnp.isfinite(out)))
    print("KERNEL_OK")
</pallas_src>

<mosaic_0001>
module attributes {stable_mosaic.version = 11 : i64} {
  func.func @_fused_kernel(%arg0: i32, %arg1: memref<32x256xbf16, #tpu.memory_space<vmem>>, %arg2: memref<256x1024xbf16, #tpu.memory_space<vmem>>, %arg3: memref<1024x32xbf16, #tpu.memory_space<vmem>>, %arg4: memref<32x32xf32, #tpu.memory_space<vmem>>, %arg5: memref<1x32x32xf32, #tpu.memory_space<vmem>>) attributes {dimension_semantics = [#tpu.dimension_semantics<parallel>], iteration_bounds = array<i64: 2>, scalar_prefetch = 0 : i64, scratch_operands = 0 : i64, tpu.core_type = #tpu.core_type<tc>, window_params = [{transform_indices = @transform_0, window_bounds = array<i64: 32, 256>}, {pipeline_mode = #tpu.pipeline_mode<synchronous>, transform_indices = @transform_1, window_bounds = array<i64: 256, 1024>}, {pipeline_mode = #tpu.pipeline_mode<synchronous>, transform_indices = @transform_2, window_bounds = array<i64: 1024, 32>}, {pipeline_mode = #tpu.pipeline_mode<synchronous>, transform_indices = @transform_3, window_bounds = array<i64: 32, 32>}, {transform_indices = @transform_4, window_bounds = array<i64: 1, 32, 32>}]} {
    %c0 = arith.constant 0 : index
    %c0_0 = arith.constant 0 : index
    %0 = vector.load %arg1[%c0, %c0_0] : memref<32x256xbf16, #tpu.memory_space<vmem>>, vector<32x256xbf16>
    %c0_1 = arith.constant 0 : index
    %c0_2 = arith.constant 0 : index
    %1 = vector.load %arg2[%c0_1, %c0_2] : memref<256x1024xbf16, #tpu.memory_space<vmem>>, vector<256x1024xbf16>
    %cst = arith.constant dense<0.000000e+00> : vector<32x1024xf32>
    %2 = tpu.matmul %0, %1, %cst {dimension_numbers = #tpu.dot_dimension_numbers<[1], [0], [0], [1], [0, 0, 1, 1], [], []>} : vector<32x256xbf16>, vector<256x1024xbf16>, vector<32x1024xf32> -> vector<32x1024xf32>
    %cst_3 = arith.constant dense<0.000000e+00> : vector<32xf32>
    %3 = vector.multi_reduction <add>, %2, %cst_3 [1] : vector<32x1024xf32> to vector<32xf32>
    %4 = vector.shape_cast %3 : vector<32xf32> to vector<32x1xf32>
    %cst_4 = arith.constant 1.024000e+03 : f32
    %5 = vector.broadcast %cst_4 : f32 to vector<32x1xf32>
    %6 = arith.divf %4, %5 : vector<32x1xf32>
    %7 = arith.mulf %2, %2 : vector<32x1024xf32>
    %cst_5 = arith.constant dense<0.000000e+00> : vector<32xf32>
    %8 = vector.multi_reduction <add>, %7, %cst_5 [1] : vector<32x1024xf32> to vector<32xf32>
    %9 = vector.shape_cast %8 : vector<32xf32> to vector<32x1xf32>
    %cst_6 = arith.constant 1.024000e+03 : f32
    %10 = vector.broadcast %cst_6 : f32 to vector<32x1xf32>
    %11 = arith.divf %9, %10 : vector<32x1xf32>
    %12 = arith.mulf %6, %6 : vector<32x1xf32>
    %13 = arith.subf %11, %12 : vector<32x1xf32>
    %14 = vector.broadcast %6 : vector<32x1xf32> to vector<32x1024xf32>
    %15 = arith.subf %2, %14 : vector<32x1024xf32>
    %cst_7 = arith.constant 9.99999974E-6 : f32
    %16 = vector.broadcast %cst_7 : f32 to vector<32x1xf32>
    %17 = arith.addf %13, %16 : vector<32x1xf32>
    %18 = math.rsqrt %17 : vector<32x1xf32>
    %19 = vector.broadcast %18 : vector<32x1xf32> to vector<32x1024xf32>
    %20 = arith.mulf %15, %19 : vector<32x1024xf32>
    %21 = arith.truncf %20 : vector<32x1024xf32> to vector<32x1024xbf16>
    %c0_8 = arith.constant 0 : index
    %c0_9 = arith.constant 0 : index
    %22 = vector.load %arg3[%c0_8, %c0_9] : memref<1024x32xbf16, #tpu.memory_space<vmem>>, vector<1024x32xbf16>
    %cst_10 = arith.constant dense<0.000000e+00> : vector<32x32xf32>
    %23 = tpu.matmul %21, %22, %cst_10 {dimension_numbers = #tpu.dot_dimension_numbers<[1], [0], [0], [1], [0, 0, 1, 1], [], []>} : vector<32x1024xbf16>, vector<1024x32xbf16>, vector<32x32xf32> -> vector<32x32xf32>
    %24 = vector.shape_cast %23 : vector<32x32xf32> to vector<1x32x32xf32>
    %cst_11 = arith.constant dense<0.000000e+00> : vector<1x32xf32>
    %25 = vector.multi_reduction <add>, %24, %cst_11 [1] : vector<1x32x32xf32> to vector<1x32xf32>
    %26 = vector.shape_cast %25 : vector<1x32xf32> to vector<1x1x32xf32>
    %cst_12 = arith.constant 3.200000e+01 : f32
    %27 = vector.broadcast %cst_12 : f32 to vector<1x1x32xf32>
    %28 = arith.divf %26, %27 : vector<1x1x32xf32>
    %29 = vector.broadcast %28 : vector<1x1x32xf32> to vector<1x32x32xf32>
    %30 = arith.subf %24, %29 : vector<1x32x32xf32>
    %cst_13 = arith.constant dense<0.000000e+00> : vector<1x32x32xf32>
    %31 = tpu.matmul %30, %30, %cst_13 {dimension_numbers = #tpu.dot_dimension_numbers<[1], [1], [2], [2], [0, 0, 0, 2, 1, 2], [0], [0]>} : vector<1x32x32xf32>, vector<1x32x32xf32>, vector<1x32x32xf32> -> vector<1x32x32xf32>
    %cst_14 = arith.constant 3.100000e+01 : f32
    %32 = vector.broadcast %cst_14 : f32 to vector<1x32x32xf32>
    %33 = arith.divf %31, %32 : vector<1x32x32xf32>
    %c0_15 = arith.constant 0 : index
    %c0_16 = arith.constant 0 : index
    %34 = vector.load %arg4[%c0_15, %c0_16] : memref<32x32xf32, #tpu.memory_space<vmem>>, vector<32x32xf32>
    %35 = vector.shape_cast %34 : vector<32x32xf32> to vector<1x32x32xf32>
    %36 = arith.addf %33, %35 : vector<1x32x32xf32>
    %c0_17 = arith.constant 0 : index
    %c0_18 = arith.constant 0 : index
    %c0_19 = arith.constant 0 : index
    %37 = vector.load %arg5[%c0_17, %c0_18, %c0_19] : memref<1x32x32xf32, #tpu.memory_space<vmem>>, vector<1x32x32xf32>
    tpu.vector_store %arg5[%c0_17, %c0_18, %c0_19], %36 {strides = array<i32>} : memref<1x32x32xf32, #tpu.memory_space<vmem>>, vector<1x32x32xf32>,
    return
  }
  func.func @transform_0(%arg0: i32) -> (i32, i32) {
    %c0_i32 = arith.constant 0 : i32
    %c0_i32_0 = arith.constant 0 : i32
    return %arg0, %c0_i32 : i32, i32
  }
  func.func @transform_1(%arg0: i32) -> (i32, i32) {
    %c0_i32 = arith.constant 0 : i32
    %c0_i32_0 = arith.constant 0 : i32
    %c0_i32_1 = arith.constant 0 : i32
    return %c0_i32, %c0_i32_0 : i32, i32
  }
  func.func @transform_2(%arg0: i32) -> (i32, i32) {
    %c0_i32 = arith.constant 0 : i32
    %c0_i32_0 = arith.constant 0 : i32
    %c0_i32_1 = arith.constant 0 : i32
    return %c0_i32, %c0_i32_0 : i32, i32
  }
  func.func @transform_3(%arg0: i32) -> (i32, i32) {
    %c0_i32 = arith.constant 0 : i32
    %c0_i32_0 = arith.constant 0 : i32
    %c0_i32_1 = arith.constant 0 : i32
    return %c0_i32, %c0_i32_0 : i32, i32
  }
  func.func @transform_4(%arg0: i32) -> (i32, i32, i32) {
    %c0_i32 = arith.constant 0 : i32
    %c0_i32_0 = arith.constant 0 : i32
    %c0_i32_1 = arith.constant 0 : i32
    return %arg0, %c0_i32, %c0_i32_0 : i32, i32, i32
  }
}

</mosaic_0001>

<llo_original>
// kernel: custom-call.2
$region0: #{custom-call.2}
  %s0 = inlined_call_operand.vmem [shape: f32[2,16,16], index: 0, kind: input, shape index: {}]
  %s1 = inlined_call_operand.vmem [shape: f32[2,16,16], index: 1, kind: input, shape index: {}]
  %s2 = inlined_call_operand.vmem [shape: f32[2,16,16], index: 2, kind: input, shape index: {}]
  %s3 = inlined_call_operand.vmem [shape: f32[2,16,16], index: 3, kind: input, shape index: {}]
  %s4 = inlined_call_operand.vmem [shape: f32[2,16], index: 4, kind: output, shape index: {0}]
  %s5 = inlined_call_operand.vmem [shape: f32[2,16], index: 5, kind: output, shape index: {1}]
  %s6 = inlined_call_operand.vmem [shape: f32[2,16,16], index: 6, kind: output, shape index: {2}]
  %s7 = inlined_call_operand.vmem [shape: f32[2,16,16], index: 7, kind: output, shape index: {3}]
  %s8 = inlined_call_operand.vmem [shape: f32[2,16,16], index: 8, kind: output, shape index: {4}]
  %s9 = inlined_call_operand.vmem [shape: f32[2,16,16], index: 9, kind: output, shape index: {5}]
  %10 = xla_tuple %s4, %s5, %s6, %s7, %s8, %s9
  $region1: #{custom-call.2} parent=0
    #allocation0 [shape = 'u8[16384]{0}', space=vmem, size = 0x4000, scoped, tag = 'operand span for operand 0']
    #allocation1 [shape = 'u8[16384]{0}', space=vmem, size = 0x4000, scoped, tag = 'operand span for operand 1']
    #allocation2 [shape = 'u8[16384]{0}', space=vmem, size = 0x4000, scoped, tag = 'operand span for operand 2']
    #allocation3 [shape = 'u8[16384]{0}', space=vmem, size = 0x4000, scoped, tag = 'operand span for operand 3']
    #allocation4 [shape = 'u8[4096]{0}', space=vmem, size = 0x1000, scoped, tag = 'operand span for operand 4']
    #allocation5 [shape = 'u8[2048]{0}', space=vmem, size = 0x800, scoped, tag = 'packed  for operand 4']
    #allocation6 [shape = 'u8[4096]{0}', space=vmem, size = 0x1000, scoped, tag = 'operand span for operand 5']
    #allocation7 [shape = 'u8[2048]{0}', space=vmem, size = 0x800, scoped, tag = 'packed  for operand 5']
    #allocation8 [shape = 'u8[16384]{0}', space=vmem, size = 0x4000, scoped, tag = 'operand span for operand 6']
    #allocation9 [shape = 'u8[16384]{0}', space=vmem, size = 0x4000, scoped, tag = 'operand span for operand 7']
    #allocation10 [shape = 'u8[16384]{0}', space=vmem, size = 0x4000, scoped, tag = 'operand span for operand 8']
    #allocation11 [shape = 'u8[16384]{0}', space=vmem, size = 0x4000, scoped, tag = 'operand span for operand 9']
    loop: start=0, step=1, limit=4
    $region2: #{custom-call.2} parent=1 // loop_pre_header
      _
    $region3: #{custom-call.2} parent=1 // loop_header
      %s12 = sphi 0, %s16
      %p13 = scmp.ge.s32.totalorder %s12, 4
      %s24 = sphi 0, %s26
      %s27 = sphi 0, %s24
      %s28 = sphi 0, %s27
      %s44 = sphi 0, %s28
      %s52 = sphi 0, %s54
      %s55 = sphi 0, %s52
      %s56 = sphi 0, %s55
      %s72 = sphi 0, %s56
    $region4: #{custom-call.2} parent=1 // loop_header_branch
      %15 = sbr.rel (%p13) target = $region8
    $region5: #{custom-call.2} parent=1 // loop_body
      %s17 = ssub.s32 %s12, 1
      %s18 = ssub.s32 %s12, 2
      %s19 = sadd.s32 %s12, 1
      %s20 = sshrl.u32 %s12, 3
      %s21 = sshrl.u32 %s19, 3
      %s22 = ssub.s32 %s20, %s21
      %p23 = scmp.eq.s32.totalorder %s22, 0
      %s25 = sadd.s32 %s24, 1
      %s26 = scalar_select %p23, %s24, %s25
      %p29 = pneg %p23
      %p30 = scmp.eq.s32.totalorder %s12, 1
      %p31 = por %p29, %p30
      %p32 = scmp.ne.s32.totalorder %s24, %s27
      %p33 = scmp.eq.s32.totalorder %s12, 0
      %p34 = por %p32, %p33
      %p35 = scmp.ne.s32.totalorder %s24, %s27
      %p36 = scmp.eq.s32.totalorder %s17, 1
      %p37 = por %p35, %p36
      %p38 = scmp.ne.s32.totalorder %s27, %s28
      %p39 = scmp.eq.s32.totalorder %s17, 0
      %p40 = por %p38, %p39
      %p41 = scmp.ne.s32.totalorder %s27, %s28
      %p42 = scmp.eq.s32.totalorder %s18, 1
      %p43 = por %p41, %p42
      %p45 = scmp.ne.s32.totalorder %s28, %s44
      %p46 = scmp.eq.s32.totalorder %s18, 0
      %p47 = por %p45, %p46
      %s48 = sshrl.u32 %s12, 3
      %s49 = sshrl.u32 %s19, 3
      %s50 = ssub.s32 %s48, %s49
      %p51 = scmp.eq.s32.totalorder %s50, 0
      %s53 = sadd.s32 %s52, 1
      %s54 = scalar_select %p51, %s52, %s53
      %p57 = pneg %p51
      %p58 = scmp.eq.s32.totalorder %s12, 1
      %p59 = por %p57, %p58
      %p60 = scmp.ne.s32.totalorder %s52, %s55
      %p61 = scmp.eq.s32.totalorder %s12, 0
      %p62 = por %p60, %p61
      %p63 = scmp.ne.s32.totalorder %s52, %s55
      %p64 = scmp.eq.s32.totalorder %s17, 1
      %p65 = por %p63, %p64
      %p66 = scmp.ne.s32.totalorder %s55, %s56
      %p67 = scmp.eq.s32.totalorder %s17, 0
      %p68 = por %p66, %p67
      %p69 = scmp.ne.s32.totalorder %s55, %s56
      %p70 = scmp.eq.s32.totalorder %s18, 1
      %p71 = por %p69, %p70
      %p73 = scmp.ne.s32.totalorder %s56, %s72
      %p74 = scmp.eq.s32.totalorder %s18, 0
      %p75 = por %p73, %p74
      %p76 = scmp.le.s32.totalorder 1, %s12
      %p77 = scmp.lt.s32.totalorder %s12, 3
      %p78 = pnand %p76, %p77
      %p79 = pneg %p78
      // Predicated region
      $region9: #{custom-call.2} parent=5 // pred_check
        _
      $region10: #{custom-call.2} parent=5 // pred_check_branch
        %81 = sbr.rel (%p78) target = $region12
      $region11: #{custom-call.2} parent=5 // pred_region
        %s82 = ssub.s32 %s12, 1
      $region12: #{custom-call.2} parent=5 // pred_fallthru
        _
      %p83 = scmp.lt.s32.totalorder %s12, 2
      // Predicated region
      $region13: #{custom-call.2} parent=5 // pred_check
        %p84 = pneg %p83
      $region14: #{custom-call.2} parent=5 // pred_check_branch
        %86 = sbr.rel (%p84) target = $region16
      $region15: #{custom-call.2} parent=5 // pred_region
        %s87 = sand.u32 %s12, 1
        %s88 = sand.u32 %s12, 1
        %s89 = smul.addr %s88, 16
        %s90 = scalar_lea.vmem [#allocation0], %s89
        %s91 = smul.addr %s12, 16
        %s92 = scalar_lea.vmem %s0, %s91
        // Predicated region
        $region17: #{custom-call.2} parent=15 // pred_check
          _
        $region18: #{custom-call.2} parent=15 // pred_check_branch
          %94 = sbr.rel (0) target = $region20
        $region19: #{custom-call.2} parent=15 // pred_region
          // Predicated region
          $region21: #{custom-call.2} parent=19 // pred_check
            _
          $region22: #{custom-call.2} parent=19 // pred_check_branch
            %96 = sbr.rel (0) target = $region24
          $region23: #{custom-call.2} parent=19 // pred_region
            loop: start=0, step=1, limit=1
            $region25: #{custom-call.2} parent=23 // loop_pre_header
              _
            $region26: #{custom-call.2} parent=23 // loop_header
              %s98 = sphi 0, %s102
              %p99 = scmp.ge.s32.totalorder %s98, 1
              %s103 = sphi %s92, %s92
              %s104 = sphi %s90, %s90
            $region27: #{custom-call.2} parent=23 // loop_header_branch
              %101 = sbr.rel (%p99) target = $region31
            $region28: #{custom-call.2} parent=23 // loop_body
              %v105 = vld [vmem:[%s103] sm:$0xff]
              %106 = vst [vmem:[%s104] sm:$0xff] %v105
              %v107 = vld [vmem:[%s103 + $0x8] sm:$0xff]
              %108 = vst [vmem:[%s104 + $0x8] sm:$0xff] %v107
            $region29: #{custom-call.2} parent=23 // loop_footer
              %s102 = sadd.s32 1, %s98
            $region30: #{custom-call.2} parent=23 // loop_footer_branch
              %97 = sbr.rel target = $region26
            $region31: #{custom-call.2} parent=23 // loop_exit
              _
          $region24: #{custom-call.2} parent=19 // pred_fallthru
            _
          // Predicated region
          $region32: #{custom-call.2} parent=19 // pred_check
            _
          $region33: #{custom-call.2} parent=19 // pred_check_branch
            %110 = sbr.rel target = $region35
          $region34: #{custom-call.2} parent=19 // pred_region
            _
          $region35: #{custom-call.2} parent=19 // pred_fallthru
            _
        $region20: #{custom-call.2} parent=15 // pred_fallthru
          _
        %111 = vnop
        %s112 = sand.u32 %s12, 1
        %s113 = sand.u32 %s12, 1
        %s114 = smul.addr %s113, 16
        %s115 = scalar_lea.vmem [#allocation1], %s114
        %s116 = smul.addr %s12, 16
        %s117 = scalar_lea.vmem %s1, %s116
        // Predicated region
        $region36: #{custom-call.2} parent=15 // pred_check
          _
        $region37: #{custom-call.2} parent=15 // pred_check_branch
          %119 = sbr.rel (0) target = $region39
        $region38: #{custom-call.2} parent=15 // pred_region
          // Predicated region
          $region40: #{custom-call.2} parent=38 // pred_check
            _
          $region41: #{custom-call.2} parent=38 // pred_check_branch
            %121 = sbr.rel (0) target = $region43
          $region42: #{custom-call.2} parent=38 // pred_region
            loop: start=0, step=1, limit=1
            $region44: #{custom-call.2} parent=42 // loop_pre_header
              _
            $region45: #{custom-call.2} parent=42 // loop_header
              %s123 = sphi 0, %s127
              %p124 = scmp.ge.s32.totalorder %s123, 1
              %s128 = sphi %s117, %s117
              %s129 = sphi %s115, %s115
            $region46: #{custom-call.2} parent=42 // loop_header_branch
              %126 = sbr.rel (%p124) target = $region50
            $region47: #{custom-call.2} parent=42 // loop_body
              %v130 = vld [vmem:[%s128] sm:$0xff]
              %131 = vst [vmem:[%s129] sm:$0xff] %v130
              %v132 = vld [vmem:[%s128 + $0x8] sm:$0xff]
              %133 = vst [vmem:[%s129 + $0x8] sm:$0xff] %v132
            $region48: #{custom-call.2} parent=42 // loop_footer
              %s127 = sadd.s32 1, %s123
            $region49: #{custom-call.2} parent=42 // loop_footer_branch
              %122 = sbr.rel target = $region45
            $region50: #{custom-call.2} parent=42 // loop_exit
              _
          $region43: #{custom-call.2} parent=38 // pred_fallthru
            _
          // Predicated region
          $region51: #{custom-call.2} parent=38 // pred_check
            _
          $region52: #{custom-call.2} parent=38 // pred_check_branch
            %135 = sbr.rel target = $region54
          $region53: #{custom-call.2} parent=38 // pred_region
            _
          $region54: #{custom-call.2} parent=38 // pred_fallthru
            _
        $region39: #{custom-call.2} parent=15 // pred_fallthru
          _
        %136 = vnop
        %s137 = sand.u32 %s12, 1
        %s138 = sand.u32 %s12, 1
        %s139 = smul.addr %s138, 16
        %s140 = scalar_lea.vmem [#allocation2], %s139
        %s141 = smul.addr %s12, 16
        %s142 = scalar_lea.vmem %s2, %s141
        // Predicated region
        $region55: #{custom-call.2} parent=15 // pred_check
          _
        $region56: #{custom-call.2} parent=15 // pred_check_branch
          %144 = sbr.rel (0) target = $region58
        $region57: #{custom-call.2} parent=15 // pred_region
          // Predicated region
          $region59: #{custom-call.2} parent=57 // pred_check
            _
          $region60: #{custom-call.2} parent=57 // pred_check_branch
            %146 = sbr.rel (0) target = $region62
          $region61: #{custom-call.2} parent=57 // pred_region
            loop: start=0, step=1, limit=1
            $region63: #{custom-call.2} parent=61 // loop_pre_header
              _
            $region64: #{custom-call.2} parent=61 // loop_header
              %s148 = sphi 0, %s152
              %p149 = scmp.ge.s32.totalorder %s148, 1
              %s153 = sphi %s142, %s142
              %s154 = sphi %s140, %s140
            $region65: #{custom-call.2} parent=61 // loop_header_branch
              %151 = sbr.rel (%p149) target = $region69
            $region66: #{custom-call.2} parent=61 // loop_body
              %v155 = vld [vmem:[%s153] sm:$0xff]
              %156 = vst [vmem:[%s154] sm:$0xff] %v155
              %v157 = vld [vmem:[%s153 + $0x8] sm:$0xff]
              %158 = vst [vmem:[%s154 + $0x8] sm:$0xff] %v157
            $region67: #{custom-call.2} parent=61 // loop_footer
              %s152 = sadd.s32 1, %s148
            $region68: #{custom-call.2} parent=61 // loop_footer_branch
              %147 = sbr.rel target = $region64
            $region69: #{custom-call.2} parent=61 // loop_exit
              _
          $region62: #{custom-call.2} parent=57 // pred_fallthru
            _
          // Predicated region
          $region70: #{custom-call.2} parent=57 // pred_check
            _
          $region71: #{custom-call.2} parent=57 // pred_check_branch
            %160 = sbr.rel target = $region73
          $region72: #{custom-call.2} parent=57 // pred_region
            _
          $region73: #{custom-call.2} parent=57 // pred_fallthru
            _
        $region58: #{custom-call.2} parent=15 // pred_fallthru
          _
        %161 = vnop
        %s162 = sand.u32 %s12, 1
        %s163 = sand.u32 %s12, 1
        %s164 = smul.addr %s163, 16
        %s165 = scalar_lea.vmem [#allocation3], %s164
        %s166 = smul.addr %s12, 16
        %s167 = scalar_lea.vmem %s3, %s166
        // Predicated region
        $region74: #{custom-call.2} parent=15 // pred_check
          _
        $region75: #{custom-call.2} parent=15 // pred_check_branch
          %169 = sbr.rel (0) target = $region77
        $region76: #{custom-call.2} parent=15 // pred_region
          // Predicated region
          $region78: #{custom-call.2} parent=76 // pred_check
            _
          $region79: #{custom-call.2} parent=76 // pred_check_branch
            %171 = sbr.rel (0) target = $region81
          $region80: #{custom-call.2} parent=76 // pred_region
            loop: start=0, step=1, limit=1
            $region82: #{custom-call.2} parent=80 // loop_pre_header
              _
            $region83: #{custom-call.2} parent=80 // loop_header
              %s173 = sphi 0, %s177
              %p174 = scmp.ge.s32.totalorder %s173, 1
              %s178 = sphi %s167, %s167
              %s179 = sphi %s165, %s165
            $region84: #{custom-call.2} parent=80 // loop_header_branch
              %176 = sbr.rel (%p174) target = $region88
            $region85: #{custom-call.2} parent=80 // loop_body
              %v180 = vld [vmem:[%s178] sm:$0xff]
              %181 = vst [vmem:[%s179] sm:$0xff] %v180
              %v182 = vld [vmem:[%s178 + $0x8] sm:$0xff]
              %183 = vst [vmem:[%s179 + $0x8] sm:$0xff] %v182
            $region86: #{custom-call.2} parent=80 // loop_footer
              %s177 = sadd.s32 1, %s173
            $region87: #{custom-call.2} parent=80 // loop_footer_branch
              %172 = sbr.rel target = $region83
            $region88: #{custom-call.2} parent=80 // loop_exit
              _
          $region81: #{custom-call.2} parent=76 // pred_fallthru
            _
          // Predicated region
          $region89: #{custom-call.2} parent=76 // pred_check
            _
          $region90: #{custom-call.2} parent=76 // pred_check_branch
            %185 = sbr.rel target = $region92
          $region91: #{custom-call.2} parent=76 // pred_region
            _
          $region92: #{custom-call.2} parent=76 // pred_fallthru
            _
        $region77: #{custom-call.2} parent=15 // pred_fallthru
          _
        %186 = vnop
      $region16: #{custom-call.2} parent=5 // pred_fallthru
        _
      %p187 = scmp.le.s32.totalorder 1, %s12
      %p188 = scmp.lt.s32.totalorder %s12, 3
      %p189 = pnand %p187, %p188
      %p190 = pneg %p189
      // Predicated region
      $region93: #{custom-call.2} parent=5 // pred_check
        _
      $region94: #{custom-call.2} parent=5 // pred_check_branch
        %192 = sbr.rel (%p189) target = $region96
      $region95: #{custom-call.2} parent=5 // pred_region
        #allocation12 [shape = 'f32[16,16]{1,0}', space=vmem, size = 0x2000, scoped, tag = 'a top-left matrix']
        #allocation13 [shape = 'f32[16,16]{1,0}', space=vmem, size = 0x2000, scoped, tag = 'a top-right matrix']
        #allocation14 [shape = 'f32[16,16]{1,0}', space=vmem, size = 0x2000, scoped, tag = 'a bottom-left matrix']
        #allocation15 [shape = 'f32[16,16]{1,0}', space=vmem, size = 0x2000, scoped, tag = 'a bottom-right matrix']
        %s193 = ssub.s32 %s12, 1
        %s194 = sand.u32 %s17, 1
        %s195 = sand.u32 %s17, 1
        %s196 = smul.addr %s195, 16
        %s197 = scalar_lea.vmem [#allocation0], %s196
        %s198 = sand.u32 %s17, 1
        %s199 = sand.u32 %s17, 1
        %s200 = smul.addr %s199, 16
        %s201 = scalar_lea.vmem [#allocation1], %s200
        %s202 = sand.u32 %s17, 1
        %s203 = sand.u32 %s17, 1
        %s204 = smul.addr %s203, 16
        %s205 = scalar_lea.vmem [#allocation2], %s204
        %s206 = sand.u32 %s17, 1
        %s207 = sand.u32 %s17, 1
        %s208 = smul.addr %s207, 16
        %s209 = scalar_lea.vmem [#allocation3], %s208
        %s210 = sand.u32 %s17, 1
        %s211 = sand.u32 %s17, 1
        %s212 = smul.addr %s211, 16
        %s213 = scalar_lea.vmem [#allocation0], %s212
        %s214 = sand.u32 %s17, 1
        %s215 = sand.u32 %s17, 1
        %s216 = smul.addr %s215, 16
        %s217 = scalar_lea.vmem [#allocation1], %s216
        %s218 = sand.u32 %s17, 1
        %s219 = sand.u32 %s17, 1
        %s220 = smul.addr %s219, 16
        %s221 = scalar_lea.vmem [#allocation2], %s220
        %s222 = sand.u32 %s17, 1
        %s223 = sand.u32 %s17, 1
        %s224 = smul.addr %s223, 16
        %s225 = scalar_lea.vmem [#allocation3], %s224
        %p226 = pneg %p40
        %p227 = pneg %p37
        %s228 = sand.u32 %s27, 1
        %s229 = sand.u32 %s27, 1
        %s230 = smul.addr %s229, 2
        %s231 = scalar_lea.vmem [#allocation5], %s230
        %p232 = pneg %p68
        %p233 = pneg %p65
        %s234 = sand.u32 %s55, 1
        %s235 = sand.u32 %s55, 1
        %s236 = smul.addr %s235, 2
        %s237 = scalar_lea.vmem [#allocation7], %s236
        %s238 = sand.u32 %s17, 1
        %s239 = sand.u32 %s17, 1
        %s240 = smul.addr %s239, 16
        %s241 = scalar_lea.vmem [#allocation8], %s240
        %s242 = sand.u32 %s17, 1
        %s243 = sand.u32 %s17, 1
        %s244 = smul.addr %s243, 16
        %s245 = scalar_lea.vmem [#allocation9], %s244
        %s246 = sand.u32 %s17, 1
        %s247 = sand.u32 %s17, 1
        %s248 = smul.addr %s247, 16
        %s249 = scalar_lea.vmem [#allocation10], %s248
        %s250 = sand.u32 %s17, 1
        %s251 = sand.u32 %s17, 1
        %s252 = smul.addr %s251, 16
        %s253 = scalar_lea.vmem [#allocation11], %s252
        %s254 = sshrl.u32 %s17, 3
        %s255 = sshrl.u32 %s17, 3
        %s256 = smov [#allocation12]
        %v257 = vld [vmem:[%s197] sm:$0xff]
        %258 = vst [vmem:[%s256] sm:$0xff] %v257
        %s259 = scalar_lea.vmem %s256, 8
        %s260 = scalar_lea.vmem %s197, 8 [#allocation0]
        %v261 = vld [vmem:[%s260] sm:$0xff]
        %262 = vst [vmem:[%s259] sm:$0xff] %v261
        %s263 = smov [#allocation13]
        %v264 = vld [vmem:[%s201] sm:$0xff]
        %265 = vst [vmem:[%s263] sm:$0xff] %v264
        %s266 = scalar_lea.vmem %s263, 8
        %s267 = scalar_lea.vmem %s201, 8 [#allocation1]
        %v268 = vld [vmem:[%s267] sm:$0xff]
        %269 = vst [vmem:[%s266] sm:$0xff] %v268
        %s270 = smov [#allocation14]
        %v271 = vld [vmem:[%s205] sm:$0xff]
        %272 = vst [vmem:[%s270] sm:$0xff] %v271
        %s273 = scalar_lea.vmem %s270, 8
        %s274 = scalar_lea.vmem %s205, 8 [#allocation2]
        %v275 = vld [vmem:[%s274] sm:$0xff]
        %276 = vst [vmem:[%s273] sm:$0xff] %v275
        %s277 = smov [#allocation15]
        %v278 = vld [vmem:[%s209] sm:$0xff]
        %279 = vst [vmem:[%s277] sm:$0xff] %v278
        %s280 = scalar_lea.vmem %s277, 8
        %s281 = scalar_lea.vmem %s209, 8 [#allocation3]
        %v282 = vld [vmem:[%s281] sm:$0xff]
        %283 = vst [vmem:[%s280] sm:$0xff] %v282
        %284 = vst [vmem:[%s241] sm:$0xff] 0.0
        %s285 = scalar_lea.vmem %s241, 8 [#allocation8]
        %286 = vst [vmem:[%s285] sm:$0xff] 0.0
        %287 = vst [vmem:[%s245] sm:$0xff] 0.0
        %s288 = scalar_lea.vmem %s245, 8 [#allocation9]
        %289 = vst [vmem:[%s288] sm:$0xff] 0.0
        %290 = vst [vmem:[%s249] sm:$0xff] 0.0
        %s291 = scalar_lea.vmem %s249, 8 [#allocation10]
        %292 = vst [vmem:[%s291] sm:$0xff] 0.0
        %293 = vst [vmem:[%s253] sm:$0xff] 0.0
        %s294 = scalar_lea.vmem %s253, 8 [#allocation11]
        %295 = vst [vmem:[%s294] sm:$0xff] 0.0
        %s296 = smov %s241
        %v297 = vlaneseq
        %v298 = vand.u32 %v297, 127
        %v299 = vmov %v298
        %v300 = vlaneseq
        %v301 = vshrl.u32 %v300, 7
        %v302 = vmov %v301
        %v303 = vld [vmem:[%s296] sm:$0xff]
        %vm306 = vcmp.eq.s32.totalorder %v302, %v299
        %v307 = vsel %vm306, 1.0, %v303
        %308 = vst [vmem:[%s296] sm:$0xff] %v307
        %s309 = scalar_lea.vmem %s296, 8
        %v310 = vld [vmem:[%s309] sm:$0xff]
        %v312 = vadd.s32 %v302, 8
        %vm313 = vcmp.eq.s32.totalorder %v312, %v299
        %v314 = vsel %vm313, 1.0, %v310
        %315 = vst [vmem:[%s309] sm:$0xff] %v314
        %s316 = smov %s253
        %v317 = vlaneseq
        %v318 = vand.u32 %v317, 127
        %v319 = vmov %v318
        %v320 = vlaneseq
        %v321 = vshrl.u32 %v320, 7
        %v322 = vmov %v321
        %v323 = vld [vmem:[%s316] sm:$0xff]
        %vm326 = vcmp.eq.s32.totalorder %v322, %v319
        %v327 = vsel %vm326, 1.0, %v323
        %328 = vst [vmem:[%s316] sm:$0xff] %v327
        %s329 = scalar_lea.vmem %s316, 8
        %v330 = vld [vmem:[%s329] sm:$0xff]
        %v332 = vadd.s32 %v322, 8
        %vm333 = vcmp.eq.s32.totalorder %v332, %v319
        %v334 = vsel %vm333, 1.0, %v330
        %335 = vst [vmem:[%s329] sm:$0xff] %v334
        // While loop
        $region97: #{custom-call.2} parent=95 // loop_pre_header
          _
        $region98: #{custom-call.2} parent=95 // loop_header
          %s337 = sphi 0, %s1275
          %v338 = vlaneseq
          %v339 = vand.u32 %v338, 127
          %v340 = vmov %v339
          %v341 = vlaneseq
          %v342 = vshrl.u32 %v341, 7
          %v343 = vmov %v342
          %s344 = smov [#allocation12]
          %v345 = vlaneseq
          %v346 = vand.u32 %v345, 127
          %vm347 = vcmp.ge.s32.totalorder %v346, 0
          %vm348 = vcmp.lt.s32.totalorder %v346, 16
          %vm349 = vmand %vm347, %vm348
          %v350 = vld [vmem:[%s344] sm:$0xff]
          %v351 = vsel %vm349, %v350, 0.0
          %v352 = vmul.f32 %v351, %v351
          %vm355 = vcmp.eq.s32.totalorder %v343, %v340
          %v356 = vsel %vm355, 0.0, %v352
          %s357 = scalar_lea.vmem %s344, 8
          %v358 = vld [vmem:[%s357] sm:$0xff]
          %v359 = vsel %vm349, %v358, 0.0
          %v360 = vmul.f32 %v359, %v359
          %v362 = vadd.s32 %v343, 8
          %vm363 = vcmp.eq.s32.totalorder %v362, %v340
          %v364 = vsel %vm363, 0.0, %v360
          %v365 = vadd.f32 %v356, %v364
          %v366 = vadd.f32 %v352, %v360
          %v367 = vlaneseq
          %v368 = vand.u32 %v367, 127
          %v369 = vmov %v368
          %v370 = vlaneseq
          %v371 = vshrl.u32 %v370, 7
          %v372 = vmov %v371
          %s373 = smov [#allocation13]
          %v374 = vlaneseq
          %v375 = vand.u32 %v374, 127
          %vm376 = vcmp.ge.s32.totalorder %v375, 0
          %vm377 = vcmp.lt.s32.totalorder %v375, 16
          %vm378 = vmand %vm376, %vm377
          %v379 = vld [vmem:[%s373] sm:$0xff]
          %v380 = vsel %vm378, %v379, 0.0
          %v381 = vmul.f32 %v380, %v380
          %v382 = vadd.f32 %v365, %v381
          %v383 = vadd.f32 %v366, %v381
          %s384 = scalar_lea.vmem %s373, 8
          %v385 = vld [vmem:[%s384] sm:$0xff]
          %v386 = vsel %vm378, %v385, 0.0
          %v387 = vmul.f32 %v386, %v386
          %v388 = vadd.f32 %v382, %v387
          %v389 = vadd.f32 %v383, %v387
          %v390 = vlaneseq
          %v391 = vand.u32 %v390, 127
          %v392 = vmov %v391
          %v393 = vlaneseq
          %v394 = vshrl.u32 %v393, 7
          %v395 = vmov %v394
          %s396 = smov [#allocation14]
          %v397 = vlaneseq
          %v398 = vand.u32 %v397, 127
          %vm399 = vcmp.ge.s32.totalorder %v398, 0
          %vm400 = vcmp.lt.s32.totalorder %v398, 16
          %vm401 = vmand %vm399, %vm400
          %v402 = vld [vmem:[%s396] sm:$0xff]
          %v403 = vsel %vm401, %v402, 0.0
          %v404 = vmul.f32 %v403, %v403
          %v405 = vadd.f32 %v388, %v404
          %v406 = vadd.f32 %v389, %v404
          %s407 = scalar_lea.vmem %s396, 8
          %v408 = vld [vmem:[%s407] sm:$0xff]
          %v409 = vsel %vm401, %v408, 0.0
          %v410 = vmul.f32 %v409, %v409
          %v411 = vadd.f32 %v405, %v410
          %v412 = vadd.f32 %v406, %v410
          %v413 = vlaneseq
          %v414 = vand.u32 %v413, 127
          %v415 = vmov %v414
          %v416 = vlaneseq
          %v417 = vshrl.u32 %v416, 7
          %v418 = vmov %v417
          %s419 = smov [#allocation15]
          %v420 = vlaneseq
          %v421 = vand.u32 %v420, 127
          %vm422 = vcmp.ge.s32.totalorder %v421, 0
          %vm423 = vcmp.lt.s32.totalorder %v421, 16
          %vm424 = vmand %vm422, %vm423
          %v425 = vld [vmem:[%s419] sm:$0xff]
          %v426 = vsel %vm424, %v425, 0.0
          %v427 = vmul.f32 %v426, %v426
          %vm430 = vcmp.eq.s32.totalorder %v418, %v415
          %v431 = vsel %vm430, 0.0, %v427
          %v432 = vadd.f32 %v411, %v431
          %v433 = vadd.f32 %v412, %v427
          %s434 = scalar_lea.vmem %s419, 8
          %v435 = vld [vmem:[%s434] sm:$0xff]
          %v436 = vsel %vm424, %v435, 0.0
          %v437 = vmul.f32 %v436, %v436
          %v439 = vadd.s32 %v418, 8
          %vm440 = vcmp.eq.s32.totalorder %v439, %v415
          %v441 = vsel %vm440, 0.0, %v437
          %v442 = vadd.f32 %v432, %v441
          %v443 = vadd.f32 %v433, %v437
          %444 = vadd.xlane.f32.xlu0 %v443
          %v445 = vpop.xlane.xlu0 %444
          %v446 = vrot.slane %v445, 4
          %v447 = vadd.f32 %v445, %v446
          %v448 = vrot.slane %v447, 2
          %v449 = vadd.f32 %v447, %v448
          %v450 = vrot.slane %v449, 1
          %v451 = vadd.f32 %v449, %v450
          %452 = vadd.xlane.f32.xlu0 %v442
          %v453 = vpop.xlane.xlu0 %452
          %v454 = vrot.slane %v453, 4
          %v455 = vadd.f32 %v453, %v454
          %v456 = vrot.slane %v455, 2
          %v457 = vadd.f32 %v455, %v456
          %v458 = vrot.slane %v457, 1
          %v459 = vadd.f32 %v457, %v458
          %s460 = vtos %v459
          %s461 = vtos %v451
          %s462 = smul.f32 1e-10, %s461
          %p463 = scmp.le.f32.partialorder %s460, %s462
          %p464 = scmp.ge.s32.totalorder %s337, 15
          %p465 = por %p463, %p464
        $region99: #{custom-call.2} parent=95 // loop_header_branch
          %1277 = sbr.rel (%p465) target = $region103
        $region100: #{custom-call.2} parent=95 // loop_body
          loop: start=0, step=1, limit=31
          $region104: #{custom-call.2} parent=100 // loop_pre_header
            _
          $region105: #{custom-call.2} parent=100 // loop_header
            %s467 = sphi 0, %s471
            %p468 = scmp.ge.s32.totalorder %s467, 31
          $region106: #{custom-call.2} parent=100 // loop_header_branch
            %470 = sbr.rel (%p468) target = $region110
          $region107: #{custom-call.2} parent=100 // loop_body
            #allocation16 [shape = 'f32[1024]{0}', space=vmem, size = 0x1000, scoped, tag = 'a_tl_diag vmem']
            #allocation17 [shape = 'f32[1024]{0}', space=vmem, size = 0x1000, scoped, tag = 'a_tr_diag vmem']
            #allocation18 [shape = 'f32[1024]{0}', space=vmem, size = 0x1000, scoped, tag = 'a_br_diag vmem']
            #allocation19 [shape = 'f32[1024]{0}', space=vmem, size = 0x1000, scoped, tag = 'rt1 vmem']
            #allocation20 [shape = 'f32[1024]{0}', space=vmem, size = 0x1000, scoped, tag = 'rt2 vmem']
            #allocation21 [shape = 'f32[1024]{0}', space=vmem, size = 0x1000, scoped, tag = 'c vmem']
            #allocation22 [shape = 'f32[1024]{0}', space=vmem, size = 0x1000, scoped, tag = 's vmem']
            #allocation23 [shape = 'f32[8192]{0}', space=vmem, size = 0x8000, scoped, tag = 'c broadcast']
            #allocation24 [shape = 'f32[8192]{0}', space=vmem, size = 0x8000, scoped, tag = 's broadcast']
            %s472 = smov [#allocation12]
            %s473 = smov [#allocation16]
            %v474 = vlaneseq
            %v475 = vand.u32 %v474, 127
            %v476 = vmov %v475
            %v477 = vlaneseq
            %v478 = vshrl.u32 %v477, 7
            %v479 = vmov %v478
            %v480 = vld [vmem:[%s472] sm:$0xff]
            %vm483 = vcmp.eq.s32.totalorder %v479, %v476
            %v484 = vsel %vm483, %v480, 0.0
            %s485 = scalar_lea.vmem %s472, 8
            %v486 = vld [vmem:[%s485] sm:$0xff]
            %v488 = vadd.s32 %v479, 8
            %vm489 = vcmp.eq.s32.totalorder %v488, %v476
            %v490 = vsel %vm489, %v486, %v484
            %v491 = vrot.slane %v490, 4
            %v492 = vadd.f32 %v490, %v491
            %v493 = vrot.slane %v492, 2
            %v494 = vadd.f32 %v492, %v493
            %v495 = vrot.slane %v494, 1
            %v496 = vadd.f32 %v494, %v495
            %497 = vst [vmem:[%s473] sm:$0x1] %v496
            %s498 = smov [#allocation13]
            %s499 = smov [#allocation17]
            %v500 = vlaneseq
            %v501 = vand.u32 %v500, 127
            %v502 = vmov %v501
            %v503 = vlaneseq
            %v504 = vshrl.u32 %v503, 7
            %v505 = vmov %v504
            %v506 = vld [vmem:[%s498] sm:$0xff]
            %vm509 = vcmp.eq.s32.totalorder %v505, %v502
            %v510 = vsel %vm509, %v506, 0.0
            %s511 = scalar_lea.vmem %s498, 8
            %v512 = vld [vmem:[%s511] sm:$0xff]
            %v514 = vadd.s32 %v505, 8
            %vm515 = vcmp.eq.s32.totalorder %v514, %v502
            %v516 = vsel %vm515, %v512, %v510
            %v517 = vrot.slane %v516, 4
            %v518 = vadd.f32 %v516, %v517
            %v519 = vrot.slane %v518, 2
            %v520 = vadd.f32 %v518, %v519
            %v521 = vrot.slane %v520, 1
            %v522 = vadd.f32 %v520, %v521
            %523 = vst [vmem:[%s499] sm:$0x1] %v522
            %s524 = smov [#allocation15]
            %s525 = smov [#allocation18]
            %v526 = vlaneseq
            %v527 = vand.u32 %v526, 127
            %v528 = vmov %v527
            %v529 = vlaneseq
            %v530 = vshrl.u32 %v529, 7
            %v531 = vmov %v530
            %v532 = vld [vmem:[%s524] sm:$0xff]
            %vm535 = vcmp.eq.s32.totalorder %v531, %v528
            %v536 = vsel %vm535, %v532, 0.0
            %s537 = scalar_lea.vmem %s524, 8
            %v538 = vld [vmem:[%s537] sm:$0xff]
            %v540 = vadd.s32 %v531, 8
            %vm541 = vcmp.eq.s32.totalorder %v540, %v528
            %v542 = vsel %vm541, %v538, %v536
            %v543 = vrot.slane %v542, 4
            %v544 = vadd.f32 %v542, %v543
            %v545 = vrot.slane %v544, 2
            %v546 = vadd.f32 %v544, %v545
            %v547 = vrot.slane %v546, 1
            %v548 = vadd.f32 %v546, %v547
            %549 = vst [vmem:[%s525] sm:$0x1] %v548
            %s550 = smov [#allocation21]
            %s551 = smov [#allocation22]
            %s552 = smov [#allocation16]
            %v553 = vld [vmem:[%s552] sm:$0xff]
            %s554 = smov [#allocation17]
            %v555 = vld [vmem:[%s554] sm:$0xff]
            %s556 = smov [#allocation18]
            %v557 = vld [vmem:[%s556] sm:$0xff]
            %v558 = vsub.f32 %v557, %v553
            %v559 = vmul.f32 2.0, %v555
            %v560 = vrcp.pop %v559
            %v561 = vmul.f32 %v559, %v560
            %v562 = vsub.f32 1.0, %v561
            %v563 = vmul.f32 %v560, %v562
            %v564 = vadd.f32 %v560, %v563
            %vm565 = vweird.f32 %v559
            %vm566 = vweird.f32 %v560
            %vm567 = vmor %vm565, %vm566
            %v568 = vsel %vm567, %v560, %v564
            %v569 = vand.u32 2147483647, %v559
            %vm570 = vcmp.eq.f32.partialorder %v569, 8.507059e+37
            %v571 = vand.u32 %v559, 2147483648
            %v572 = vor.u32 1.1754944e-38, %v571
            %v573 = vsel %vm570, %v572, %v568
            %v574 = vmul.f32 %v558, %v573
            %vm575 = vcmp.ge.f32.partialorder %v574, 0.0
            %v576 = vmul.f32 %v574, %v574
            %v577 = vadd.f32 1.0, %v576
            %v578 = vrsqrt.pop %v577
            %v579 = vmul.f32 %v578, %v577
            %v580 = vmul.f32 %v579, %v578
            %v581 = vmul.f32 0.5, %v580
            %v582 = vsub.f32 1.5, %v581
            %v583 = vmul.f32 %v578, %v582
            %v584 = vmul.f32 %v577, %v583
            %vm585 = vcmp.eq.f32.partialorder %v577, inf
            %v586 = vsel %vm585, %v577, %v584
            %vm587 = vcmp.eq.f32.partialorder %v577, 0.0
            %v588 = vand.u32 %v577, 2147483648
            %v589 = vsel %vm587, %v588, %v586
            %v590 = vxor.u32 %v589, 2147483648
            %v591 = vsel %vm575, %v589, %v590
            %v592 = vadd.f32 %v574, %v591
            %v593 = vrcp.pop %v592
            %v594 = vmul.f32 %v592, %v593
            %v595 = vsub.f32 1.0, %v594
            %v596 = vmul.f32 %v593, %v595
            %v597 = vadd.f32 %v593, %v596
            %vm598 = vweird.f32 %v592
            %vm599 = vweird.f32 %v593
            %vm600 = vmor %vm598, %vm599
            %v601 = vsel %vm600, %v593, %v597
            %v602 = vand.u32 2147483647, %v592
            %vm603 = vcmp.eq.f32.partialorder %v602, 8.507059e+37
            %v604 = vand.u32 %v592, 2147483648
            %v605 = vor.u32 1.1754944e-38, %v604
            %v606 = vsel %vm603, %v605, %v601
            %v607 = vand.u32 2147483647, %v553
            %v608 = vand.u32 2147483647, %v555
            %v609 = vand.u32 2147483647, %v557
            %v610 = vmin.f32 %v607, %v609
            %v611 = vmul.f32 1.1920929e-08, %v610
            %vm612 = vcmp.le.f32.partialorder %v608, %v611
            %v613 = vsel %vm612, 0.0, %v606
            %v614 = vmul.f32 %v613, %v613
            %v615 = vadd.f32 1.0, %v614
            %v616 = vrsqrt.pop %v615
            %v617 = vmul.f32 %v616, %v615
            %v618 = vmul.f32 %v617, %v616
            %v619 = vmul.f32 0.5, %v618
            %v620 = vsub.f32 1.5, %v619
            %v621 = vmul.f32 %v616, %v620
            %vm622 = vweird.f32 %v615
            %vm623 = vweird.f32 %v616
            %vm624 = vmor %vm622, %vm623
            %v625 = vsel %vm624, %v616, %v621
            %v626 = vmul.f32 %v613, %v625
            %v627 = vmul.f32 %v613, %v555
            %v628 = vsub.f32 %v553, %v627
            %v629 = vmul.f32 %v613, %v555
            %v630 = vadd.f32 %v557, %v629
            %s631 = smov [#allocation19]
            %632 = vst [vmem:[%s631] sm:$0xff] %v628
            %s633 = smov [#allocation20]
            %634 = vst [vmem:[%s633] sm:$0xff] %v630
            %s635 = smov %s550
            %636 = vst [vmem:[%s635] sm:$0xff] %v625
            %s637 = smov %s551
            %638 = vst [vmem:[%s637] sm:$0xff] %v626
            %s639 = smov [#allocation21]
            %v640 = vld [vmem:[%s639] ss:$0 sm:$0xff]
            %v641 = vlaneseq
            %v642 = vand.u32 %v641, 127
            %v643 = vmov %v642
            %v644 = vlaneseq
            %v645 = vshrl.u32 %v644, 7
            %v646 = vmov %v645
            %vm648 = vcmp.eq.s32.totalorder %v646, %v643
            %v649 = vsel %vm648, %v640, 0.0
            %650 = vadd.xlane.f32.xlu0 %v649
            %v651 = vpop.xlane.xlu0 %650
            %s652 = smov [#allocation23]
            %653 = vst [vmem:[%s652] sm:$0xff] %v651
            %s654 = smov [#allocation21]
            %v655 = vld [vmem:[%s654] ss:$0 sm:$0xff]
            %v656 = vlaneseq
            %v657 = vand.u32 %v656, 127
            %v658 = vmov %v657
            %v659 = vlaneseq
            %v660 = vshrl.u32 %v659, 7
            %v661 = vmov %v660
            %v662 = vadd.s32 %v661, 8
            %vm663 = vcmp.eq.s32.totalorder %v662, %v658
            %v664 = vsel %vm663, %v655, 0.0
            %665 = vadd.xlane.f32.xlu0 %v664
            %v666 = vpop.xlane.xlu0 %665
            %s667 = smov [#allocation23]
            %s668 = scalar_lea.vmem %s667, 8
            %669 = vst [vmem:[%s668] sm:$0xff] %v666
            %s670 = smov [#allocation22]
            %v671 = vld [vmem:[%s670] ss:$0 sm:$0xff]
            %v672 = vlaneseq
            %v673 = vand.u32 %v672, 127
            %v674 = vmov %v673
            %v675 = vlaneseq
            %v676 = vshrl.u32 %v675, 7
            %v677 = vmov %v676
            %vm679 = vcmp.eq.s32.totalorder %v677, %v674
            %v680 = vsel %vm679, %v671, 0.0
            %681 = vadd.xlane.f32.xlu0 %v680
            %v682 = vpop.xlane.xlu0 %681
            %s683 = smov [#allocation24]
            %684 = vst [vmem:[%s683] sm:$0xff] %v682
            %s685 = smov [#allocation22]
            %v686 = vld [vmem:[%s685] ss:$0 sm:$0xff]
            %v687 = vlaneseq
            %v688 = vand.u32 %v687, 127
            %v689 = vmov %v688
            %v690 = vlaneseq
            %v691 = vshrl.u32 %v690, 7
            %v692 = vmov %v691
            %v693 = vadd.s32 %v692, 8
            %vm694 = vcmp.eq.s32.totalorder %v693, %v689
            %v695 = vsel %vm694, %v686, 0.0
            %696 = vadd.xlane.f32.xlu0 %v695
            %v697 = vpop.xlane.xlu0 %696
            %s698 = smov [#allocation24]
            %s699 = scalar_lea.vmem %s698, 8
            %700 = vst [vmem:[%s699] sm:$0xff] %v697
            %s701 = smov [#allocation23]
            %v702 = vld [vmem:[%s701] sm:$0xff]
            %s703 = smov [#allocation24]
            %v704 = vld [vmem:[%s703] sm:$0xff]
            %s705 = smov [#allocation12]
            %s706 = smov [#allocation13]
            %s707 = smov [#allocation14]
            %s708 = smov [#allocation15]
            %v709 = vld [vmem:[%s705] sm:$0xff]
            %v710 = vld [vmem:[%s706] sm:$0xff]
            %v711 = vld [vmem:[%s707] sm:$0xff]
            %v712 = vld [vmem:[%s708] sm:$0xff]
            %v713 = vmul.f32 %v702, %v709
            %v714 = vmul.f32 %v704, %v711
            %v715 = vsub.f32 %v713, %v714
            %v716 = vmul.f32 %v702, %v710
            %v717 = vmul.f32 %v704, %v712
            %v718 = vsub.f32 %v716, %v717
            %v719 = vmul.f32 %v704, %v709
            %v720 = vmul.f32 %v702, %v711
            %v721 = vadd.f32 %v719, %v720
            %v722 = vmul.f32 %v704, %v710
            %v723 = vmul.f32 %v702, %v712
            %v724 = vadd.f32 %v722, %v723
            %725 = vst [vmem:[%s705] sm:$0xff] %v715
            %726 = vst [vmem:[%s706] sm:$0xff] %v718
            %727 = vst [vmem:[%s707] sm:$0xff] %v721
            %728 = vst [vmem:[%s708] sm:$0xff] %v724
            %s729 = smov [#allocation23]
            %s730 = scalar_lea.vmem %s729, 8
            %v731 = vld [vmem:[%s730] sm:$0xff]
            %s732 = smov [#allocation24]
            %s733 = scalar_lea.vmem %s732, 8
            %v734 = vld [vmem:[%s733] sm:$0xff]
            %s735 = smov [#allocation12]
            %s736 = scalar_lea.vmem %s735, 8
            %s737 = smov [#allocation13]
            %s738 = scalar_lea.vmem %s737, 8
            %s739 = smov [#allocation14]
            %s740 = scalar_lea.vmem %s739, 8
            %s741 = smov [#allocation15]
            %s742 = scalar_lea.vmem %s741, 8
            %v743 = vld [vmem:[%s736] sm:$0xff]
            %v744 = vld [vmem:[%s738] sm:$0xff]
            %v745 = vld [vmem:[%s740] sm:$0xff]
            %v746 = vld [vmem:[%s742] sm:$0xff]
            %v747 = vmul.f32 %v731, %v743
            %v748 = vmul.f32 %v734, %v745
            %v749 = vsub.f32 %v747, %v748
            %v750 = vmul.f32 %v731, %v744
            %v751 = vmul.f32 %v734, %v746
            %v752 = vsub.f32 %v750, %v751
            %v753 = vmul.f32 %v734, %v743
            %v754 = vmul.f32 %v731, %v745
            %v755 = vadd.f32 %v753, %v754
            %v756 = vmul.f32 %v734, %v744
            %v757 = vmul.f32 %v731, %v746
            %v758 = vadd.f32 %v756, %v757
            %759 = vst [vmem:[%s736] sm:$0xff] %v749
            %760 = vst [vmem:[%s738] sm:$0xff] %v752
            %761 = vst [vmem:[%s740] sm:$0xff] %v755
            %762 = vst [vmem:[%s742] sm:$0xff] %v758
            %s763 = smov [#allocation21]
            %v764 = vld [vmem:[%s763] ss:$0 sm:$0xff]
            %s765 = smov [#allocation22]
            %v766 = vld [vmem:[%s765] ss:$0 sm:$0xff]
            %s767 = smov [#allocation12]
            %s768 = smov [#allocation13]
            %s769 = smov [#allocation14]
            %s770 = smov [#allocation15]
            %v771 = vld [vmem:[%s767] sm:$0xff]
            %v772 = vld [vmem:[%s768] sm:$0xff]
            %v773 = vld [vmem:[%s769] sm:$0xff]
            %v774 = vld [vmem:[%s770] sm:$0xff]
            %v775 = vmul.f32 %v764, %v771
            %v776 = vmul.f32 %v766, %v772
            %v777 = vsub.f32 %v775, %v776
            %v778 = vmul.f32 %v766, %v771
            %v779 = vmul.f32 %v764, %v772
            %v780 = vadd.f32 %v778, %v779
            %v781 = vmul.f32 %v764, %v773
            %v782 = vmul.f32 %v766, %v774
            %v783 = vsub.f32 %v781, %v782
            %v784 = vmul.f32 %v766, %v773
            %v785 = vmul.f32 %v764, %v774
            %v786 = vadd.f32 %v784, %v785
            %787 = vst [vmem:[%s767] sm:$0xff] %v777
            %788 = vst [vmem:[%s768] sm:$0xff] %v780
            %789 = vst [vmem:[%s769] sm:$0xff] %v783
            %790 = vst [vmem:[%s770] sm:$0xff] %v786
            %s791 = smov [#allocation12]
            %s792 = scalar_lea.vmem %s791, 8
            %s793 = smov [#allocation13]
            %s794 = scalar_lea.vmem %s793, 8
            %s795 = smov [#allocation14]
            %s796 = scalar_lea.vmem %s795, 8
            %s797 = smov [#allocation15]
            %s798 = scalar_lea.vmem %s797, 8
            %v799 = vld [vmem:[%s792] sm:$0xff]
            %v800 = vld [vmem:[%s794] sm:$0xff]
            %v801 = vld [vmem:[%s796] sm:$0xff]
            %v802 = vld [vmem:[%s798] sm:$0xff]
            %v803 = vmul.f32 %v764, %v799
            %v804 = vmul.f32 %v766, %v800
            %v805 = vsub.f32 %v803, %v804
            %v806 = vmul.f32 %v766, %v799
            %v807 = vmul.f32 %v764, %v800
            %v808 = vadd.f32 %v806, %v807
            %v809 = vmul.f32 %v764, %v801
            %v810 = vmul.f32 %v766, %v802
            %v811 = vsub.f32 %v809, %v810
            %v812 = vmul.f32 %v766, %v801
            %v813 = vmul.f32 %v764, %v802
            %v814 = vadd.f32 %v812, %v813
            %815 = vst [vmem:[%s792] sm:$0xff] %v805
            %816 = vst [vmem:[%s794] sm:$0xff] %v808
            %817 = vst [vmem:[%s796] sm:$0xff] %v811
            %818 = vst [vmem:[%s798] sm:$0xff] %v814
            %s819 = smov [#allocation12]
            %s820 = smov [#allocation19]
            %v821 = vlaneseq
            %v822 = vand.u32 %v821, 127
            %v823 = vmov %v822
            %v824 = vlaneseq
            %v825 = vshrl.u32 %v824, 7
            %v826 = vmov %v825
            %v827 = vld [vmem:[%s820] ss:$0 sm:$0xff]
            %v828 = vld [vmem:[%s819] sm:$0xff]
            %vm831 = vcmp.eq.s32.totalorder %v826, %v823
            %v832 = vsel %vm831, %v827, %v828
            %833 = vst [vmem:[%s819] sm:$0xff] %v832
            %v834 = vld [vmem:[%s820] ss:$0 sm:$0xff]
            %s835 = scalar_lea.vmem %s819, 8
            %v836 = vld [vmem:[%s835] sm:$0xff]
            %v838 = vadd.s32 %v826, 8
            %vm839 = vcmp.eq.s32.totalorder %v838, %v823
            %v840 = vsel %vm839, %v834, %v836
            %841 = vst [vmem:[%s835] sm:$0xff] %v840
            %s842 = smov [#allocation13]
            %v843 = vlaneseq
            %v844 = vand.u32 %v843, 127
            %v845 = vmov %v844
            %v846 = vlaneseq
            %v847 = vshrl.u32 %v846, 7
            %v848 = vmov %v847
            %v849 = vld [vmem:[%s842] sm:$0xff]
            %vm852 = vcmp.eq.s32.totalorder %v848, %v845
            %v853 = vsel %vm852, 0.0, %v849
            %854 = vst [vmem:[%s842] sm:$0xff] %v853
            %s855 = scalar_lea.vmem %s842, 8
            %v856 = vld [vmem:[%s855] sm:$0xff]
            %v858 = vadd.s32 %v848, 8
            %vm859 = vcmp.eq.s32.totalorder %v858, %v845
            %v860 = vsel %vm859, 0.0, %v856
            %861 = vst [vmem:[%s855] sm:$0xff] %v860
            %s862 = smov [#allocation14]
            %v863 = vlaneseq
            %v864 = vand.u32 %v863, 127
            %v865 = vmov %v864
            %v866 = vlaneseq
            %v867 = vshrl.u32 %v866, 7
            %v868 = vmov %v867
            %v869 = vld [vmem:[%s862] sm:$0xff]
            %vm872 = vcmp.eq.s32.totalorder %v868, %v865
            %v873 = vsel %vm872, 0.0, %v869
            %874 = vst [vmem:[%s862] sm:$0xff] %v873
            %s875 = scalar_lea.vmem %s862, 8
            %v876 = vld [vmem:[%s875] sm:$0xff]
            %v878 = vadd.s32 %v868, 8
            %vm879 = vcmp.eq.s32.totalorder %v878, %v865
            %v880 = vsel %vm879, 0.0, %v876
            %881 = vst [vmem:[%s875] sm:$0xff] %v880
            %s882 = smov [#allocation15]
            %s883 = smov [#allocation20]
            %v884 = vlaneseq
            %v885 = vand.u32 %v884, 127
            %v886 = vmov %v885
            %v887 = vlaneseq
            %v888 = vshrl.u32 %v887, 7
            %v889 = vmov %v888
            %v890 = vld [vmem:[%s883] ss:$0 sm:$0xff]
            %v891 = vld [vmem:[%s882] sm:$0xff]
            %vm894 = vcmp.eq.s32.totalorder %v889, %v886
            %v895 = vsel %vm894, %v890, %v891
            %896 = vst [vmem:[%s882] sm:$0xff] %v895
            %v897 = vld [vmem:[%s883] ss:$0 sm:$0xff]
            %s898 = scalar_lea.vmem %s882, 8
            %v899 = vld [vmem:[%s898] sm:$0xff]
            %v901 = vadd.s32 %v889, 8
            %vm902 = vcmp.eq.s32.totalorder %v901, %v886
            %v903 = vsel %vm902, %v897, %v899
            %904 = vst [vmem:[%s898] sm:$0xff] %v903
            %s905 = smov [#allocation12]
            %s906 = smov [#allocation13]
            %v907 = vld [vmem:[%s906] sm:$0xff]
            %908 = vrot.lane.b32.xlu0 %v907, 1
            %v909 = vpop.permute.xlu0 %908
            %v910 = vld [vmem:[%s905] sm:$0xff]
            %v911 = vld [vmem:[%s905] sm:$0xff]
            %912 = vrot.lane.b32.xlu0 %v911, 1
            %v913 = vpop.permute.xlu0 %912
            %v914 = vlaneseq
            %v915 = vand.u32 %v914, 127
            %vm916 = vcmp.eq.s32.totalorder %v915, 0
            %v917 = vsel %vm916, %v911, %v913
            %v918 = vlaneseq
            %v919 = vand.u32 %v918, 127
            %vm920 = vcmp.eq.s32.totalorder %v919, 1
            %v921 = vsel %vm920, %v909, %v917
            %v922 = vlaneseq
            %v923 = vand.u32 %v922, 127
            %vm924 = vcmp.ge.s32.totalorder %v923, 0
            %vm925 = vcmp.lt.s32.totalorder %v923, 16
            %vm926 = vmand %vm924, %vm925
            %v927 = vsel %vm926, %v921, 0.0
            %v928 = vld [vmem:[%s906] sm:$0xff]
            %929 = vrot.lane.b32.xlu0 %v928, 127
            %v930 = vpop.permute.xlu0 %929
            %v931 = vlaneseq
            %v932 = vand.u32 %v931, 127
            %vm933 = vcmp.eq.s32.totalorder %v932, 15
            %v934 = vsel %vm933, %v910, %v930
            %s935 = smov [#allocation12]
            %s936 = scalar_lea.vmem %s935, 8
            %s937 = smov [#allocation13]
            %s938 = scalar_lea.vmem %s937, 8
            %v939 = vld [vmem:[%s938] sm:$0xff]
            %940 = vrot.lane.b32.xlu0 %v939, 1
            %v941 = vpop.permute.xlu0 %940
            %v942 = vld [vmem:[%s936] sm:$0xff]
            %v943 = vld [vmem:[%s936] sm:$0xff]
            %944 = vrot.lane.b32.xlu0 %v943, 1
            %v945 = vpop.permute.xlu0 %944
            %v946 = vlaneseq
            %v947 = vand.u32 %v946, 127
            %vm948 = vcmp.eq.s32.totalorder %v947, 0
            %v949 = vsel %vm948, %v943, %v945
            %v950 = vlaneseq
            %v951 = vand.u32 %v950, 127
            %vm952 = vcmp.eq.s32.totalorder %v951, 1
            %v953 = vsel %vm952, %v941, %v949
            %v954 = vlaneseq
            %v955 = vand.u32 %v954, 127
            %vm956 = vcmp.ge.s32.totalorder %v955, 0
            %vm957 = vcmp.lt.s32.totalorder %v955, 16
            %vm958 = vmand %vm956, %vm957
            %v959 = vsel %vm958, %v953, 0.0
            %v960 = vld [vmem:[%s938] sm:$0xff]
            %961 = vrot.lane.b32.xlu0 %v960, 127
            %v962 = vpop.permute.xlu0 %961
            %v963 = vlaneseq
            %v964 = vand.u32 %v963, 127
            %vm965 = vcmp.eq.s32.totalorder %v964, 15
            %v966 = vsel %vm965, %v942, %v962
            %967 = vst [vmem:[%s905] sm:$0xff] %v927
            %968 = vst [vmem:[%s906] sm:$0xff] %v934
            %969 = vst [vmem:[%s936] sm:$0xff] %v959
            %970 = vst [vmem:[%s938] sm:$0xff] %v966
            %s971 = smov [#allocation14]
            %s972 = smov [#allocation15]
            %v973 = vld [vmem:[%s972] sm:$0xff]
            %974 = vrot.lane.b32.xlu0 %v973, 1
            %v975 = vpop.permute.xlu0 %974
            %v976 = vld [vmem:[%s971] sm:$0xff]
            %v977 = vld [vmem:[%s971] sm:$0xff]
            %978 = vrot.lane.b32.xlu0 %v977, 1
            %v979 = vpop.permute.xlu0 %978
            %v980 = vlaneseq
            %v981 = vand.u32 %v980, 127
            %vm982 = vcmp.eq.s32.totalorder %v981, 0
            %v983 = vsel %vm982, %v977, %v979
            %v984 = vlaneseq
            %v985 = vand.u32 %v984, 127
            %vm986 = vcmp.eq.s32.totalorder %v985, 1
            %v987 = vsel %vm986, %v975, %v983
            %v988 = vlaneseq
            %v989 = vand.u32 %v988, 127
            %vm990 = vcmp.ge.s32.totalorder %v989, 0
            %vm991 = vcmp.lt.s32.totalorder %v989, 16
            %vm992 = vmand %vm990, %vm991
            %v993 = vsel %vm992, %v987, 0.0
            %v994 = vld [vmem:[%s972] sm:$0xff]
            %995 = vrot.lane.b32.xlu0 %v994, 127
            %v996 = vpop.permute.xlu0 %995
            %v997 = vlaneseq
            %v998 = vand.u32 %v997, 127
            %vm999 = vcmp.eq.s32.totalorder %v998, 15
            %v1000 = vsel %vm999, %v976, %v996
            %s1001 = smov [#allocation14]
            %s1002 = scalar_lea.vmem %s1001, 8
            %s1003 = smov [#allocation15]
            %s1004 = scalar_lea.vmem %s1003, 8
            %v1005 = vld [vmem:[%s1004] sm:$0xff]
            %1006 = vrot.lane.b32.xlu0 %v1005, 1
            %v1007 = vpop.permute.xlu0 %1006
            %v1008 = vld [vmem:[%s1002] sm:$0xff]
            %v1009 = vld [vmem:[%s1002] sm:$0xff]
            %1010 = vrot.lane.b32.xlu0 %v1009, 1
            %v1011 = vpop.permute.xlu0 %1010
            %v1012 = vlaneseq
            %v1013 = vand.u32 %v1012, 127
            %vm1014 = vcmp.eq.s32.totalorder %v1013, 0
            %v1015 = vsel %vm1014, %v1009, %v1011
            %v1016 = vlaneseq
            %v1017 = vand.u32 %v1016, 127
            %vm1018 = vcmp.eq.s32.totalorder %v1017, 1
            %v1019 = vsel %vm1018, %v1007, %v1015
            %v1020 = vlaneseq
            %v1021 = vand.u32 %v1020, 127
            %vm1022 = vcmp.ge.s32.totalorder %v1021, 0
            %vm1023 = vcmp.lt.s32.totalorder %v1021, 16
            %vm1024 = vmand %vm1022, %vm1023
            %v1025 = vsel %vm1024, %v1019, 0.0
            %v1026 = vld [vmem:[%s1004] sm:$0xff]
            %1027 = vrot.lane.b32.xlu0 %v1026, 127
            %v1028 = vpop.permute.xlu0 %1027
            %v1029 = vlaneseq
            %v1030 = vand.u32 %v1029, 127
            %vm1031 = vcmp.eq.s32.totalorder %v1030, 15
            %v1032 = vsel %vm1031, %v1008, %v1028
            %1033 = vst [vmem:[%s971] sm:$0xff] %v993
            %1034 = vst [vmem:[%s972] sm:$0xff] %v1000
            %1035 = vst [vmem:[%s1002] sm:$0xff] %v1025
            %1036 = vst [vmem:[%s1004] sm:$0xff] %v1032
            %s1037 = smov [#allocation12]
            %s1038 = smov [#allocation14]
            %v1039 = vld [vmem:[%s1037] ss:$0 sm:$0xff]
            %s1041 = scalar_lea.vmem %s1037, 4294967295
            %v1042 = vld [vmem:[%s1041] sm:$0xfe]
            %v1043 = vlaneseq
            %v1044 = vshrl.u32 %v1043, 7
            %vm1045 = vcmp.eq.s32.totalorder %v1044, 0
            %v1046 = vsel %vm1045, %v1039, %v1042
            %s1047 = scalar_lea.vmem %s1037, 7
            %v1048 = vld [vmem:[%s1047] ss:$0 sm:$0xff]
            %1049 = vst [vmem:[%s1037] sm:$0xff] %v1046
            %s1050 = scalar_lea.vmem %s1037, 8
            %s1052 = scalar_lea.vmem %s1050, 4294967295
            %v1053 = vld [vmem:[%s1052] sm:$0xfe]
            %v1054 = vlaneseq
            %v1055 = vshrl.u32 %v1054, 7
            %vm1056 = vcmp.eq.s32.totalorder %v1055, 0
            %v1057 = vsel %vm1056, %v1048, %v1053
            %s1058 = scalar_lea.vmem %s1050, 7
            %v1059 = vld [vmem:[%s1058] ss:$0 sm:$0xff]
            %1060 = vst [vmem:[%s1050] sm:$0xff] %v1057
            %v1061 = vld [vmem:[%s1038] ss:$0 sm:$0xff]
            %s1062 = scalar_lea.vmem %s1037, 1
            %1063 = vst [vmem:[%s1062] sm:$0x1] %v1061
            %s1064 = scalar_lea.vmem %s1038, 8
            %s1065 = scalar_lea.vmem %s1064, 1
            %v1066 = vld [vmem:[%s1065] sm:$0x7f]
            %v1067 = vlaneseq
            %v1068 = vshrl.u32 %v1067, 7
            %vm1069 = vcmp.eq.s32.totalorder %v1068, 7
            %v1070 = vsel %vm1069, %v1059, %v1066
            %v1071 = vld [vmem:[%s1064] ss:$0 sm:$0xff]
            %1072 = vst [vmem:[%s1064] sm:$0xff] %v1070
            %s1073 = scalar_lea.vmem %s1038, 1
            %v1074 = vld [vmem:[%s1073] sm:$0x7f]
            %v1075 = vlaneseq
            %v1076 = vshrl.u32 %v1075, 7
            %vm1077 = vcmp.eq.s32.totalorder %v1076, 7
            %v1078 = vsel %vm1077, %v1071, %v1074
            %v1079 = vld [vmem:[%s1038] ss:$0 sm:$0xff]
            %1080 = vst [vmem:[%s1038] sm:$0xff] %v1078
            %s1081 = smov [#allocation13]
            %s1082 = smov [#allocation15]
            %v1083 = vld [vmem:[%s1081] ss:$0 sm:$0xff]
            %s1085 = scalar_lea.vmem %s1081, 4294967295
            %v1086 = vld [vmem:[%s1085] sm:$0xfe]
            %v1087 = vlaneseq
            %v1088 = vshrl.u32 %v1087, 7
            %vm1089 = vcmp.eq.s32.totalorder %v1088, 0
            %v1090 = vsel %vm1089, %v1083, %v1086
            %s1091 = scalar_lea.vmem %s1081, 7
            %v1092 = vld [vmem:[%s1091] ss:$0 sm:$0xff]
            %1093 = vst [vmem:[%s1081] sm:$0xff] %v1090
            %s1094 = scalar_lea.vmem %s1081, 8
            %s1096 = scalar_lea.vmem %s1094, 4294967295
            %v1097 = vld [vmem:[%s1096] sm:$0xfe]
            %v1098 = vlaneseq
            %v1099 = vshrl.u32 %v1098, 7
            %vm1100 = vcmp.eq.s32.totalorder %v1099, 0
            %v1101 = vsel %vm1100, %v1092, %v1097
            %s1102 = scalar_lea.vmem %s1094, 7
            %v1103 = vld [vmem:[%s1102] ss:$0 sm:$0xff]
            %1104 = vst [vmem:[%s1094] sm:$0xff] %v1101
            %v1105 = vld [vmem:[%s1082] ss:$0 sm:$0xff]
            %s1106 = scalar_lea.vmem %s1081, 1
            %1107 = vst [vmem:[%s1106] sm:$0x1] %v1105
            %s1108 = scalar_lea.vmem %s1082, 8
            %s1109 = scalar_lea.vmem %s1108, 1
            %v1110 = vld [vmem:[%s1109] sm:$0x7f]
            %v1111 = vlaneseq
            %v1112 = vshrl.u32 %v1111, 7
            %vm1113 = vcmp.eq.s32.totalorder %v1112, 7
            %v1114 = vsel %vm1113, %v1103, %v1110
            %v1115 = vld [vmem:[%s1108] ss:$0 sm:$0xff]
            %1116 = vst [vmem:[%s1108] sm:$0xff] %v1114
            %s1117 = scalar_lea.vmem %s1082, 1
            %v1118 = vld [vmem:[%s1117] sm:$0x7f]
            %v1119 = vlaneseq
            %v1120 = vshrl.u32 %v1119, 7
            %vm1121 = vcmp.eq.s32.totalorder %v1120, 7
            %v1122 = vsel %vm1121, %v1115, %v1118
            %v1123 = vld [vmem:[%s1082] ss:$0 sm:$0xff]
            %1124 = vst [vmem:[%s1082] sm:$0xff] %v1122
            %s1125 = smov [#allocation23]
            %v1126 = vld [vmem:[%s1125] sm:$0xff]
            %s1127 = smov [#allocation24]
            %v1128 = vld [vmem:[%s1127] sm:$0xff]
            %s1129 = smov %s241
            %s1130 = smov %s245
            %s1131 = smov %s249
            %s1132 = smov %s253
            %v1133 = vld [vmem:[%s1129] sm:$0xff]
            %v1134 = vld [vmem:[%s1130] sm:$0xff]
            %v1135 = vld [vmem:[%s1131] sm:$0xff]
            %v1136 = vld [vmem:[%s1132] sm:$0xff]
            %v1137 = vmul.f32 %v1126, %v1133
            %v1138 = vmul.f32 %v1128, %v1135
            %v1139 = vsub.f32 %v1137, %v1138
            %v1140 = vmul.f32 %v1126, %v1134
            %v1141 = vmul.f32 %v1128, %v1136
            %v1142 = vsub.f32 %v1140, %v1141
            %v1143 = vmul.f32 %v1128, %v1133
            %v1144 = vmul.f32 %v1126, %v1135
            %v1145 = vadd.f32 %v1143, %v1144
            %v1146 = vmul.f32 %v1128, %v1134
            %v1147 = vmul.f32 %v1126, %v1136
            %v1148 = vadd.f32 %v1146, %v1147
            %1149 = vst [vmem:[%s1129] sm:$0xff] %v1139
            %1150 = vst [vmem:[%s1130] sm:$0xff] %v1142
            %1151 = vst [vmem:[%s1131] sm:$0xff] %v1145
            %1152 = vst [vmem:[%s1132] sm:$0xff] %v1148
            %s1153 = smov [#allocation23]
            %s1154 = scalar_lea.vmem %s1153, 8
            %v1155 = vld [vmem:[%s1154] sm:$0xff]
            %s1156 = smov [#allocation24]
            %s1157 = scalar_lea.vmem %s1156, 8
            %v1158 = vld [vmem:[%s1157] sm:$0xff]
            %s1159 = smov %s241
            %s1160 = scalar_lea.vmem %s1159, 8
            %s1161 = smov %s245
            %s1162 = scalar_lea.vmem %s1161, 8
            %s1163 = smov %s249
            %s1164 = scalar_lea.vmem %s1163, 8
            %s1165 = smov %s253
            %s1166 = scalar_lea.vmem %s1165, 8
            %v1167 = vld [vmem:[%s1160] sm:$0xff]
            %v1168 = vld [vmem:[%s1162] sm:$0xff]
            %v1169 = vld [vmem:[%s1164] sm:$0xff]
            %v1170 = vld [vmem:[%s1166] sm:$0xff]
            %v1171 = vmul.f32 %v1155, %v1167
            %v1172 = vmul.f32 %v1158, %v1169
            %v1173 = vsub.f32 %v1171, %v1172
            %v1174 = vmul.f32 %v1155, %v1168
            %v1175 = vmul.f32 %v1158, %v1170
            %v1176 = vsub.f32 %v1174, %v1175
            %v1177 = vmul.f32 %v1158, %v1167
            %v1178 = vmul.f32 %v1155, %v1169
            %v1179 = vadd.f32 %v1177, %v1178
            %v1180 = vmul.f32 %v1158, %v1168
            %v1181 = vmul.f32 %v1155, %v1170
            %v1182 = vadd.f32 %v1180, %v1181
            %1183 = vst [vmem:[%s1160] sm:$0xff] %v1173
            %1184 = vst [vmem:[%s1162] sm:$0xff] %v1176
            %1185 = vst [vmem:[%s1164] sm:$0xff] %v1179
            %1186 = vst [vmem:[%s1166] sm:$0xff] %v1182
            %s1187 = smov %s241
            %s1188 = smov %s249
            %v1189 = vld [vmem:[%s1187] ss:$0 sm:$0xff]
            %s1191 = scalar_lea.vmem %s1187, 4294967295
            %v1192 = vld [vmem:[%s1191] sm:$0xfe]
            %v1193 = vlaneseq
            %v1194 = vshrl.u32 %v1193, 7
            %vm1195 = vcmp.eq.s32.totalorder %v1194, 0
            %v1196 = vsel %vm1195, %v1189, %v1192
            %s1197 = scalar_lea.vmem %s1187, 7
            %v1198 = vld [vmem:[%s1197] ss:$0 sm:$0xff]
            %1199 = vst [vmem:[%s1187] sm:$0xff] %v1196
            %s1200 = scalar_lea.vmem %s1187, 8
            %s1202 = scalar_lea.vmem %s1200, 4294967295
            %v1203 = vld [vmem:[%s1202] sm:$0xfe]
            %v1204 = vlaneseq
            %v1205 = vshrl.u32 %v1204, 7
            %vm1206 = vcmp.eq.s32.totalorder %v1205, 0
            %v1207 = vsel %vm1206, %v1198, %v1203
            %s1208 = scalar_lea.vmem %s1200, 7
            %v1209 = vld [vmem:[%s1208] ss:$0 sm:$0xff]
            %1210 = vst [vmem:[%s1200] sm:$0xff] %v1207
            %v1211 = vld [vmem:[%s1188] ss:$0 sm:$0xff]
            %s1212 = scalar_lea.vmem %s1187, 1
            %1213 = vst [vmem:[%s1212] sm:$0x1] %v1211
            %s1214 = scalar_lea.vmem %s1188, 8
            %s1215 = scalar_lea.vmem %s1214, 1
            %v1216 = vld [vmem:[%s1215] sm:$0x7f]
            %v1217 = vlaneseq
            %v1218 = vshrl.u32 %v1217, 7
            %vm1219 = vcmp.eq.s32.totalorder %v1218, 7
            %v1220 = vsel %vm1219, %v1209, %v1216
            %v1221 = vld [vmem:[%s1214] ss:$0 sm:$0xff]
            %1222 = vst [vmem:[%s1214] sm:$0xff] %v1220
            %s1223 = scalar_lea.vmem %s1188, 1
            %v1224 = vld [vmem:[%s1223] sm:$0x7f]
            %v1225 = vlaneseq
            %v1226 = vshrl.u32 %v1225, 7
            %vm1227 = vcmp.eq.s32.totalorder %v1226, 7
            %v1228 = vsel %vm1227, %v1221, %v1224
            %v1229 = vld [vmem:[%s1188] ss:$0 sm:$0xff]
            %1230 = vst [vmem:[%s1188] sm:$0xff] %v1228
            %s1231 = smov %s245
            %s1232 = smov %s253
            %v1233 = vld [vmem:[%s1231] ss:$0 sm:$0xff]
            %s1235 = scalar_lea.vmem %s1231, 4294967295
            %v1236 = vld [vmem:[%s1235] sm:$0xfe]
            %v1237 = vlaneseq
            %v1238 = vshrl.u32 %v1237, 7
            %vm1239 = vcmp.eq.s32.totalorder %v1238, 0
            %v1240 = vsel %vm1239, %v1233, %v1236
            %s1241 = scalar_lea.vmem %s1231, 7
            %v1242 = vld [vmem:[%s1241] ss:$0 sm:$0xff]
            %1243 = vst [vmem:[%s1231] sm:$0xff] %v1240
            %s1244 = scalar_lea.vmem %s1231, 8
            %s1246 = scalar_lea.vmem %s1244, 4294967295
            %v1247 = vld [vmem:[%s1246] sm:$0xfe]
            %v1248 = vlaneseq
            %v1249 = vshrl.u32 %v1248, 7
            %vm1250 = vcmp.eq.s32.totalorder %v1249, 0
            %v1251 = vsel %vm1250, %v1242, %v1247
            %s1252 = scalar_lea.vmem %s1244, 7
            %v1253 = vld [vmem:[%s1252] ss:$0 sm:$0xff]
            %1254 = vst [vmem:[%s1244] sm:$0xff] %v1251
            %v1255 = vld [vmem:[%s1232] ss:$0 sm:$0xff]
            %s1256 = scalar_lea.vmem %s1231, 1
            %1257 = vst [vmem:[%s1256] sm:$0x1] %v1255
            %s1258 = scalar_lea.vmem %s1232, 8
            %s1259 = scalar_lea.vmem %s1258, 1
            %v1260 = vld [vmem:[%s1259] sm:$0x7f]
            %v1261 = vlaneseq
            %v1262 = vshrl.u32 %v1261, 7
            %vm1263 = vcmp.eq.s32.totalorder %v1262, 7
            %v1264 = vsel %vm1263, %v1253, %v1260
            %v1265 = vld [vmem:[%s1258] ss:$0 sm:$0xff]
            %1266 = vst [vmem:[%s1258] sm:$0xff] %v1264
            %s1267 = scalar_lea.vmem %s1232, 1
            %v1268 = vld [vmem:[%s1267] sm:$0x7f]
            %v1269 = vlaneseq
            %v1270 = vshrl.u32 %v1269, 7
            %vm1271 = vcmp.eq.s32.totalorder %v1270, 7
            %v1272 = vsel %vm1271, %v1265, %v1268
            %v1273 = vld [vmem:[%s1232] ss:$0 sm:$0xff]
            %1274 = vst [vmem:[%s1232] sm:$0xff] %v1272
          $region108: #{custom-call.2} parent=100 // loop_footer
            %s471 = sadd.s32 1, %s467
          $region109: #{custom-call.2} parent=100 // loop_footer_branch
            %466 = sbr.rel target = $region105
          $region110: #{custom-call.2} parent=100 // loop_exit
            _
          %s1275 = sadd.s32 %s337, 1
        $region101: #{custom-call.2} parent=95 // loop_footer
          _
        $region102: #{custom-call.2} parent=95 // loop_footer_branch
          %336 = sbr.rel target = $region98
        $region103: #{custom-call.2} parent=95 // loop_exit
          _
        %s1278 = sand.u32 %s17, 7
        %s1279 = scalar_lea.vmem [#allocation4], %s1278
        %s1280 = sand.u32 %s17, 7
        %s1281 = scalar_lea.vmem [#allocation6], %s1280
        %s1282 = smov [#allocation12]
        %s1283 = smov %s1279
        %v1284 = vlaneseq
        %v1285 = vand.u32 %v1284, 127
        %v1286 = vmov %v1285
        %v1287 = vlaneseq
        %v1288 = vshrl.u32 %v1287, 7
        %v1289 = vmov %v1288
        %v1290 = vld [vmem:[%s1282] sm:$0xff]
        %vm1293 = vcmp.eq.s32.totalorder %v1289, %v1286
        %v1294 = vsel %vm1293, %v1290, 0.0
        %s1295 = scalar_lea.vmem %s1282, 8
        %v1296 = vld [vmem:[%s1295] sm:$0xff]
        %v1298 = vadd.s32 %v1289, 8
        %vm1299 = vcmp.eq.s32.totalorder %v1298, %v1286
        %v1300 = vsel %vm1299, %v1296, %v1294
        %v1301 = vrot.slane %v1300, 4
        %v1302 = vadd.f32 %v1300, %v1301
        %v1303 = vrot.slane %v1302, 2
        %v1304 = vadd.f32 %v1302, %v1303
        %v1305 = vrot.slane %v1304, 1
        %v1306 = vadd.f32 %v1304, %v1305
        %1307 = vst [vmem:[%s1283] sm:$0x1] %v1306
        %s1308 = smov [#allocation15]
        %s1309 = smov %s1281
        %v1310 = vlaneseq
        %v1311 = vand.u32 %v1310, 127
        %v1312 = vmov %v1311
        %v1313 = vlaneseq
        %v1314 = vshrl.u32 %v1313, 7
        %v1315 = vmov %v1314
        %v1316 = vld [vmem:[%s1308] sm:$0xff]
        %vm1319 = vcmp.eq.s32.totalorder %v1315, %v1312
        %v1320 = vsel %vm1319, %v1316, 0.0
        %s1321 = scalar_lea.vmem %s1308, 8
        %v1322 = vld [vmem:[%s1321] sm:$0xff]
        %v1324 = vadd.s32 %v1315, 8
        %vm1325 = vcmp.eq.s32.totalorder %v1324, %v1312
        %v1326 = vsel %vm1325, %v1322, %v1320
        %v1327 = vrot.slane %v1326, 4
        %v1328 = vadd.f32 %v1326, %v1327
        %v1329 = vrot.slane %v1328, 2
        %v1330 = vadd.f32 %v1328, %v1329
        %v1331 = vrot.slane %v1330, 1
        %v1332 = vadd.f32 %v1330, %v1331
        %1333 = vst [vmem:[%s1309] sm:$0x1] %v1332
        %s1335 = ssub.s32 4, 1
        %v1336 = vld [vmem:[#allocation4] sm:%s1335]
        %s1338 = ssub.s32 4, 1
        %1339 = vst [vmem:[%s231] sm:%s1338] %v1336
        %s1341 = ssub.s32 4, 1
        %v1342 = vld [vmem:[#allocation6] sm:%s1341]
        %s1344 = ssub.s32 4, 1
        %1345 = vst [vmem:[%s237] sm:%s1344] %v1342
        %s1346 = sand.u32 %s27, 1
        %s1347 = sand.u32 %s27, 1
        %s1348 = smul.addr %s1347, 2
        %s1349 = scalar_lea.vmem [#allocation5], %s1348
        %s1350 = sand.u32 %s55, 1
        %s1351 = sand.u32 %s55, 1
        %s1352 = smul.addr %s1351, 2
        %s1353 = scalar_lea.vmem [#allocation7], %s1352
        %s1354 = sand.u32 %s17, 1
        %s1355 = sand.u32 %s17, 1
        %s1356 = smul.addr %s1355, 16
        %s1357 = scalar_lea.vmem [#allocation8], %s1356
        %s1358 = sand.u32 %s17, 1
        %s1359 = sand.u32 %s17, 1
        %s1360 = smul.addr %s1359, 16
        %s1361 = scalar_lea.vmem [#allocation9], %s1360
        %s1362 = sand.u32 %s17, 1
        %s1363 = sand.u32 %s17, 1
        %s1364 = smul.addr %s1363, 16
        %s1365 = scalar_lea.vmem [#allocation10], %s1364
        %s1366 = sand.u32 %s17, 1
        %s1367 = sand.u32 %s17, 1
        %s1368 = smul.addr %s1367, 16
        %s1369 = scalar_lea.vmem [#allocation11], %s1368
        // Predicated region
        $region111: #{custom-call.2} parent=95 // pred_check
          %p1370 = pneg %p37
        $region112: #{custom-call.2} parent=95 // pred_check_branch
          %1372 = sbr.rel (%p1370) target = $region114
        $region113: #{custom-call.2} parent=95 // pred_region
          %s1373 = sshrl.u32 %s17, 3
          %s1374 = smul.addr %s1373, 2
          %s1375 = scalar_lea.vmem %s4, %s1374
          // Predicated region
          $region115: #{custom-call.2} parent=113 // pred_check
            _
          $region116: #{custom-call.2} parent=113 // pred_check_branch
            %1377 = sbr.rel (0) target = $region118
          $region117: #{custom-call.2} parent=113 // pred_region
            // Predicated region
            $region119: #{custom-call.2} parent=117 // pred_check
              _
            $region120: #{custom-call.2} parent=117 // pred_check_branch
              %1379 = sbr.rel target = $region122
            $region121: #{custom-call.2} parent=117 // pred_region
              // Predicated region
              $region134: #{custom-call.2} parent=121 // pred_check
                _
              $region135: #{custom-call.2} parent=121 // pred_check_branch
                %1395 = sbr.rel (0) target = $region137
              $region136: #{custom-call.2} parent=121 // pred_region
                %s1397 = ssub.s32 4, 1
                loop: start=0, step=1, limit=1
                $region138: #{custom-call.2} parent=136 // loop_pre_header
                  _
                $region139: #{custom-call.2} parent=136 // loop_header
                  %s1399 = sphi 0, %s1403
                  %p1400 = scmp.ge.s32.totalorder %s1399, 1
                  %s1404 = sphi %s1349, %s1349
                  %s1405 = sphi %s1375, %s1375
                $region140: #{custom-call.2} parent=136 // loop_header_branch
                  %1402 = sbr.rel (%p1400) target = $region144
                $region141: #{custom-call.2} parent=136 // loop_body
                  %v1406 = vld [vmem:[%s1404] sm:%s1397]
                  %1407 = vst [vmem:[%s1405] sm:%s1397] %v1406
                $region142: #{custom-call.2} parent=136 // loop_footer
                  %s1403 = sadd.s32 1, %s1399
                $region143: #{custom-call.2} parent=136 // loop_footer_branch
                  %1398 = sbr.rel target = $region139
                $region144: #{custom-call.2} parent=136 // loop_exit
                  _
              $region137: #{custom-call.2} parent=121 // pred_fallthru
                _
            $region122: #{custom-call.2} parent=117 // pred_fallthru
              _
            // Predicated region
            $region123: #{custom-call.2} parent=117 // pred_check
              _
            $region124: #{custom-call.2} parent=117 // pred_check_branch
              %1381 = sbr.rel (0) target = $region126
            $region125: #{custom-call.2} parent=117 // pred_region
              %s1383 = ssub.s32 4, 1
              loop: start=0, step=1, limit=1
              $region127: #{custom-call.2} parent=125 // loop_pre_header
                _
              $region128: #{custom-call.2} parent=125 // loop_header
                %s1385 = sphi 0, %s1389
                %p1386 = scmp.ge.s32.totalorder %s1385, 1
                %s1390 = sphi %s1349, %s1349
                %s1391 = sphi %s1375, %s1375
              $region129: #{custom-call.2} parent=125 // loop_header_branch
                %1388 = sbr.rel (%p1386) target = $region133
              $region130: #{custom-call.2} parent=125 // loop_body
                %v1392 = vld [vmem:[%s1390] sm:%s1383]
                %1393 = vst [vmem:[%s1391] sm:%s1383] %v1392
              $region131: #{custom-call.2} parent=125 // loop_footer
                %s1389 = sadd.s32 1, %s1385
              $region132: #{custom-call.2} parent=125 // loop_footer_branch
                %1384 = sbr.rel target = $region128
              $region133: #{custom-call.2} parent=125 // loop_exit
                _
            $region126: #{custom-call.2} parent=117 // pred_fallthru
              _
          $region118: #{custom-call.2} parent=113 // pred_fallthru
            _
          %1408 = vnop
        $region114: #{custom-call.2} parent=95 // pred_fallthru
          _
        // Predicated region
        $region145: #{custom-call.2} parent=95 // pred_check
          %p1409 = pneg %p65
        $region146: #{custom-call.2} parent=95 // pred_check_branch
          %1411 = sbr.rel (%p1409) target = $region148
        $region147: #{custom-call.2} parent=95 // pred_region
          %s1412 = sshrl.u32 %s17, 3
          %s1413 = smul.addr %s1412, 2
          %s1414 = scalar_lea.vmem %s5, %s1413
          // Predicated region
          $region149: #{custom-call.2} parent=147 // pred_check
            _
          $region150: #{custom-call.2} parent=147 // pred_check_branch
            %1416 = sbr.rel (0) target = $region152
          $region151: #{custom-call.2} parent=147 // pred_region
            // Predicated region
            $region153: #{custom-call.2} parent=151 // pred_check
              _
            $region154: #{custom-call.2} parent=151 // pred_check_branch
              %1418 = sbr.rel target = $region156
            $region155: #{custom-call.2} parent=151 // pred_region
              // Predicated region
              $region168: #{custom-call.2} parent=155 // pred_check
                _
              $region169: #{custom-call.2} parent=155 // pred_check_branch
                %1434 = sbr.rel (0) target = $region171
              $region170: #{custom-call.2} parent=155 // pred_region
                %s1436 = ssub.s32 4, 1
                loop: start=0, step=1, limit=1
                $region172: #{custom-call.2} parent=170 // loop_pre_header
                  _
                $region173: #{custom-call.2} parent=170 // loop_header
                  %s1438 = sphi 0, %s1442
                  %p1439 = scmp.ge.s32.totalorder %s1438, 1
                  %s1443 = sphi %s1353, %s1353
                  %s1444 = sphi %s1414, %s1414
                $region174: #{custom-call.2} parent=170 // loop_header_branch
                  %1441 = sbr.rel (%p1439) target = $region178
                $region175: #{custom-call.2} parent=170 // loop_body
                  %v1445 = vld [vmem:[%s1443] sm:%s1436]
                  %1446 = vst [vmem:[%s1444] sm:%s1436] %v1445
                $region176: #{custom-call.2} parent=170 // loop_footer
                  %s1442 = sadd.s32 1, %s1438
                $region177: #{custom-call.2} parent=170 // loop_footer_branch
                  %1437 = sbr.rel target = $region173
                $region178: #{custom-call.2} parent=170 // loop_exit
                  _
              $region171: #{custom-call.2} parent=155 // pred_fallthru
                _
            $region156: #{custom-call.2} parent=151 // pred_fallthru
              _
            // Predicated region
            $region157: #{custom-call.2} parent=151 // pred_check
              _
            $region158: #{custom-call.2} parent=151 // pred_check_branch
              %1420 = sbr.rel (0) target = $region160
            $region159: #{custom-call.2} parent=151 // pred_region
              %s1422 = ssub.s32 4, 1
              loop: start=0, step=1, limit=1
              $region161: #{custom-call.2} parent=159 // loop_pre_header
                _
              $region162: #{custom-call.2} parent=159 // loop_header
                %s1424 = sphi 0, %s1428
                %p1425 = scmp.ge.s32.totalorder %s1424, 1
                %s1429 = sphi %s1353, %s1353
                %s1430 = sphi %s1414, %s1414
              $region163: #{custom-call.2} parent=159 // loop_header_branch
                %1427 = sbr.rel (%p1425) target = $region167
              $region164: #{custom-call.2} parent=159 // loop_body
                %v1431 = vld [vmem:[%s1429] sm:%s1422]
                %1432 = vst [vmem:[%s1430] sm:%s1422] %v1431
              $region165: #{custom-call.2} parent=159 // loop_footer
                %s1428 = sadd.s32 1, %s1424
              $region166: #{custom-call.2} parent=159 // loop_footer_branch
                %1423 = sbr.rel target = $region162
              $region167: #{custom-call.2} parent=159 // loop_exit
                _
            $region160: #{custom-call.2} parent=151 // pred_fallthru
              _
          $region152: #{custom-call.2} parent=147 // pred_fallthru
            _
          %1447 = vnop
        $region148: #{custom-call.2} parent=95 // pred_fallthru
          _
        %s1448 = smul.addr %s17, 16
        %s1449 = scalar_lea.vmem %s6, %s1448
        // Predicated region
        $region179: #{custom-call.2} parent=95 // pred_check
          _
        $region180: #{custom-call.2} parent=95 // pred_check_branch
          %1451 = sbr.rel (0) target = $region182
        $region181: #{custom-call.2} parent=95 // pred_region
          // Predicated region
          $region183: #{custom-call.2} parent=181 // pred_check
            _
          $region184: #{custom-call.2} parent=181 // pred_check_branch
            %1453 = sbr.rel (0) target = $region186
          $region185: #{custom-call.2} parent=181 // pred_region
            loop: start=0, step=1, limit=1
            $region187: #{custom-call.2} parent=185 // loop_pre_header
              _
            $region188: #{custom-call.2} parent=185 // loop_header
              %s1455 = sphi 0, %s1459
              %p1456 = scmp.ge.s32.totalorder %s1455, 1
              %s1460 = sphi %s1357, %s1357
              %s1461 = sphi %s1449, %s1449
            $region189: #{custom-call.2} parent=185 // loop_header_branch
              %1458 = sbr.rel (%p1456) target = $region193
            $region190: #{custom-call.2} parent=185 // loop_body
              %v1462 = vld [vmem:[%s1460] sm:$0xff]
              %1463 = vst [vmem:[%s1461] sm:$0xff] %v1462
              %v1464 = vld [vmem:[%s1460 + $0x8] sm:$0xff]
              %1465 = vst [vmem:[%s1461 + $0x8] sm:$0xff] %v1464
            $region191: #{custom-call.2} parent=185 // loop_footer
              %s1459 = sadd.s32 1, %s1455
            $region192: #{custom-call.2} parent=185 // loop_footer_branch
              %1454 = sbr.rel target = $region188
            $region193: #{custom-call.2} parent=185 // loop_exit
              _
          $region186: #{custom-call.2} parent=181 // pred_fallthru
            _
          // Predicated region
          $region194: #{custom-call.2} parent=181 // pred_check
            _
          $region195: #{custom-call.2} parent=181 // pred_check_branch
            %1467 = sbr.rel target = $region197
          $region196: #{custom-call.2} parent=181 // pred_region
            _
          $region197: #{custom-call.2} parent=181 // pred_fallthru
            _
        $region182: #{custom-call.2} parent=95 // pred_fallthru
          _
        %1468 = vnop
        %s1469 = smul.addr %s17, 16
        %s1470 = scalar_lea.vmem %s7, %s1469
        // Predicated region
        $region198: #{custom-call.2} parent=95 // pred_check
          _
        $region199: #{custom-call.2} parent=95 // pred_check_branch
          %1472 = sbr.rel (0) target = $region201
        $region200: #{custom-call.2} parent=95 // pred_region
          // Predicated region
          $region202: #{custom-call.2} parent=200 // pred_check
            _
          $region203: #{custom-call.2} parent=200 // pred_check_branch
            %1474 = sbr.rel (0) target = $region205
          $region204: #{custom-call.2} parent=200 // pred_region
            loop: start=0, step=1, limit=1
            $region206: #{custom-call.2} parent=204 // loop_pre_header
              _
            $region207: #{custom-call.2} parent=204 // loop_header
              %s1476 = sphi 0, %s1480
              %p1477 = scmp.ge.s32.totalorder %s1476, 1
              %s1481 = sphi %s1361, %s1361
              %s1482 = sphi %s1470, %s1470
            $region208: #{custom-call.2} parent=204 // loop_header_branch
              %1479 = sbr.rel (%p1477) target = $region212
            $region209: #{custom-call.2} parent=204 // loop_body
              %v1483 = vld [vmem:[%s1481] sm:$0xff]
              %1484 = vst [vmem:[%s1482] sm:$0xff] %v1483
              %v1485 = vld [vmem:[%s1481 + $0x8] sm:$0xff]
              %1486 = vst [vmem:[%s1482 + $0x8] sm:$0xff] %v1485
            $region210: #{custom-call.2} parent=204 // loop_footer
              %s1480 = sadd.s32 1, %s1476
            $region211: #{custom-call.2} parent=204 // loop_footer_branch
              %1475 = sbr.rel target = $region207
            $region212: #{custom-call.2} parent=204 // loop_exit
              _
          $region205: #{custom-call.2} parent=200 // pred_fallthru
            _
          // Predicated region
          $region213: #{custom-call.2} parent=200 // pred_check
            _
          $region214: #{custom-call.2} parent=200 // pred_check_branch
            %1488 = sbr.rel target = $region216
          $region215: #{custom-call.2} parent=200 // pred_region
            _
          $region216: #{custom-call.2} parent=200 // pred_fallthru
            _
        $region201: #{custom-call.2} parent=95 // pred_fallthru
          _
        %1489 = vnop
        %s1490 = smul.addr %s17, 16
        %s1491 = scalar_lea.vmem %s8, %s1490
        // Predicated region
        $region217: #{custom-call.2} parent=95 // pred_check
          _
        $region218: #{custom-call.2} parent=95 // pred_check_branch
          %1493 = sbr.rel (0) target = $region220
        $region219: #{custom-call.2} parent=95 // pred_region
          // Predicated region
          $region221: #{custom-call.2} parent=219 // pred_check
            _
          $region222: #{custom-call.2} parent=219 // pred_check_branch
            %1495 = sbr.rel (0) target = $region224
          $region223: #{custom-call.2} parent=219 // pred_region
            loop: start=0, step=1, limit=1
            $region225: #{custom-call.2} parent=223 // loop_pre_header
              _
            $region226: #{custom-call.2} parent=223 // loop_header
              %s1497 = sphi 0, %s1501
              %p1498 = scmp.ge.s32.totalorder %s1497, 1
              %s1502 = sphi %s1365, %s1365
              %s1503 = sphi %s1491, %s1491
            $region227: #{custom-call.2} parent=223 // loop_header_branch
              %1500 = sbr.rel (%p1498) target = $region231
            $region228: #{custom-call.2} parent=223 // loop_body
              %v1504 = vld [vmem:[%s1502] sm:$0xff]
              %1505 = vst [vmem:[%s1503] sm:$0xff] %v1504
              %v1506 = vld [vmem:[%s1502 + $0x8] sm:$0xff]
              %1507 = vst [vmem:[%s1503 + $0x8] sm:$0xff] %v1506
            $region229: #{custom-call.2} parent=223 // loop_footer
              %s1501 = sadd.s32 1, %s1497
            $region230: #{custom-call.2} parent=223 // loop_footer_branch
              %1496 = sbr.rel target = $region226
            $region231: #{custom-call.2} parent=223 // loop_exit
              _
          $region224: #{custom-call.2} parent=219 // pred_fallthru
            _
          // Predicated region
          $region232: #{custom-call.2} parent=219 // pred_check
            _
          $region233: #{custom-call.2} parent=219 // pred_check_branch
            %1509 = sbr.rel target = $region235
          $region234: #{custom-call.2} parent=219 // pred_region
            _
          $region235: #{custom-call.2} parent=219 // pred_fallthru
            _
        $region220: #{custom-call.2} parent=95 // pred_fallthru
          _
        %1510 = vnop
        %s1511 = smul.addr %s17, 16
        %s1512 = scalar_lea.vmem %s9, %s1511
        // Predicated region
        $region236: #{custom-call.2} parent=95 // pred_check
          _
        $region237: #{custom-call.2} parent=95 // pred_check_branch
          %1514 = sbr.rel (0) target = $region239
        $region238: #{custom-call.2} parent=95 // pred_region
          // Predicated region
          $region240: #{custom-call.2} parent=238 // pred_check
            _
          $region241: #{custom-call.2} parent=238 // pred_check_branch
            %1516 = sbr.rel (0) target = $region243
          $region242: #{custom-call.2} parent=238 // pred_region
            loop: start=0, step=1, limit=1
            $region244: #{custom-call.2} parent=242 // loop_pre_header
              _
            $region245: #{custom-call.2} parent=242 // loop_header
              %s1518 = sphi 0, %s1522
              %p1519 = scmp.ge.s32.totalorder %s1518, 1
              %s1523 = sphi %s1369, %s1369
              %s1524 = sphi %s1512, %s1512
            $region246: #{custom-call.2} parent=242 // loop_header_branch
              %1521 = sbr.rel (%p1519) target = $region250
            $region247: #{custom-call.2} parent=242 // loop_body
              %v1525 = vld [vmem:[%s1523] sm:$0xff]
              %1526 = vst [vmem:[%s1524] sm:$0xff] %v1525
              %v1527 = vld [vmem:[%s1523 + $0x8] sm:$0xff]
              %1528 = vst [vmem:[%s1524 + $0x8] sm:$0xff] %v1527
            $region248: #{custom-call.2} parent=242 // loop_footer
              %s1522 = sadd.s32 1, %s1518
            $region249: #{custom-call.2} parent=242 // loop_footer_branch
              %1517 = sbr.rel target = $region245
            $region250: #{custom-call.2} parent=242 // loop_exit
              _
          $region243: #{custom-call.2} parent=238 // pred_fallthru
            _
          // Predicated region
          $region251: #{custom-call.2} parent=238 // pred_check
            _
          $region252: #{custom-call.2} parent=238 // pred_check_branch
            %1530 = sbr.rel target = $region254
          $region253: #{custom-call.2} parent=238 // pred_region
            _
          $region254: #{custom-call.2} parent=238 // pred_fallthru
            _
        $region239: #{custom-call.2} parent=95 // pred_fallthru
          _
        %1531 = vnop
      $region96: #{custom-call.2} parent=5 // pred_fallthru
        _
      %p1532 = scmp.le.s32.totalorder 2, %s12
      // Predicated region
      $region255: #{custom-call.2} parent=5 // pred_check
        %p1533 = pneg %p1532
      $region256: #{custom-call.2} parent=5 // pred_check_branch
        %1535 = sbr.rel (%p1533) target = $region258
      $region257: #{custom-call.2} parent=5 // pred_region
        %s1536 = ssub.s32 %s12, 2
        // Predicated region
        $region259: #{custom-call.2} parent=257 // pred_check
          %p1537 = pneg %p43
        $region260: #{custom-call.2} parent=257 // pred_check_branch
          %1539 = sbr.rel (%p1537) target = $region262
        $region261: #{custom-call.2} parent=257 // pred_region
          %s1540 = sand.u32 %s28, 1
          %s1541 = sand.u32 %s28, 1
          %s1542 = smul.addr %s1541, 2
          %s1543 = scalar_lea.vmem [#allocation5], %s1542
        $region262: #{custom-call.2} parent=257 // pred_fallthru
          _
        // Predicated region
        $region263: #{custom-call.2} parent=257 // pred_check
          %p1544 = pneg %p71
        $region264: #{custom-call.2} parent=257 // pred_check_branch
          %1546 = sbr.rel (%p1544) target = $region266
        $region265: #{custom-call.2} parent=257 // pred_region
          %s1547 = sand.u32 %s56, 1
          %s1548 = sand.u32 %s56, 1
          %s1549 = smul.addr %s1548, 2
          %s1550 = scalar_lea.vmem [#allocation7], %s1549
        $region266: #{custom-call.2} parent=257 // pred_fallthru
          _
        %s1551 = sand.u32 %s18, 1
        %s1552 = sand.u32 %s18, 1
        %s1553 = smul.addr %s1552, 16
        %s1554 = scalar_lea.vmem [#allocation8], %s1553
        %s1555 = sand.u32 %s18, 1
        %s1556 = sand.u32 %s18, 1
        %s1557 = smul.addr %s1556, 16
        %s1558 = scalar_lea.vmem [#allocation9], %s1557
        %s1559 = sand.u32 %s18, 1
        %s1560 = sand.u32 %s18, 1
        %s1561 = smul.addr %s1560, 16
        %s1562 = scalar_lea.vmem [#allocation10], %s1561
        %s1563 = sand.u32 %s18, 1
        %s1564 = sand.u32 %s18, 1
        %s1565 = smul.addr %s1564, 16
        %s1566 = scalar_lea.vmem [#allocation11], %s1565
      $region258: #{custom-call.2} parent=5 // pred_fallthru
        _
    $region6: #{custom-call.2} parent=1 // loop_footer
      %s16 = sadd.s32 1, %s12
    $region7: #{custom-call.2} parent=1 // loop_footer_branch
      %11 = sbr.rel target = $region3
    $region8: #{custom-call.2} parent=1 // loop_exit
      _

// kernel: starnet_forward.1
$region0: #{starnet_forward.1}
  #allocation0 [shape = 'u32[]', space=smem, size = 0x4, offset = 0x4, fixed_abs, tag = 'smem constant byte address 0x4 - core index']
  #allocation1 [shape = 'u32[72,128]{1,0:T(1,128)}', space=vmem, size = 0x9000, scoped, tag = 'internal scratch']
  %s0 = inlined_call_operand.vmem [shape: bf16[64,256], index: 0, kind: input, shape index: {}]
  %s1 = inlined_call_operand.vmem [shape: bf16[256,1024], index: 1, kind: input, shape index: {}]
  %s2 = inlined_call_operand.vmem [shape: bf16[1024,32], index: 2, kind: input, shape index: {}]
  %s3 = inlined_call_operand.vmem [shape: f32[32,32], index: 3, kind: input, shape index: {}]
  %s4 = inlined_call_operand.vmem [shape: f32[2,32,32], index: 4, kind: output, shape index: {}]
  %s5 = sld [smem:[#allocation0]]
  $region49: #{starnet_forward.1} parent=0
    _
  %s7 = ssub.s32 1, %s5
  %s8 = scalar_select 0, %s7, %s5
  loop: start=0, step=1, limit=4
  $region2: #{starnet_forward.1} parent=0 // loop_pre_header
    _
  $region3: #{starnet_forward.1} parent=0 // loop_header
    %s10 = sphi 0, %s14
    %p11 = scmp.ge.s32.totalorder %s10, 4
    %s20 = sphi 0, %s22
    %s23 = sphi 0, %s20
    %s24 = sphi 0, %s23
    %s40 = sphi 0, %s24
    %s44 = sphi 0, %s44
    %s46 = sphi 0, %s44
    %s47 = sphi 0, %s46
    %s61 = sphi 0, %s47
    %s65 = sphi 0, %s65
    %s67 = sphi 0, %s65
    %s68 = sphi 0, %s67
    %s82 = sphi 0, %s68
    %s86 = sphi 0, %s86
    %s88 = sphi 0, %s86
    %s89 = sphi 0, %s88
    %s103 = sphi 0, %s89
    %s109 = sphi 0, %s111
    %s112 = sphi 0, %s109
    %s113 = sphi 0, %s112
    %s129 = sphi 0, %s113
  $region4: #{starnet_forward.1} parent=0 // loop_header_branch
    %13 = sbr.rel (%p11) target = $region8
  $region5: #{starnet_forward.1} parent=0 // loop_body
    %s15 = ssub.s32 %s10, 1
    %s16 = ssub.s32 %s10, 2
    %s17 = sadd.s32 %s10, 1
    %s18 = ssub.s32 %s10, %s17
    %p19 = scmp.eq.s32.totalorder %s18, 0
    %s21 = sadd.s32 %s20, 1
    %s22 = scalar_select %p19, %s20, %s21
    %p25 = pneg %p19
    %p26 = scmp.eq.s32.totalorder %s10, 1
    %p27 = por %p25, %p26
    %p28 = scmp.ne.s32.totalorder %s20, %s23
    %p29 = scmp.eq.s32.totalorder %s10, 0
    %p30 = por %p28, %p29
    %p31 = scmp.ne.s32.totalorder %s20, %s23
    %p32 = scmp.eq.s32.totalorder %s15, 1
    %p33 = por %p31, %p32
    %p34 = scmp.ne.s32.totalorder %s23, %s24
    %p35 = scmp.eq.s32.totalorder %s15, 0
    %p36 = por %p34, %p35
    %p37 = scmp.ne.s32.totalorder %s23, %s24
    %p38 = scmp.eq.s32.totalorder %s16, 1
    %p39 = por %p37, %p38
    %p41 = scmp.ne.s32.totalorder %s24, %s40
    %p42 = scmp.eq.s32.totalorder %s16, 0
    %p43 = por %p41, %p42
    %s45 = sadd.s32 %s44, 1
    %p48 = scmp.eq.s32.totalorder %s10, 1
    %p49 = scmp.ne.s32.totalorder %s44, %s46
    %p50 = scmp.eq.s32.totalorder %s10, 0
    %p51 = por %p49, %p50
    %p52 = scmp.ne.s32.totalorder %s44, %s46
    %p53 = scmp.eq.s32.totalorder %s15, 1
    %p54 = por %p52, %p53
    %p55 = scmp.ne.s32.totalorder %s46, %s47
    %p56 = scmp.eq.s32.totalorder %s15, 0
    %p57 = por %p55, %p56
    %p58 = scmp.ne.s32.totalorder %s46, %s47
    %p59 = scmp.eq.s32.totalorder %s16, 1
    %p60 = por %p58, %p59
    %p62 = scmp.ne.s32.totalorder %s47, %s61
    %p63 = scmp.eq.s32.totalorder %s16, 0
    %p64 = por %p62, %p63
    %s66 = sadd.s32 %s65, 1
    %p69 = scmp.eq.s32.totalorder %s10, 1
    %p70 = scmp.ne.s32.totalorder %s65, %s67
    %p71 = scmp.eq.s32.totalorder %s10, 0
    %p72 = por %p70, %p71
    %p73 = scmp.ne.s32.totalorder %s65, %s67
    %p74 = scmp.eq.s32.totalorder %s15, 1
    %p75 = por %p73, %p74
    %p76 = scmp.ne.s32.totalorder %s67, %s68
    %p77 = scmp.eq.s32.totalorder %s15, 0
    %p78 = por %p76, %p77
    %p79 = scmp.ne.s32.totalorder %s67, %s68
    %p80 = scmp.eq.s32.totalorder %s16, 1
    %p81 = por %p79, %p80
    %p83 = scmp.ne.s32.totalorder %s68, %s82
    %p84 = scmp.eq.s32.totalorder %s16, 0
    %p85 = por %p83, %p84
    %s87 = sadd.s32 %s86, 1
    %p90 = scmp.eq.s32.totalorder %s10, 1
    %p91 = scmp.ne.s32.totalorder %s86, %s88
    %p92 = scmp.eq.s32.totalorder %s10, 0
    %p93 = por %p91, %p92
    %p94 = scmp.ne.s32.totalorder %s86, %s88
    %p95 = scmp.eq.s32.totalorder %s15, 1
    %p96 = por %p94, %p95
    %p97 = scmp.ne.s32.totalorder %s88, %s89
    %p98 = scmp.eq.s32.totalorder %s15, 0
    %p99 = por %p97, %p98
    %p100 = scmp.ne.s32.totalorder %s88, %s89
    %p101 = scmp.eq.s32.totalorder %s16, 1
    %p102 = por %p100, %p101
    %p104 = scmp.ne.s32.totalorder %s89, %s103
    %p105 = scmp.eq.s32.totalorder %s16, 0
    %p106 = por %p104, %p105
    %s107 = ssub.s32 %s10, %s17
    %p108 = scmp.eq.s32.totalorder %s107, 0
    %s110 = sadd.s32 %s109, 1
    %s111 = scalar_select %p108, %s109, %s110
    %p114 = pneg %p108
    %p115 = scmp.eq.s32.totalorder %s10, 1
    %p116 = por %p114, %p115
    %p117 = scmp.ne.s32.totalorder %s109, %s112
    %p118 = scmp.eq.s32.totalorder %s10, 0
    %p119 = por %p117, %p118
    %p120 = scmp.ne.s32.totalorder %s109, %s112
    %p121 = scmp.eq.s32.totalorder %s15, 1
    %p122 = por %p120, %p121
    %p123 = scmp.ne.s32.totalorder %s112, %s113
    %p124 = scmp.eq.s32.totalorder %s15, 0
    %p125 = por %p123, %p124
    %p126 = scmp.ne.s32.totalorder %s112, %s113
    %p127 = scmp.eq.s32.totalorder %s16, 1
    %p128 = por %p126, %p127
    %p130 = scmp.ne.s32.totalorder %s113, %s129
    %p131 = scmp.eq.s32.totalorder %s16, 0
    %p132 = por %p130, %p131
    %p133 = scmp.le.s32.totalorder 1, %s10
    %p134 = scmp.lt.s32.totalorder %s10, 3
    %p135 = pnand %p133, %p134
    %p136 = pneg %p135
    // Predicated region
    $region9: #{starnet_forward.1} parent=5 // pred_check
      _
    $region10: #{starnet_forward.1} parent=5 // pred_check_branch
      %138 = sbr.rel (%p135) target = $region12
    $region11: #{starnet_forward.1} parent=5 // pred_region
      %s139 = ssub.s32 %s10, 1
      // Predicated region
      $region13: #{starnet_forward.1} parent=11 // pred_check
        %p140 = pneg %p57
      $region14: #{starnet_forward.1} parent=11 // pred_check_branch
        %142 = sbr.rel (%p140) target = $region16
      $region15: #{starnet_forward.1} parent=11 // pred_region
        _
      $region16: #{starnet_forward.1} parent=11 // pred_fallthru
        _
      // Predicated region
      $region17: #{starnet_forward.1} parent=11 // pred_check
        %p143 = pneg %p78
      $region18: #{starnet_forward.1} parent=11 // pred_check_branch
        %145 = sbr.rel (%p143) target = $region20
      $region19: #{starnet_forward.1} parent=11 // pred_region
        _
      $region20: #{starnet_forward.1} parent=11 // pred_fallthru
        _
      // Predicated region
      $region21: #{starnet_forward.1} parent=11 // pred_check
        %p146 = pneg %p99
      $region22: #{starnet_forward.1} parent=11 // pred_check_branch
        %148 = sbr.rel (%p146) target = $region24
      $region23: #{starnet_forward.1} parent=11 // pred_region
        _
      $region24: #{starnet_forward.1} parent=11 // pred_fallthru
        _
    $region12: #{starnet_forward.1} parent=5 // pred_fallthru
      _
    %p149 = scmp.lt.s32.totalorder %s10, 2
    // Predicated region
    $region25: #{starnet_forward.1} parent=5 // pred_check
      %p150 = pneg %p149
    $region26: #{starnet_forward.1} parent=5 // pred_check_branch
      %152 = sbr.rel (%p150) target = $region28
    $region27: #{starnet_forward.1} parent=5 // pred_region
      // Predicated region
      $region29: #{starnet_forward.1} parent=27 // pred_check
        %p153 = pneg %p30
      $region30: #{starnet_forward.1} parent=27 // pred_check_branch
        %155 = sbr.rel (%p153) target = $region32
      $region31: #{starnet_forward.1} parent=27 // pred_region
        %s156 = smul.u32 4, %s10
        %p157 = scmp.lt.s32.totalorder %s156, 7
        %s158 = scalar_select %p157, %s156, 7
        %s159 = smul.addr %s158, 2
        %s160 = smul.addr %s159, 4
        %s161 = scalar_lea.vmem %s0, %s160
        %s162 = smul.u32 4, %s10
      $region32: #{starnet_forward.1} parent=27 // pred_fallthru
        _
    $region28: #{starnet_forward.1} parent=5 // pred_fallthru
      _
    %p163 = scmp.le.s32.totalorder 1, %s10
    %p164 = scmp.lt.s32.totalorder %s10, 3
    %p165 = pnand %p163, %p164
    %p166 = pneg %p165
    // Predicated region
    $region33: #{starnet_forward.1} parent=5 // pred_check
      _
    $region34: #{starnet_forward.1} parent=5 // pred_check_branch
      %168 = sbr.rel (%p165) target = $region36
    $region35: #{starnet_forward.1} parent=5 // pred_region
      %s169 = ssub.s32 %s10, 1
      %s170 = smul.u32 4, %s15
      %p171 = scmp.lt.s32.totalorder %s170, 7
      %s172 = scalar_select %p171, %s170, 7
      %s173 = smul.addr %s172, 2
      %s174 = smul.addr %s173, 4
      %s175 = scalar_lea.vmem %s0, %s174
      %p176 = pneg %p36
      %p177 = pneg %p33
      %p178 = pneg %p57
      %p179 = pneg %p54
      %p180 = pneg %p78
      %p181 = pneg %p75
      %p182 = pneg %p99
      %p183 = pneg %p96
      %p184 = pneg %p125
      %p185 = pneg %p122
      %p186 = scmp.lt.s32.totalorder %s15, 1
      %s187 = scalar_select %p186, %s15, 1
      %s188 = smul.addr %s187, 4
      %s189 = smul.addr %s188, 8
      %s190 = scalar_lea.vmem %s4, %s189
      %s191 = smul.u32 4, %s15
      %p192 = scmp.lt.s32.totalorder %s191, 7
      %s193 = scalar_select %p192, %s191, 7
      %s194 = smul.addr %s193, 2
      %s195 = smul.addr %s194, 4
      %s196 = scalar_lea.vmem %s0, %s195
      %s197 = smul.u32 4, %s15
      %p198 = scmp.lt.s32.totalorder %s15, 1
      %s199 = scalar_select %p198, %s15, 1
      %s200 = smul.addr %s199, 4
      %s201 = smul.addr %s200, 8
      %s202 = scalar_lea.vmem %s4, %s201
      %v203 = vld [vmem:[%s196] sm:$0xff]
      %v204 = vld [vmem:[%s196 + $0x8] sm:$0xff]
      %v205 = vld [vmem:[%s196 + $0x10] sm:$0xff]
      %v206 = vld [vmem:[%s196 + $0x18] sm:$0xff]
      %v207 = vld [vmem:[%s1] sm:$0xff]
      %v208 = vld [vmem:[%s1 + $0x8] sm:$0xff]
      %v209 = vld [vmem:[%s1 + $0x10] sm:$0xff]
      %v210 = vld [vmem:[%s1 + $0x18] sm:$0xff]
      %v211 = vld [vmem:[%s1 + $0x20] sm:$0xff]
      %v212 = vld [vmem:[%s1 + $0x28] sm:$0xff]
      %v213 = vld [vmem:[%s1 + $0x30] sm:$0xff]
      %v214 = vld [vmem:[%s1 + $0x38] sm:$0xff]
      %v215 = vld [vmem:[%s1 + $0x40] sm:$0xff]
      %v216 = vld [vmem:[%s1 + $0x48] sm:$0xff]
      %v217 = vld [vmem:[%s1 + $0x50] sm:$0xff]
      %v218 = vld [vmem:[%s1 + $0x58] sm:$0xff]
      %v219 = vld [vmem:[%s1 + $0x60] sm:$0xff]
      %v220 = vld [vmem:[%s1 + $0x68] sm:$0xff]
      %v221 = vld [vmem:[%s1 + $0x70] sm:$0xff]
      %v222 = vld [vmem:[%s1 + $0x78] sm:$0xff]
      %v223 = vld [vmem:[%s1 + $0x80] sm:$0xff]
      %v224 = vld [vmem:[%s1 + $0x88] sm:$0xff]
      %v225 = vld [vmem:[%s1 + $0x90] sm:$0xff]
      %v226 = vld [vmem:[%s1 + $0x98] sm:$0xff]
      %v227 = vld [vmem:[%s1 + $0xa0] sm:$0xff]
      %v228 = vld [vmem:[%s1 + $0xa8] sm:$0xff]
      %v229 = vld [vmem:[%s1 + $0xb0] sm:$0xff]
      %v230 = vld [vmem:[%s1 + $0xb8] sm:$0xff]
      %v231 = vld [vmem:[%s1 + $0xc0] sm:$0xff]
      %v232 = vld [vmem:[%s1 + $0xc8] sm:$0xff]
      %v233 = vld [vmem:[%s1 + $0xd0] sm:$0xff]
      %v234 = vld [vmem:[%s1 + $0xd8] sm:$0xff]
      %v235 = vld [vmem:[%s1 + $0xe0] sm:$0xff]
      %v236 = vld [vmem:[%s1 + $0xe8] sm:$0xff]
      %v237 = vld [vmem:[%s1 + $0xf0] sm:$0xff]
      %v238 = vld [vmem:[%s1 + $0xf8] sm:$0xff]
      %v239 = vld [vmem:[%s1 + $0x100] sm:$0xff]
      %v240 = vld [vmem:[%s1 + $0x108] sm:$0xff]
      %v241 = vld [vmem:[%s1 + $0x110] sm:$0xff]
      %v242 = vld [vmem:[%s1 + $0x118] sm:$0xff]
      %v243 = vld [vmem:[%s1 + $0x120] sm:$0xff]
      %v244 = vld [vmem:[%s1 + $0x128] sm:$0xff]
      %v245 = vld [vmem:[%s1 + $0x130] sm:$0xff]
      %v246 = vld [vmem:[%s1 + $0x138] sm:$0xff]
      %v247 = vld [vmem:[%s1 + $0x140] sm:$0xff]
      %v248 = vld [vmem:[%s1 + $0x148] sm:$0xff]
      %v249 = vld [vmem:[%s1 + $0x150] sm:$0xff]
      %v250 = vld [vmem:[%s1 + $0x158] sm:$0xff]
      %v251 = vld [vmem:[%s1 + $0x160] sm:$0xff]
      %v252 = vld [vmem:[%s1 + $0x168] sm:$0xff]
      %v253 = vld [vmem:[%s1 + $0x170] sm:$0xff]
      %v254 = vld [vmem:[%s1 + $0x178] sm:$0xff]
      %v255 = vld [vmem:[%s1 + $0x180] sm:$0xff]
      %v256 = vld [vmem:[%s1 + $0x188] sm:$0xff]
      %v257 = vld [vmem:[%s1 + $0x190] sm:$0xff]
      %v258 = vld [vmem:[%s1 + $0x198] sm:$0xff]
      %v259 = vld [vmem:[%s1 + $0x1a0] sm:$0xff]
      %v260 = vld [vmem:[%s1 + $0x1a8] sm:$0xff]
      %v261 = vld [vmem:[%s1 + $0x1b0] sm:$0xff]
      %v262 = vld [vmem:[%s1 + $0x1b8] sm:$0xff]
      %v263 = vld [vmem:[%s1 + $0x1c0] sm:$0xff]
      %v264 = vld [vmem:[%s1 + $0x1c8] sm:$0xff]
      %v265 = vld [vmem:[%s1 + $0x1d0] sm:$0xff]
      %v266 = vld [vmem:[%s1 + $0x1d8] sm:$0xff]
      %v267 = vld [vmem:[%s1 + $0x1e0] sm:$0xff]
      %v268 = vld [vmem:[%s1 + $0x1e8] sm:$0xff]
      %v269 = vld [vmem:[%s1 + $0x1f0] sm:$0xff]
      %v270 = vld [vmem:[%s1 + $0x1f8] sm:$0xff]
      %v271 = vld [vmem:[%s1 + $0x200] sm:$0xff]
      %v272 = vld [vmem:[%s1 + $0x208] sm:$0xff]
      %v273 = vld [vmem:[%s1 + $0x210] sm:$0xff]
      %v274 = vld [vmem:[%s1 + $0x218] sm:$0xff]
      %v275 = vld [vmem:[%s1 + $0x220] sm:$0xff]
      %v276 = vld [vmem:[%s1 + $0x228] sm:$0xff]
      %v277 = vld [vmem:[%s1 + $0x230] sm:$0xff]
      %v278 = vld [vmem:[%s1 + $0x238] sm:$0xff]
      %v279 = vld [vmem:[%s1 + $0x240] sm:$0xff]
      %v280 = vld [vmem:[%s1 + $0x248] sm:$0xff]
      %v281 = vld [vmem:[%s1 + $0x250] sm:$0xff]
      %v282 = vld [vmem:[%s1 + $0x258] sm:$0xff]
      %v283 = vld [vmem:[%s1 + $0x260] sm:$0xff]
      %v284 = vld [vmem:[%s1 + $0x268] sm:$0xff]
      %v285 = vld [vmem:[%s1 + $0x270] sm:$0xff]
      %v286 = vld [vmem:[%s1 + $0x278] sm:$0xff]
      %v287 = vld [vmem:[%s1 + $0x280] sm:$0xff]
      %v288 = vld [vmem:[%s1 + $0x288] sm:$0xff]
      %v289 = vld [vmem:[%s1 + $0x290] sm:$0xff]
      %v290 = vld [vmem:[%s1 + $0x298] sm:$0xff]
      %v291 = vld [vmem:[%s1 + $0x2a0] sm:$0xff]
      %v292 = vld [vmem:[%s1 + $0x2a8] sm:$0xff]
      %v293 = vld [vmem:[%s1 + $0x2b0] sm:$0xff]
      %v294 = vld [vmem:[%s1 + $0x2b8] sm:$0xff]
      %v295 = vld [vmem:[%s1 + $0x2c0] sm:$0xff]
      %v296 = vld [vmem:[%s1 + $0x2c8] sm:$0xff]
      %v297 = vld [vmem:[%s1 + $0x2d0] sm:$0xff]
      %v298 = vld [vmem:[%s1 + $0x2d8] sm:$0xff]
      %v299 = vld [vmem:[%s1 + $0x2e0] sm:$0xff]
      %v300 = vld [vmem:[%s1 + $0x2e8] sm:$0xff]
      %v301 = vld [vmem:[%s1 + $0x2f0] sm:$0xff]
      %v302 = vld [vmem:[%s1 + $0x2f8] sm:$0xff]
      %v303 = vld [vmem:[%s1 + $0x300] sm:$0xff]
      %v304 = vld [vmem:[%s1 + $0x308] sm:$0xff]
      %v305 = vld [vmem:[%s1 + $0x310] sm:$0xff]
      %v306 = vld [vmem:[%s1 + $0x318] sm:$0xff]
      %v307 = vld [vmem:[%s1 + $0x320] sm:$0xff]
      %v308 = vld [vmem:[%s1 + $0x328] sm:$0xff]
      %v309 = vld [vmem:[%s1 + $0x330] sm:$0xff]
      %v310 = vld [vmem:[%s1 + $0x338] sm:$0xff]
      %v311 = vld [vmem:[%s1 + $0x340] sm:$0xff]
      %v312 = vld [vmem:[%s1 + $0x348] sm:$0xff]
      %v313 = vld [vmem:[%s1 + $0x350] sm:$0xff]
      %v314 = vld [vmem:[%s1 + $0x358] sm:$0xff]
      %v315 = vld [vmem:[%s1 + $0x360] sm:$0xff]
      %v316 = vld [vmem:[%s1 + $0x368] sm:$0xff]
      %v317 = vld [vmem:[%s1 + $0x370] sm:$0xff]
      %v318 = vld [vmem:[%s1 + $0x378] sm:$0xff]
      %v319 = vld [vmem:[%s1 + $0x380] sm:$0xff]
      %v320 = vld [vmem:[%s1 + $0x388] sm:$0xff]
      %v321 = vld [vmem:[%s1 + $0x390] sm:$0xff]
      %v322 = vld [vmem:[%s1 + $0x398] sm:$0xff]
      %v323 = vld [vmem:[%s1 + $0x3a0] sm:$0xff]
      %v324 = vld [vmem:[%s1 + $0x3a8] sm:$0xff]
      %v325 = vld [vmem:[%s1 + $0x3b0] sm:$0xff]
      %v326 = vld [vmem:[%s1 + $0x3b8] sm:$0xff]
      %v327 = vld [vmem:[%s1 + $0x3c0] sm:$0xff]
      %v328 = vld [vmem:[%s1 + $0x3c8] sm:$0xff]
      %v329 = vld [vmem:[%s1 + $0x3d0] sm:$0xff]
      %v330 = vld [vmem:[%s1 + $0x3d8] sm:$0xff]
      %v331 = vld [vmem:[%s1 + $0x3e0] sm:$0xff]
      %v332 = vld [vmem:[%s1 + $0x3e8] sm:$0xff]
      %v333 = vld [vmem:[%s1 + $0x3f0] sm:$0xff]
      %v334 = vld [vmem:[%s1 + $0x3f8] sm:$0xff]
      %v339 = vunpack.c.l.b16 %v203
      %v340 = vunpack.c.h.b16 %v203
      %v341 = vunpack.c.l.b16 %v204
      %v342 = vunpack.c.h.b16 %v204
      %v343 = vunpack.c.l.b16 %v205
      %v344 = vunpack.c.h.b16 %v205
      %v345 = vunpack.c.l.b16 %v206
      %v346 = vunpack.c.h.b16 %v206
      %v347 = vpack.c.b16 %v341, %v339
      %v348 = vpack.c.b16 %v342, %v340
      %v349 = vpack.c.b16 %v345, %v343
      %v350 = vpack.c.b16 %v346, %v344
      %v483 = vunpack.c.l.b16 %v207
      %v484 = vunpack.c.h.b16 %v207
      %v485 = vunpack.c.l.b16 %v208
      %v486 = vunpack.c.h.b16 %v208
      %v487 = vunpack.c.l.b16 %v209
      %v488 = vunpack.c.h.b16 %v209
      %v489 = vunpack.c.l.b16 %v210
      %v490 = vunpack.c.h.b16 %v210
      %v491 = vunpack.c.l.b16 %v211
      %v492 = vunpack.c.h.b16 %v211
      %v493 = vunpack.c.l.b16 %v212
      %v494 = vunpack.c.h.b16 %v212
      %v495 = vunpack.c.l.b16 %v213
      %v496 = vunpack.c.h.b16 %v213
      %v497 = vunpack.c.l.b16 %v214
      %v498 = vunpack.c.h.b16 %v214
      %v499 = vunpack.c.l.b16 %v215
      %v500 = vunpack.c.h.b16 %v215
      %v501 = vunpack.c.l.b16 %v216
      %v502 = vunpack.c.h.b16 %v216
      %v503 = vunpack.c.l.b16 %v217
      %v504 = vunpack.c.h.b16 %v217
      %v505 = vunpack.c.l.b16 %v218
      %v506 = vunpack.c.h.b16 %v218
      %v507 = vunpack.c.l.b16 %v219
      %v508 = vunpack.c.h.b16 %v219
      %v509 = vunpack.c.l.b16 %v220
      %v510 = vunpack.c.h.b16 %v220
      %v511 = vunpack.c.l.b16 %v221
      %v512 = vunpack.c.h.b16 %v221
      %v513 = vunpack.c.l.b16 %v222
      %v514 = vunpack.c.h.b16 %v222
      %v515 = vunpack.c.l.b16 %v223
      %v516 = vunpack.c.h.b16 %v223
      %v517 = vunpack.c.l.b16 %v224
      %v518 = vunpack.c.h.b16 %v224
      %v519 = vunpack.c.l.b16 %v225
      %v520 = vunpack.c.h.b16 %v225
      %v521 = vunpack.c.l.b16 %v226
      %v522 = vunpack.c.h.b16 %v226
      %v523 = vunpack.c.l.b16 %v227
      %v524 = vunpack.c.h.b16 %v227
      %v525 = vunpack.c.l.b16 %v228
      %v526 = vunpack.c.h.b16 %v228
      %v527 = vunpack.c.l.b16 %v229
      %v528 = vunpack.c.h.b16 %v229
      %v529 = vunpack.c.l.b16 %v230
      %v530 = vunpack.c.h.b16 %v230
      %v531 = vunpack.c.l.b16 %v231
      %v532 = vunpack.c.h.b16 %v231
      %v533 = vunpack.c.l.b16 %v232
      %v534 = vunpack.c.h.b16 %v232
      %v535 = vunpack.c.l.b16 %v233
      %v536 = vunpack.c.h.b16 %v233
      %v537 = vunpack.c.l.b16 %v234
      %v538 = vunpack.c.h.b16 %v234
      %v539 = vunpack.c.l.b16 %v235
      %v540 = vunpack.c.h.b16 %v235
      %v541 = vunpack.c.l.b16 %v236
      %v542 = vunpack.c.h.b16 %v236
      %v543 = vunpack.c.l.b16 %v237
      %v544 = vunpack.c.h.b16 %v237
      %v545 = vunpack.c.l.b16 %v238
      %v546 = vunpack.c.h.b16 %v238
      %v547 = vunpack.c.l.b16 %v239
      %v548 = vunpack.c.h.b16 %v239
      %v549 = vunpack.c.l.b16 %v240
      %v550 = vunpack.c.h.b16 %v240
      %v551 = vunpack.c.l.b16 %v241
      %v552 = vunpack.c.h.b16 %v241
      %v553 = vunpack.c.l.b16 %v242
      %v554 = vunpack.c.h.b16 %v242
      %v555 = vunpack.c.l.b16 %v243
      %v556 = vunpack.c.h.b16 %v243
      %v557 = vunpack.c.l.b16 %v244
      %v558 = vunpack.c.h.b16 %v244
      %v559 = vunpack.c.l.b16 %v245
      %v560 = vunpack.c.h.b16 %v245
      %v561 = vunpack.c.l.b16 %v246
      %v562 = vunpack.c.h.b16 %v246
      %v563 = vunpack.c.l.b16 %v247
      %v564 = vunpack.c.h.b16 %v247
      %v565 = vunpack.c.l.b16 %v248
      %v566 = vunpack.c.h.b16 %v248
      %v567 = vunpack.c.l.b16 %v249
      %v568 = vunpack.c.h.b16 %v249
      %v569 = vunpack.c.l.b16 %v250
      %v570 = vunpack.c.h.b16 %v250
      %v571 = vunpack.c.l.b16 %v251
      %v572 = vunpack.c.h.b16 %v251
      %v573 = vunpack.c.l.b16 %v252
      %v574 = vunpack.c.h.b16 %v252
      %v575 = vunpack.c.l.b16 %v253
      %v576 = vunpack.c.h.b16 %v253
      %v577 = vunpack.c.l.b16 %v254
      %v578 = vunpack.c.h.b16 %v254
      %v579 = vunpack.c.l.b16 %v255
      %v580 = vunpack.c.h.b16 %v255
      %v581 = vunpack.c.l.b16 %v256
      %v582 = vunpack.c.h.b16 %v256
      %v583 = vunpack.c.l.b16 %v257
      %v584 = vunpack.c.h.b16 %v257
      %v585 = vunpack.c.l.b16 %v258
      %v586 = vunpack.c.h.b16 %v258
      %v587 = vunpack.c.l.b16 %v259
      %v588 = vunpack.c.h.b16 %v259
      %v589 = vunpack.c.l.b16 %v260
      %v590 = vunpack.c.h.b16 %v260
      %v591 = vunpack.c.l.b16 %v261
      %v592 = vunpack.c.h.b16 %v261
      %v593 = vunpack.c.l.b16 %v262
      %v594 = vunpack.c.h.b16 %v262
      %v595 = vunpack.c.l.b16 %v263
      %v596 = vunpack.c.h.b16 %v263
      %v597 = vunpack.c.l.b16 %v264
      %v598 = vunpack.c.h.b16 %v264
      %v599 = vunpack.c.l.b16 %v265
      %v600 = vunpack.c.h.b16 %v265
      %v601 = vunpack.c.l.b16 %v266
      %v602 = vunpack.c.h.b16 %v266
      %v603 = vunpack.c.l.b16 %v267
      %v604 = vunpack.c.h.b16 %v267
      %v605 = vunpack.c.l.b16 %v268
      %v606 = vunpack.c.h.b16 %v268
      %v607 = vunpack.c.l.b16 %v269
      %v608 = vunpack.c.h.b16 %v269
      %v609 = vunpack.c.l.b16 %v270
      %v610 = vunpack.c.h.b16 %v270
      %v611 = vunpack.c.l.b16 %v271
      %v612 = vunpack.c.h.b16 %v271
      %v613 = vunpack.c.l.b16 %v272
      %v614 = vunpack.c.h.b16 %v272
      %v615 = vunpack.c.l.b16 %v273
      %v616 = vunpack.c.h.b16 %v273
      %v617 = vunpack.c.l.b16 %v274
      %v618 = vunpack.c.h.b16 %v274
      %v619 = vunpack.c.l.b16 %v275
      %v620 = vunpack.c.h.b16 %v275
      %v621 = vunpack.c.l.b16 %v276
      %v622 = vunpack.c.h.b16 %v276
      %v623 = vunpack.c.l.b16 %v277
      %v624 = vunpack.c.h.b16 %v277
      %v625 = vunpack.c.l.b16 %v278
      %v626 = vunpack.c.h.b16 %v278
      %v627 = vunpack.c.l.b16 %v279
      %v628 = vunpack.c.h.b16 %v279
      %v629 = vunpack.c.l.b16 %v280
      %v630 = vunpack.c.h.b16 %v280
      %v631 = vunpack.c.l.b16 %v281
      %v632 = vunpack.c.h.b16 %v281
      %v633 = vunpack.c.l.b16 %v282
      %v634 = vunpack.c.h.b16 %v282
      %v635 = vunpack.c.l.b16 %v283
      %v636 = vunpack.c.h.b16 %v283
      %v637 = vunpack.c.l.b16 %v284
      %v638 = vunpack.c.h.b16 %v284
      %v639 = vunpack.c.l.b16 %v285
      %v640 = vunpack.c.h.b16 %v285
      %v641 = vunpack.c.l.b16 %v286
      %v642 = vunpack.c.h.b16 %v286
      %v643 = vunpack.c.l.b16 %v287
      %v644 = vunpack.c.h.b16 %v287
      %v645 = vunpack.c.l.b16 %v288
      %v646 = vunpack.c.h.b16 %v288
      %v647 = vunpack.c.l.b16 %v289
      %v648 = vunpack.c.h.b16 %v289
      %v649 = vunpack.c.l.b16 %v290
      %v650 = vunpack.c.h.b16 %v290
      %v651 = vunpack.c.l.b16 %v291
      %v652 = vunpack.c.h.b16 %v291
      %v653 = vunpack.c.l.b16 %v292
      %v654 = vunpack.c.h.b16 %v292
      %v655 = vunpack.c.l.b16 %v293
      %v656 = vunpack.c.h.b16 %v293
      %v657 = vunpack.c.l.b16 %v294
      %v658 = vunpack.c.h.b16 %v294
      %v659 = vunpack.c.l.b16 %v295
      %v660 = vunpack.c.h.b16 %v295
      %v661 = vunpack.c.l.b16 %v296
      %v662 = vunpack.c.h.b16 %v296
      %v663 = vunpack.c.l.b16 %v297
      %v664 = vunpack.c.h.b16 %v297
      %v665 = vunpack.c.l.b16 %v298
      %v666 = vunpack.c.h.b16 %v298
      %v667 = vunpack.c.l.b16 %v299
      %v668 = vunpack.c.h.b16 %v299
      %v669 = vunpack.c.l.b16 %v300
      %v670 = vunpack.c.h.b16 %v300
      %v671 = vunpack.c.l.b16 %v301
      %v672 = vunpack.c.h.b16 %v301
      %v673 = vunpack.c.l.b16 %v302
      %v674 = vunpack.c.h.b16 %v302
      %v675 = vunpack.c.l.b16 %v303
      %v676 = vunpack.c.h.b16 %v303
      %v677 = vunpack.c.l.b16 %v304
      %v678 = vunpack.c.h.b16 %v304
      %v679 = vunpack.c.l.b16 %v305
      %v680 = vunpack.c.h.b16 %v305
      %v681 = vunpack.c.l.b16 %v306
      %v682 = vunpack.c.h.b16 %v306
      %v683 = vunpack.c.l.b16 %v307
      %v684 = vunpack.c.h.b16 %v307
      %v685 = vunpack.c.l.b16 %v308
      %v686 = vunpack.c.h.b16 %v308
      %v687 = vunpack.c.l.b16 %v309
      %v688 = vunpack.c.h.b16 %v309
      %v689 = vunpack.c.l.b16 %v310
      %v690 = vunpack.c.h.b16 %v310
      %v691 = vunpack.c.l.b16 %v311
      %v692 = vunpack.c.h.b16 %v311
      %v693 = vunpack.c.l.b16 %v312
      %v694 = vunpack.c.h.b16 %v312
      %v695 = vunpack.c.l.b16 %v313
      %v696 = vunpack.c.h.b16 %v313
      %v697 = vunpack.c.l.b16 %v314
      %v698 = vunpack.c.h.b16 %v314
      %v699 = vunpack.c.l.b16 %v315
      %v700 = vunpack.c.h.b16 %v315
      %v701 = vunpack.c.l.b16 %v316
      %v702 = vunpack.c.h.b16 %v316
      %v703 = vunpack.c.l.b16 %v317
      %v704 = vunpack.c.h.b16 %v317
      %v705 = vunpack.c.l.b16 %v318
      %v706 = vunpack.c.h.b16 %v318
      %v707 = vunpack.c.l.b16 %v319
      %v708 = vunpack.c.h.b16 %v319
      %v709 = vunpack.c.l.b16 %v320
      %v710 = vunpack.c.h.b16 %v320
      %v711 = vunpack.c.l.b16 %v321
      %v712 = vunpack.c.h.b16 %v321
      %v713 = vunpack.c.l.b16 %v322
      %v714 = vunpack.c.h.b16 %v322
      %v715 = vunpack.c.l.b16 %v323
      %v716 = vunpack.c.h.b16 %v323
      %v717 = vunpack.c.l.b16 %v324
      %v718 = vunpack.c.h.b16 %v324
      %v719 = vunpack.c.l.b16 %v325
      %v720 = vunpack.c.h.b16 %v325
      %v721 = vunpack.c.l.b16 %v326
      %v722 = vunpack.c.h.b16 %v326
      %v723 = vunpack.c.l.b16 %v327
      %v724 = vunpack.c.h.b16 %v327
      %v725 = vunpack.c.l.b16 %v328
      %v726 = vunpack.c.h.b16 %v328
      %v727 = vunpack.c.l.b16 %v329
      %v728 = vunpack.c.h.b16 %v329
      %v729 = vunpack.c.l.b16 %v330
      %v730 = vunpack.c.h.b16 %v330
      %v731 = vunpack.c.l.b16 %v331
      %v732 = vunpack.c.h.b16 %v331
      %v733 = vunpack.c.l.b16 %v332
      %v734 = vunpack.c.h.b16 %v332
      %v735 = vunpack.c.l.b16 %v333
      %v736 = vunpack.c.h.b16 %v333
      %v737 = vunpack.c.l.b16 %v334
      %v738 = vunpack.c.h.b16 %v334
      %v739 = vpack.c.b16 %v491, %v483
      %v740 = vpack.c.b16 %v492, %v484
      %v741 = vpack.c.b16 %v493, %v485
      %v742 = vpack.c.b16 %v494, %v486
      %v743 = vpack.c.b16 %v495, %v487
      %v744 = vpack.c.b16 %v496, %v488
      %v745 = vpack.c.b16 %v497, %v489
      %v746 = vpack.c.b16 %v498, %v490
      %v747 = vpack.c.b16 %v507, %v499
      %v748 = vpack.c.b16 %v508, %v500
      %v749 = vpack.c.b16 %v509, %v501
      %v750 = vpack.c.b16 %v510, %v502
      %v751 = vpack.c.b16 %v511, %v503
      %v752 = vpack.c.b16 %v512, %v504
      %v753 = vpack.c.b16 %v513, %v505
      %v754 = vpack.c.b16 %v514, %v506
      %v755 = vpack.c.b16 %v523, %v515
      %v756 = vpack.c.b16 %v524, %v516
      %v757 = vpack.c.b16 %v525, %v517
      %v758 = vpack.c.b16 %v526, %v518
      %v759 = vpack.c.b16 %v527, %v519
      %v760 = vpack.c.b16 %v528, %v520
      %v761 = vpack.c.b16 %v529, %v521
      %v762 = vpack.c.b16 %v530, %v522
      %v763 = vpack.c.b16 %v539, %v531
      %v764 = vpack.c.b16 %v540, %v532
      %v765 = vpack.c.b16 %v541, %v533
      %v766 = vpack.c.b16 %v542, %v534
      %v767 = vpack.c.b16 %v543, %v535
      %v768 = vpack.c.b16 %v544, %v536
      %v769 = vpack.c.b16 %v545, %v537
      %v770 = vpack.c.b16 %v546, %v538
      %v771 = vpack.c.b16 %v555, %v547
      %v772 = vpack.c.b16 %v556, %v548
      %v773 = vpack.c.b16 %v557, %v549
      %v774 = vpack.c.b16 %v558, %v550
      %v775 = vpack.c.b16 %v559, %v551
      %v776 = vpack.c.b16 %v560, %v552
      %v777 = vpack.c.b16 %v561, %v553
      %v778 = vpack.c.b16 %v562, %v554
      %v779 = vpack.c.b16 %v571, %v563
      %v780 = vpack.c.b16 %v572, %v564
      %v781 = vpack.c.b16 %v573, %v565
      %v782 = vpack.c.b16 %v574, %v566
      %v783 = vpack.c.b16 %v575, %v567
      %v784 = vpack.c.b16 %v576, %v568
      %v785 = vpack.c.b16 %v577, %v569
      %v786 = vpack.c.b16 %v578, %v570
      %v787 = vpack.c.b16 %v587, %v579
      %v788 = vpack.c.b16 %v588, %v580
      %v789 = vpack.c.b16 %v589, %v581
      %v790 = vpack.c.b16 %v590, %v582
      %v791 = vpack.c.b16 %v591, %v583
      %v792 = vpack.c.b16 %v592, %v584
      %v793 = vpack.c.b16 %v593, %v585
      %v794 = vpack.c.b16 %v594, %v586
      %v795 = vpack.c.b16 %v603, %v595
      %v796 = vpack.c.b16 %v604, %v596
      %v797 = vpack.c.b16 %v605, %v597
      %v798 = vpack.c.b16 %v606, %v598
      %v799 = vpack.c.b16 %v607, %v599
      %v800 = vpack.c.b16 %v608, %v600
      %v801 = vpack.c.b16 %v609, %v601
      %v802 = vpack.c.b16 %v610, %v602
      %v803 = vpack.c.b16 %v619, %v611
      %v804 = vpack.c.b16 %v620, %v612
      %v805 = vpack.c.b16 %v621, %v613
      %v806 = vpack.c.b16 %v622, %v614
      %v807 = vpack.c.b16 %v623, %v615
      %v808 = vpack.c.b16 %v624, %v616
      %v809 = vpack.c.b16 %v625, %v617
      %v810 = vpack.c.b16 %v626, %v618
      %v811 = vpack.c.b16 %v635, %v627
      %v812 = vpack.c.b16 %v636, %v628
      %v813 = vpack.c.b16 %v637, %v629
      %v814 = vpack.c.b16 %v638, %v630
      %v815 = vpack.c.b16 %v639, %v631
      %v816 = vpack.c.b16 %v640, %v632
      %v817 = vpack.c.b16 %v641, %v633
      %v818 = vpack.c.b16 %v642, %v634
      %v819 = vpack.c.b16 %v651, %v643
      %v820 = vpack.c.b16 %v652, %v644
      %v821 = vpack.c.b16 %v653, %v645
      %v822 = vpack.c.b16 %v654, %v646
      %v823 = vpack.c.b16 %v655, %v647
      %v824 = vpack.c.b16 %v656, %v648
      %v825 = vpack.c.b16 %v657, %v649
      %v826 = vpack.c.b16 %v658, %v650
      %v827 = vpack.c.b16 %v667, %v659
      %v828 = vpack.c.b16 %v668, %v660
      %v829 = vpack.c.b16 %v669, %v661
      %v830 = vpack.c.b16 %v670, %v662
      %v831 = vpack.c.b16 %v671, %v663
      %v832 = vpack.c.b16 %v672, %v664
      %v833 = vpack.c.b16 %v673, %v665
      %v834 = vpack.c.b16 %v674, %v666
      %v835 = vpack.c.b16 %v683, %v675
      %v836 = vpack.c.b16 %v684, %v676
      %v837 = vpack.c.b16 %v685, %v677
      %v838 = vpack.c.b16 %v686, %v678
      %v839 = vpack.c.b16 %v687, %v679
      %v840 = vpack.c.b16 %v688, %v680
      %v841 = vpack.c.b16 %v689, %v681
      %v842 = vpack.c.b16 %v690, %v682
      %v843 = vpack.c.b16 %v699, %v691
      %v844 = vpack.c.b16 %v700, %v692
      %v845 = vpack.c.b16 %v701, %v693
      %v846 = vpack.c.b16 %v702, %v694
      %v847 = vpack.c.b16 %v703, %v695
      %v848 = vpack.c.b16 %v704, %v696
      %v849 = vpack.c.b16 %v705, %v697
      %v850 = vpack.c.b16 %v706, %v698
      %v851 = vpack.c.b16 %v715, %v707
      %v852 = vpack.c.b16 %v716, %v708
      %v853 = vpack.c.b16 %v717, %v709
      %v854 = vpack.c.b16 %v718, %v710
      %v855 = vpack.c.b16 %v719, %v711
      %v856 = vpack.c.b16 %v720, %v712
      %v857 = vpack.c.b16 %v721, %v713
      %v858 = vpack.c.b16 %v722, %v714
      %v859 = vpack.c.b16 %v731, %v723
      %v860 = vpack.c.b16 %v732, %v724
      %v861 = vpack.c.b16 %v733, %v725
      %v862 = vpack.c.b16 %v734, %v726
      %v863 = vpack.c.b16 %v735, %v727
      %v864 = vpack.c.b16 %v736, %v728
      %v865 = vpack.c.b16 %v737, %v729
      %v866 = vpack.c.b16 %v738, %v730
      %995 = vmatpush.bf16.msra.mxu0 %v795
      %996 = vmatpush.bf16.msra.mxu0 %v787
      %997 = vmatpush.bf16.msra.mxu0 %v779
      %998 = vmatpush.bf16.msra.mxu0 %v771
      %999 = vmatpush.bf16.msra.mxu0 %v763
      %1000 = vmatpush.bf16.msra.mxu0 %v755
      %1001 = vmatpush.bf16.msra.mxu0 %v747
      %1002 = vmatpush.bf16.msra.mxu0 %v739
      %1003 = vmatmul.bf16.gmra.mxu0 %v347
      %v1004 = vpop.f32.mrf.mxu0
      %v1005 = vadd.f32 0.0, %v1004
      %v1006 = vpop.f32.mrf.mxu0
      %v1007 = vadd.f32 0.0, %v1006
      %1008 = vmatmul.bf16.gmra.mxu0 %v349
      %v1009 = vpop.f32.mrf.mxu0
      %v1010 = vadd.f32 0.0, %v1009
      %v1011 = vpop.f32.mrf.mxu0
      %v1012 = vadd.f32 0.0, %v1011
      %1013 = vdwg.mxu0
      %1014 = vmatpush.bf16.msra.mxu0 %v859
      %1015 = vmatpush.bf16.msra.mxu0 %v851
      %1016 = vmatpush.bf16.msra.mxu0 %v843
      %1017 = vmatpush.bf16.msra.mxu0 %v835
      %1018 = vmatpush.bf16.msra.mxu0 %v827
      %1019 = vmatpush.bf16.msra.mxu0 %v819
      %1020 = vmatpush.bf16.msra.mxu0 %v811
      %1021 = vmatpush.bf16.msra.mxu0 %v803
      %1022 = vmatmul.bf16.gmra.mxu0 %v348
      %v1023 = vpop.f32.mrf.mxu0
      %v1024 = vadd.f32 %v1005, %v1023
      %v1025 = vpop.f32.mrf.mxu0
      %v1026 = vadd.f32 %v1007, %v1025
      %1027 = vmatmul.bf16.gmra.mxu0 %v350
      %v1028 = vpop.f32.mrf.mxu0
      %v1029 = vadd.f32 %v1010, %v1028
      %v1030 = vpop.f32.mrf.mxu0
      %v1031 = vadd.f32 %v1012, %v1030
      %1032 = vdwg.mxu0
      %1033 = vmatpush.bf16.msra.mxu0 %v796
      %1034 = vmatpush.bf16.msra.mxu0 %v788
      %1035 = vmatpush.bf16.msra.mxu0 %v780
      %1036 = vmatpush.bf16.msra.mxu0 %v772
      %1037 = vmatpush.bf16.msra.mxu0 %v764
      %1038 = vmatpush.bf16.msra.mxu0 %v756
      %1039 = vmatpush.bf16.msra.mxu0 %v748
      %1040 = vmatpush.bf16.msra.mxu0 %v740
      %1041 = vmatmul.bf16.gmra.mxu0 %v347
      %v1042 = vpop.f32.mrf.mxu0
      %v1043 = vadd.f32 0.0, %v1042
      %v1044 = vpop.f32.mrf.mxu0
      %v1045 = vadd.f32 0.0, %v1044
      %1046 = vmatmul.bf16.gmra.mxu0 %v349
      %v1047 = vpop.f32.mrf.mxu0
      %v1048 = vadd.f32 0.0, %v1047
      %v1049 = vpop.f32.mrf.mxu0
      %v1050 = vadd.f32 0.0, %v1049
      %1051 = vdwg.mxu0
      %1052 = vmatpush.bf16.msra.mxu0 %v860
      %1053 = vmatpush.bf16.msra.mxu0 %v852
      %1054 = vmatpush.bf16.msra.mxu0 %v844
      %1055 = vmatpush.bf16.msra.mxu0 %v836
      %1056 = vmatpush.bf16.msra.mxu0 %v828
      %1057 = vmatpush.bf16.msra.mxu0 %v820
      %1058 = vmatpush.bf16.msra.mxu0 %v812
      %1059 = vmatpush.bf16.msra.mxu0 %v804
      %1060 = vmatmul.bf16.gmra.mxu0 %v348
      %v1061 = vpop.f32.mrf.mxu0
      %v1062 = vadd.f32 %v1043, %v1061
      %v1063 = vpop.f32.mrf.mxu0
      %v1064 = vadd.f32 %v1045, %v1063
      %1065 = vmatmul.bf16.gmra.mxu0 %v350
      %v1066 = vpop.f32.mrf.mxu0
      %v1067 = vadd.f32 %v1048, %v1066
      %v1068 = vpop.f32.mrf.mxu0
      %v1069 = vadd.f32 %v1050, %v1068
      %1070 = vdwg.mxu0
      %1071 = vmatpush.bf16.msra.mxu0 %v797
      %1072 = vmatpush.bf16.msra.mxu0 %v789
      %1073 = vmatpush.bf16.msra.mxu0 %v781
      %1074 = vmatpush.bf16.msra.mxu0 %v773
      %1075 = vmatpush.bf16.msra.mxu0 %v765
      %1076 = vmatpush.bf16.msra.mxu0 %v757
      %1077 = vmatpush.bf16.msra.mxu0 %v749
      %1078 = vmatpush.bf16.msra.mxu0 %v741
      %1079 = vmatmul.bf16.gmra.mxu0 %v347
      %v1080 = vpop.f32.mrf.mxu0
      %v1081 = vadd.f32 0.0, %v1080
      %v1082 = vpop.f32.mrf.mxu0
      %v1083 = vadd.f32 0.0, %v1082
      %1084 = vmatmul.bf16.gmra.mxu0 %v349
      %v1085 = vpop.f32.mrf.mxu0
      %v1086 = vadd.f32 0.0, %v1085
      %v1087 = vpop.f32.mrf.mxu0
      %v1088 = vadd.f32 0.0, %v1087
      %1089 = vdwg.mxu0
      %1090 = vmatpush.bf16.msra.mxu0 %v861
      %1091 = vmatpush.bf16.msra.mxu0 %v853
      %1092 = vmatpush.bf16.msra.mxu0 %v845
      %1093 = vmatpush.bf16.msra.mxu0 %v837
      %1094 = vmatpush.bf16.msra.mxu0 %v829
      %1095 = vmatpush.bf16.msra.mxu0 %v821
      %1096 = vmatpush.bf16.msra.mxu0 %v813
      %1097 = vmatpush.bf16.msra.mxu0 %v805
      %1098 = vmatmul.bf16.gmra.mxu0 %v348
      %v1099 = vpop.f32.mrf.mxu0
      %v1100 = vadd.f32 %v1081, %v1099
      %v1101 = vpop.f32.mrf.mxu0
      %v1102 = vadd.f32 %v1083, %v1101
      %1103 = vmatmul.bf16.gmra.mxu0 %v350
      %v1104 = vpop.f32.mrf.mxu0
      %v1105 = vadd.f32 %v1086, %v1104
      %v1106 = vpop.f32.mrf.mxu0
      %v1107 = vadd.f32 %v1088, %v1106
      %1108 = vdwg.mxu0
      %1109 = vmatpush.bf16.msra.mxu0 %v798
      %1110 = vmatpush.bf16.msra.mxu0 %v790
      %1111 = vmatpush.bf16.msra.mxu0 %v782
      %1112 = vmatpush.bf16.msra.mxu0 %v774
      %1113 = vmatpush.bf16.msra.mxu0 %v766
      %1114 = vmatpush.bf16.msra.mxu0 %v758
      %1115 = vmatpush.bf16.msra.mxu0 %v750
      %1116 = vmatpush.bf16.msra.mxu0 %v742
      %1117 = vmatmul.bf16.gmra.mxu0 %v347
      %v1118 = vpop.f32.mrf.mxu0
      %v1119 = vadd.f32 0.0, %v1118
      %v1120 = vpop.f32.mrf.mxu0
      %v1121 = vadd.f32 0.0, %v1120
      %1122 = vmatmul.bf16.gmra.mxu0 %v349
      %v1123 = vpop.f32.mrf.mxu0
      %v1124 = vadd.f32 0.0, %v1123
      %v1125 = vpop.f32.mrf.mxu0
      %v1126 = vadd.f32 0.0, %v1125
      %1127 = vdwg.mxu0
      %1128 = vmatpush.bf16.msra.mxu0 %v862
      %1129 = vmatpush.bf16.msra.mxu0 %v854
      %1130 = vmatpush.bf16.msra.mxu0 %v846
      %1131 = vmatpush.bf16.msra.mxu0 %v838
      %1132 = vmatpush.bf16.msra.mxu0 %v830
      %1133 = vmatpush.bf16.msra.mxu0 %v822
      %1134 = vmatpush.bf16.msra.mxu0 %v814
      %1135 = vmatpush.bf16.msra.mxu0 %v806
      %1136 = vmatmul.bf16.gmra.mxu0 %v348
      %v1137 = vpop.f32.mrf.mxu0
      %v1138 = vadd.f32 %v1119, %v1137
      %v1139 = vpop.f32.mrf.mxu0
      %v1140 = vadd.f32 %v1121, %v1139
      %1141 = vmatmul.bf16.gmra.mxu0 %v350
      %v1142 = vpop.f32.mrf.mxu0
      %v1143 = vadd.f32 %v1124, %v1142
      %v1144 = vpop.f32.mrf.mxu0
      %v1145 = vadd.f32 %v1126, %v1144
      %1146 = vdwg.mxu0
      %1147 = vmatpush.bf16.msra.mxu0 %v799
      %1148 = vmatpush.bf16.msra.mxu0 %v791
      %1149 = vmatpush.bf16.msra.mxu0 %v783
      %1150 = vmatpush.bf16.msra.mxu0 %v775
      %1151 = vmatpush.bf16.msra.mxu0 %v767
      %1152 = vmatpush.bf16.msra.mxu0 %v759
      %1153 = vmatpush.bf16.msra.mxu0 %v751
      %1154 = vmatpush.bf16.msra.mxu0 %v743
      %1155 = vmatmul.bf16.gmra.mxu0 %v347
      %v1156 = vpop.f32.mrf.mxu0
      %v1157 = vadd.f32 0.0, %v1156
      %v1158 = vpop.f32.mrf.mxu0
      %v1159 = vadd.f32 0.0, %v1158
      %1160 = vmatmul.bf16.gmra.mxu0 %v349
      %v1161 = vpop.f32.mrf.mxu0
      %v1162 = vadd.f32 0.0, %v1161
      %v1163 = vpop.f32.mrf.mxu0
      %v1164 = vadd.f32 0.0, %v1163
      %1165 = vdwg.mxu0
      %1166 = vmatpush.bf16.msra.mxu0 %v863
      %1167 = vmatpush.bf16.msra.mxu0 %v855
      %1168 = vmatpush.bf16.msra.mxu0 %v847
      %1169 = vmatpush.bf16.msra.mxu0 %v839
      %1170 = vmatpush.bf16.msra.mxu0 %v831
      %1171 = vmatpush.bf16.msra.mxu0 %v823
      %1172 = vmatpush.bf16.msra.mxu0 %v815
      %1173 = vmatpush.bf16.msra.mxu0 %v807
      %1174 = vmatmul.bf16.gmra.mxu0 %v348
      %v1175 = vpop.f32.mrf.mxu0
      %v1176 = vadd.f32 %v1157, %v1175
      %v1177 = vpop.f32.mrf.mxu0
      %v1178 = vadd.f32 %v1159, %v1177
      %1179 = vmatmul.bf16.gmra.mxu0 %v350
      %v1180 = vpop.f32.mrf.mxu0
      %v1181 = vadd.f32 %v1162, %v1180
      %v1182 = vpop.f32.mrf.mxu0
      %v1183 = vadd.f32 %v1164, %v1182
      %1184 = vdwg.mxu0
      %1185 = vmatpush.bf16.msra.mxu0 %v800
      %1186 = vmatpush.bf16.msra.mxu0 %v792
      %1187 = vmatpush.bf16.msra.mxu0 %v784
      %1188 = vmatpush.bf16.msra.mxu0 %v776
      %1189 = vmatpush.bf16.msra.mxu0 %v768
      %1190 = vmatpush.bf16.msra.mxu0 %v760
      %1191 = vmatpush.bf16.msra.mxu0 %v752
      %1192 = vmatpush.bf16.msra.mxu0 %v744
      %1193 = vmatmul.bf16.gmra.mxu0 %v347
      %v1194 = vpop.f32.mrf.mxu0
      %v1195 = vadd.f32 0.0, %v1194
      %v1196 = vpop.f32.mrf.mxu0
      %v1197 = vadd.f32 0.0, %v1196
      %1198 = vmatmul.bf16.gmra.mxu0 %v349
      %v1199 = vpop.f32.mrf.mxu0
      %v1200 = vadd.f32 0.0, %v1199
      %v1201 = vpop.f32.mrf.mxu0
      %v1202 = vadd.f32 0.0, %v1201
      %1203 = vdwg.mxu0
      %1204 = vmatpush.bf16.msra.mxu0 %v864
      %1205 = vmatpush.bf16.msra.mxu0 %v856
      %1206 = vmatpush.bf16.msra.mxu0 %v848
      %1207 = vmatpush.bf16.msra.mxu0 %v840
      %1208 = vmatpush.bf16.msra.mxu0 %v832
      %1209 = vmatpush.bf16.msra.mxu0 %v824
      %1210 = vmatpush.bf16.msra.mxu0 %v816
      %1211 = vmatpush.bf16.msra.mxu0 %v808
      %1212 = vmatmul.bf16.gmra.mxu0 %v348
      %v1213 = vpop.f32.mrf.mxu0
      %v1214 = vadd.f32 %v1195, %v1213
      %v1215 = vpop.f32.mrf.mxu0
      %v1216 = vadd.f32 %v1197, %v1215
      %1217 = vmatmul.bf16.gmra.mxu0 %v350
      %v1218 = vpop.f32.mrf.mxu0
      %v1219 = vadd.f32 %v1200, %v1218
      %v1220 = vpop.f32.mrf.mxu0
      %v1221 = vadd.f32 %v1202, %v1220
      %1222 = vdwg.mxu0
      %1223 = vmatpush.bf16.msra.mxu0 %v801
      %1224 = vmatpush.bf16.msra.mxu0 %v793
      %1225 = vmatpush.bf16.msra.mxu0 %v785
      %1226 = vmatpush.bf16.msra.mxu0 %v777
      %1227 = vmatpush.bf16.msra.mxu0 %v769
      %1228 = vmatpush.bf16.msra.mxu0 %v761
      %1229 = vmatpush.bf16.msra.mxu0 %v753
      %1230 = vmatpush.bf16.msra.mxu0 %v745
      %1231 = vmatmul.bf16.gmra.mxu0 %v347
      %v1232 = vpop.f32.mrf.mxu0
      %v1233 = vadd.f32 0.0, %v1232
      %v1234 = vpop.f32.mrf.mxu0
      %v1235 = vadd.f32 0.0, %v1234
      %1236 = vmatmul.bf16.gmra.mxu0 %v349
      %v1237 = vpop.f32.mrf.mxu0
      %v1238 = vadd.f32 0.0, %v1237
      %v1239 = vpop.f32.mrf.mxu0
      %v1240 = vadd.f32 0.0, %v1239
      %1241 = vdwg.mxu0
      %1242 = vmatpush.bf16.msra.mxu0 %v865
      %1243 = vmatpush.bf16.msra.mxu0 %v857
      %1244 = vmatpush.bf16.msra.mxu0 %v849
      %1245 = vmatpush.bf16.msra.mxu0 %v841
      %1246 = vmatpush.bf16.msra.mxu0 %v833
      %1247 = vmatpush.bf16.msra.mxu0 %v825
      %1248 = vmatpush.bf16.msra.mxu0 %v817
      %1249 = vmatpush.bf16.msra.mxu0 %v809
      %1250 = vmatmul.bf16.gmra.mxu0 %v348
      %v1251 = vpop.f32.mrf.mxu0
      %v1252 = vadd.f32 %v1233, %v1251
      %v1253 = vpop.f32.mrf.mxu0
      %v1254 = vadd.f32 %v1235, %v1253
      %1255 = vmatmul.bf16.gmra.mxu0 %v350
      %v1256 = vpop.f32.mrf.mxu0
      %v1257 = vadd.f32 %v1238, %v1256
      %v1258 = vpop.f32.mrf.mxu0
      %v1259 = vadd.f32 %v1240, %v1258
      %1260 = vdwg.mxu0
      %1261 = vmatpush.bf16.msra.mxu0 %v802
      %1262 = vmatpush.bf16.msra.mxu0 %v794
      %1263 = vmatpush.bf16.msra.mxu0 %v786
      %1264 = vmatpush.bf16.msra.mxu0 %v778
      %1265 = vmatpush.bf16.msra.mxu0 %v770
      %1266 = vmatpush.bf16.msra.mxu0 %v762
      %1267 = vmatpush.bf16.msra.mxu0 %v754
      %1268 = vmatpush.bf16.msra.mxu0 %v746
      %1269 = vmatmul.bf16.gmra.mxu0 %v347
      %v1270 = vpop.f32.mrf.mxu0
      %v1271 = vadd.f32 0.0, %v1270
      %v1272 = vpop.f32.mrf.mxu0
      %v1273 = vadd.f32 0.0, %v1272
      %1274 = vmatmul.bf16.gmra.mxu0 %v349
      %v1275 = vpop.f32.mrf.mxu0
      %v1276 = vadd.f32 0.0, %v1275
      %v1277 = vpop.f32.mrf.mxu0
      %v1278 = vadd.f32 0.0, %v1277
      %1279 = vdwg.mxu0
      %1280 = vmatpush.bf16.msra.mxu0 %v866
      %1281 = vmatpush.bf16.msra.mxu0 %v858
      %1282 = vmatpush.bf16.msra.mxu0 %v850
      %1283 = vmatpush.bf16.msra.mxu0 %v842
      %1284 = vmatpush.bf16.msra.mxu0 %v834
      %1285 = vmatpush.bf16.msra.mxu0 %v826
      %1286 = vmatpush.bf16.msra.mxu0 %v818
      %1287 = vmatpush.bf16.msra.mxu0 %v810
      %1288 = vmatmul.bf16.gmra.mxu0 %v348
      %v1289 = vpop.f32.mrf.mxu0
      %v1290 = vadd.f32 %v1271, %v1289
      %v1291 = vpop.f32.mrf.mxu0
      %v1292 = vadd.f32 %v1273, %v1291
      %1293 = vmatmul.bf16.gmra.mxu0 %v350
      %v1294 = vpop.f32.mrf.mxu0
      %v1295 = vadd.f32 %v1276, %v1294
      %v1296 = vpop.f32.mrf.mxu0
      %v1297 = vadd.f32 %v1278, %v1296
      %1298 = vdwg.mxu0
      %v1299 = vadd.f32 %v1024, %v1062
      %v1300 = vadd.f32 %v1299, %v1100
      %v1301 = vadd.f32 %v1300, %v1138
      %v1302 = vadd.f32 %v1301, %v1176
      %v1303 = vadd.f32 %v1302, %v1214
      %v1304 = vadd.f32 %v1303, %v1252
      %v1305 = vadd.f32 %v1304, %v1290
      %1306 = vadd.xlane.f32.xlu0 %v1305
      %v1307 = vpop.xlane.xlu0 %1306
      %v1308 = vadd.f32 %v1026, %v1064
      %v1309 = vadd.f32 %v1308, %v1102
      %v1310 = vadd.f32 %v1309, %v1140
      %v1311 = vadd.f32 %v1310, %v1178
      %v1312 = vadd.f32 %v1311, %v1216
      %v1313 = vadd.f32 %v1312, %v1254
      %v1314 = vadd.f32 %v1313, %v1292
      %1315 = vadd.xlane.f32.xlu0 %v1314
      %v1316 = vpop.xlane.xlu0 %1315
      %v1317 = vadd.f32 %v1029, %v1067
      %v1318 = vadd.f32 %v1317, %v1105
      %v1319 = vadd.f32 %v1318, %v1143
      %v1320 = vadd.f32 %v1319, %v1181
      %v1321 = vadd.f32 %v1320, %v1219
      %v1322 = vadd.f32 %v1321, %v1257
      %v1323 = vadd.f32 %v1322, %v1295
      %1324 = vadd.xlane.f32.xlu0 %v1323
      %v1325 = vpop.xlane.xlu0 %1324
      %v1326 = vadd.f32 %v1031, %v1069
      %v1327 = vadd.f32 %v1326, %v1107
      %v1328 = vadd.f32 %v1327, %v1145
      %v1329 = vadd.f32 %v1328, %v1183
      %v1330 = vadd.f32 %v1329, %v1221
      %v1331 = vadd.f32 %v1330, %v1259
      %v1332 = vadd.f32 %v1331, %v1297
      %1333 = vadd.xlane.f32.xlu0 %v1332
      %v1334 = vpop.xlane.xlu0 %1333
      %v1335 = vrcp.pop 1024.0
      %v1336 = vmul.f32 1024.0, %v1335
      %v1337 = vsub.f32 1.0, %v1336
      %v1338 = vmul.f32 %v1335, %v1337
      %v1339 = vadd.f32 %v1335, %v1338
      %vm1340 = vweird.f32 %v1335
      %v1341 = vsel %vm1340, %v1335, %v1339
      %v1342 = vmul.f32 %v1307, %v1341
      %v1343 = vmul.f32 %v1316, %v1341
      %v1344 = vmul.f32 %v1325, %v1341
      %v1345 = vmul.f32 %v1334, %v1341
      %v1346 = vmul.f32 %v1024, %v1024
      %v1347 = vmul.f32 %v1062, %v1062
      %v1348 = vmul.f32 %v1100, %v1100
      %v1349 = vmul.f32 %v1138, %v1138
      %v1350 = vmul.f32 %v1176, %v1176
      %v1351 = vmul.f32 %v1214, %v1214
      %v1352 = vmul.f32 %v1252, %v1252
      %v1353 = vmul.f32 %v1290, %v1290
      %v1354 = vmul.f32 %v1026, %v1026
      %v1355 = vmul.f32 %v1064, %v1064
      %v1356 = vmul.f32 %v1102, %v1102
      %v1357 = vmul.f32 %v1140, %v1140
      %v1358 = vmul.f32 %v1178, %v1178
      %v1359 = vmul.f32 %v1216, %v1216
      %v1360 = vmul.f32 %v1254, %v1254
      %v1361 = vmul.f32 %v1292, %v1292
      %v1362 = vmul.f32 %v1029, %v1029
      %v1363 = vmul.f32 %v1067, %v1067
      %v1364 = vmul.f32 %v1105, %v1105
      %v1365 = vmul.f32 %v1143, %v1143
      %v1366 = vmul.f32 %v1181, %v1181
      %v1367 = vmul.f32 %v1219, %v1219
      %v1368 = vmul.f32 %v1257, %v1257
      %v1369 = vmul.f32 %v1295, %v1295
      %v1370 = vmul.f32 %v1031, %v1031
      %v1371 = vmul.f32 %v1069, %v1069
      %v1372 = vmul.f32 %v1107, %v1107
      %v1373 = vmul.f32 %v1145, %v1145
      %v1374 = vmul.f32 %v1183, %v1183
      %v1375 = vmul.f32 %v1221, %v1221
      %v1376 = vmul.f32 %v1259, %v1259
      %v1377 = vmul.f32 %v1297, %v1297
      %v1378 = vadd.f32 %v1346, %v1347
      %v1379 = vadd.f32 %v1378, %v1348
      %v1380 = vadd.f32 %v1379, %v1349
      %v1381 = vadd.f32 %v1380, %v1350
      %v1382 = vadd.f32 %v1381, %v1351
      %v1383 = vadd.f32 %v1382, %v1352
      %v1384 = vadd.f32 %v1383, %v1353
      %1385 = vadd.xlane.f32.xlu0 %v1384
      %v1386 = vpop.xlane.xlu0 %1385
      %v1387 = vadd.f32 %v1354, %v1355
      %v1388 = vadd.f32 %v1387, %v1356
      %v1389 = vadd.f32 %v1388, %v1357
      %v1390 = vadd.f32 %v1389, %v1358
      %v1391 = vadd.f32 %v1390, %v1359
      %v1392 = vadd.f32 %v1391, %v1360
      %v1393 = vadd.f32 %v1392, %v1361
      %1394 = vadd.xlane.f32.xlu0 %v1393
      %v1395 = vpop.xlane.xlu0 %1394
      %v1396 = vadd.f32 %v1362, %v1363
      %v1397 = vadd.f32 %v1396, %v1364
      %v1398 = vadd.f32 %v1397, %v1365
      %v1399 = vadd.f32 %v1398, %v1366
      %v1400 = vadd.f32 %v1399, %v1367
      %v1401 = vadd.f32 %v1400, %v1368
      %v1402 = vadd.f32 %v1401, %v1369
      %1403 = vadd.xlane.f32.xlu0 %v1402
      %v1404 = vpop.xlane.xlu0 %1403
      %v1405 = vadd.f32 %v1370, %v1371
      %v1406 = vadd.f32 %v1405, %v1372
      %v1407 = vadd.f32 %v1406, %v1373
      %v1408 = vadd.f32 %v1407, %v1374
      %v1409 = vadd.f32 %v1408, %v1375
      %v1410 = vadd.f32 %v1409, %v1376
      %v1411 = vadd.f32 %v1410, %v1377
      %1412 = vadd.xlane.f32.xlu0 %v1411
      %v1413 = vpop.xlane.xlu0 %1412
      %v1414 = vmul.f32 %v1386, %v1341
      %v1415 = vmul.f32 %v1395, %v1341
      %v1416 = vmul.f32 %v1404, %v1341
      %v1417 = vmul.f32 %v1413, %v1341
      %v1418 = vmul.f32 %v1342, %v1342
      %v1419 = vmul.f32 %v1343, %v1343
      %v1420 = vmul.f32 %v1344, %v1344
      %v1421 = vmul.f32 %v1345, %v1345
      %v1422 = vsub.f32 %v1414, %v1418
      %v1423 = vsub.f32 %v1415, %v1419
      %v1424 = vsub.f32 %v1416, %v1420
      %v1425 = vsub.f32 %v1417, %v1421
      %v1426 = vsub.f32 %v1024, %v1342
      %v1427 = vsub.f32 %v1062, %v1342
      %v1428 = vsub.f32 %v1100, %v1342
      %v1429 = vsub.f32 %v1138, %v1342
      %v1430 = vsub.f32 %v1176, %v1342
      %v1431 = vsub.f32 %v1214, %v1342
      %v1432 = vsub.f32 %v1252, %v1342
      %v1433 = vsub.f32 %v1290, %v1342
      %v1434 = vsub.f32 %v1026, %v1343
      %v1435 = vsub.f32 %v1064, %v1343
      %v1436 = vsub.f32 %v1102, %v1343
      %v1437 = vsub.f32 %v1140, %v1343
      %v1438 = vsub.f32 %v1178, %v1343
      %v1439 = vsub.f32 %v1216, %v1343
      %v1440 = vsub.f32 %v1254, %v1343
      %v1441 = vsub.f32 %v1292, %v1343
      %v1442 = vsub.f32 %v1029, %v1344
      %v1443 = vsub.f32 %v1067, %v1344
      %v1444 = vsub.f32 %v1105, %v1344
      %v1445 = vsub.f32 %v1143, %v1344
      %v1446 = vsub.f32 %v1181, %v1344
      %v1447 = vsub.f32 %v1219, %v1344
      %v1448 = vsub.f32 %v1257, %v1344
      %v1449 = vsub.f32 %v1295, %v1344
      %v1450 = vsub.f32 %v1031, %v1345
      %v1451 = vsub.f32 %v1069, %v1345
      %v1452 = vsub.f32 %v1107, %v1345
      %v1453 = vsub.f32 %v1145, %v1345
      %v1454 = vsub.f32 %v1183, %v1345
      %v1455 = vsub.f32 %v1221, %v1345
      %v1456 = vsub.f32 %v1259, %v1345
      %v1457 = vsub.f32 %v1297, %v1345
      %v1458 = vadd.f32 %v1422, 1e-05
      %v1459 = vadd.f32 %v1423, 1e-05
      %v1460 = vadd.f32 %v1424, 1e-05
      %v1461 = vadd.f32 %v1425, 1e-05
      %v1462 = vrsqrt.pop %v1458
      %v1463 = vmul.f32 %v1462, %v1458
      %v1464 = vmul.f32 %v1463, %v1462
      %v1465 = vmul.f32 0.5, %v1464
      %v1466 = vsub.f32 1.5, %v1465
      %v1467 = vmul.f32 %v1462, %v1466
      %vm1468 = vweird.f32 %v1458
      %vm1469 = vweird.f32 %v1462
      %vm1470 = vmor %vm1468, %vm1469
      %v1471 = vsel %vm1470, %v1462, %v1467
      %v1472 = vrsqrt.pop %v1459
      %v1473 = vmul.f32 %v1472, %v1459
      %v1474 = vmul.f32 %v1473, %v1472
      %v1475 = vmul.f32 0.5, %v1474
      %v1476 = vsub.f32 1.5, %v1475
      %v1477 = vmul.f32 %v1472, %v1476
      %vm1478 = vweird.f32 %v1459
      %vm1479 = vweird.f32 %v1472
      %vm1480 = vmor %vm1478, %vm1479
      %v1481 = vsel %vm1480, %v1472, %v1477
      %v1482 = vrsqrt.pop %v1460
      %v1483 = vmul.f32 %v1482, %v1460
      %v1484 = vmul.f32 %v1483, %v1482
      %v1485 = vmul.f32 0.5, %v1484
      %v1486 = vsub.f32 1.5, %v1485
      %v1487 = vmul.f32 %v1482, %v1486
      %vm1488 = vweird.f32 %v1460
      %vm1489 = vweird.f32 %v1482
      %vm1490 = vmor %vm1488, %vm1489
      %v1491 = vsel %vm1490, %v1482, %v1487
      %v1492 = vrsqrt.pop %v1461
      %v1493 = vmul.f32 %v1492, %v1461
      %v1494 = vmul.f32 %v1493, %v1492
      %v1495 = vmul.f32 0.5, %v1494
      %v1496 = vsub.f32 1.5, %v1495
      %v1497 = vmul.f32 %v1492, %v1496
      %vm1498 = vweird.f32 %v1461
      %vm1499 = vweird.f32 %v1492
      %vm1500 = vmor %vm1498, %vm1499
      %v1501 = vsel %vm1500, %v1492, %v1497
      %v1502 = vmul.f32 %v1426, %v1471
      %v1503 = vmul.f32 %v1427, %v1471
      %v1504 = vmul.f32 %v1428, %v1471
      %v1505 = vmul.f32 %v1429, %v1471
      %v1506 = vmul.f32 %v1430, %v1471
      %v1507 = vmul.f32 %v1431, %v1471
      %v1508 = vmul.f32 %v1432, %v1471
      %v1509 = vmul.f32 %v1433, %v1471
      %v1510 = vmul.f32 %v1434, %v1481
      %v1511 = vmul.f32 %v1435, %v1481
      %v1512 = vmul.f32 %v1436, %v1481
      %v1513 = vmul.f32 %v1437, %v1481
      %v1514 = vmul.f32 %v1438, %v1481
      %v1515 = vmul.f32 %v1439, %v1481
      %v1516 = vmul.f32 %v1440, %v1481
      %v1517 = vmul.f32 %v1441, %v1481
      %v1518 = vmul.f32 %v1442, %v1491
      %v1519 = vmul.f32 %v1443, %v1491
      %v1520 = vmul.f32 %v1444, %v1491
      %v1521 = vmul.f32 %v1445, %v1491
      %v1522 = vmul.f32 %v1446, %v1491
      %v1523 = vmul.f32 %v1447, %v1491
      %v1524 = vmul.f32 %v1448, %v1491
      %v1525 = vmul.f32 %v1449, %v1491
      %v1526 = vmul.f32 %v1450, %v1501
      %v1527 = vmul.f32 %v1451, %v1501
      %v1528 = vmul.f32 %v1452, %v1501
      %v1529 = vmul.f32 %v1453, %v1501
      %v1530 = vmul.f32 %v1454, %v1501
      %v1531 = vmul.f32 %v1455, %v1501
      %v1532 = vmul.f32 %v1456, %v1501
      %v1533 = vmul.f32 %v1457, %v1501
      %v1534 = vpack.c.bf16 %v1510, %v1502
      %v1535 = vpack.c.bf16 %v1511, %v1503
      %v1536 = vpack.c.bf16 %v1512, %v1504
      %v1537 = vpack.c.bf16 %v1513, %v1505
      %v1538 = vpack.c.bf16 %v1514, %v1506
      %v1539 = vpack.c.bf16 %v1515, %v1507
      %v1540 = vpack.c.bf16 %v1516, %v1508
      %v1541 = vpack.c.bf16 %v1517, %v1509
      %v1542 = vpack.c.bf16 %v1526, %v1518
      %v1543 = vpack.c.bf16 %v1527, %v1519
      %v1544 = vpack.c.bf16 %v1528, %v1520
      %v1545 = vpack.c.bf16 %v1529, %v1521
      %v1546 = vpack.c.bf16 %v1530, %v1522
      %v1547 = vpack.c.bf16 %v1531, %v1523
      %v1548 = vpack.c.bf16 %v1532, %v1524
      %v1549 = vpack.c.bf16 %v1533, %v1525
      %v1550 = vld [vmem:[%s2] sm:$0xf]
      %v1551 = vld [vmem:[%s2 + $0x4] sm:$0xf]
      %v1552 = vld [vmem:[%s2 + $0x8] sm:$0xf]
      %v1553 = vld [vmem:[%s2 + $0xc] sm:$0xf]
      %v1554 = vld [vmem:[%s2 + $0x10] sm:$0xf]
      %v1555 = vld [vmem:[%s2 + $0x14] sm:$0xf]
      %v1556 = vld [vmem:[%s2 + $0x18] sm:$0xf]
      %v1557 = vld [vmem:[%s2 + $0x1c] sm:$0xf]
      %v1558 = vld [vmem:[%s2 + $0x20] sm:$0xf]
      %v1559 = vld [vmem:[%s2 + $0x24] sm:$0xf]
      %v1560 = vld [vmem:[%s2 + $0x28] sm:$0xf]
      %v1561 = vld [vmem:[%s2 + $0x2c] sm:$0xf]
      %v1562 = vld [vmem:[%s2 + $0x30] sm:$0xf]
      %v1563 = vld [vmem:[%s2 + $0x34] sm:$0xf]
      %v1564 = vld [vmem:[%s2 + $0x38] sm:$0xf]
      %v1565 = vld [vmem:[%s2 + $0x3c] sm:$0xf]
      %v1566 = vld [vmem:[%s2 + $0x40] sm:$0xf]
      %v1567 = vld [vmem:[%s2 + $0x44] sm:$0xf]
      %v1568 = vld [vmem:[%s2 + $0x48] sm:$0xf]
      %v1569 = vld [vmem:[%s2 + $0x4c] sm:$0xf]
      %v1570 = vld [vmem:[%s2 + $0x50] sm:$0xf]
      %v1571 = vld [vmem:[%s2 + $0x54] sm:$0xf]
      %v1572 = vld [vmem:[%s2 + $0x58] sm:$0xf]
      %v1573 = vld [vmem:[%s2 + $0x5c] sm:$0xf]
      %v1574 = vld [vmem:[%s2 + $0x60] sm:$0xf]
      %v1575 = vld [vmem:[%s2 + $0x64] sm:$0xf]
      %v1576 = vld [vmem:[%s2 + $0x68] sm:$0xf]
      %v1577 = vld [vmem:[%s2 + $0x6c] sm:$0xf]
      %v1578 = vld [vmem:[%s2 + $0x70] sm:$0xf]
      %v1579 = vld [vmem:[%s2 + $0x74] sm:$0xf]
      %v1580 = vld [vmem:[%s2 + $0x78] sm:$0xf]
      %v1581 = vld [vmem:[%s2 + $0x7c] sm:$0xf]
      %v1582 = vld [vmem:[%s2 + $0x80] sm:$0xf]
      %v1583 = vld [vmem:[%s2 + $0x84] sm:$0xf]
      %v1584 = vld [vmem:[%s2 + $0x88] sm:$0xf]
      %v1585 = vld [vmem:[%s2 + $0x8c] sm:$0xf]
      %v1586 = vld [vmem:[%s2 + $0x90] sm:$0xf]
      %v1587 = vld [vmem:[%s2 + $0x94] sm:$0xf]
      %v1588 = vld [vmem:[%s2 + $0x98] sm:$0xf]
      %v1589 = vld [vmem:[%s2 + $0x9c] sm:$0xf]
      %v1590 = vld [vmem:[%s2 + $0xa0] sm:$0xf]
      %v1591 = vld [vmem:[%s2 + $0xa4] sm:$0xf]
      %v1592 = vld [vmem:[%s2 + $0xa8] sm:$0xf]
      %v1593 = vld [vmem:[%s2 + $0xac] sm:$0xf]
      %v1594 = vld [vmem:[%s2 + $0xb0] sm:$0xf]
      %v1595 = vld [vmem:[%s2 + $0xb4] sm:$0xf]
      %v1596 = vld [vmem:[%s2 + $0xb8] sm:$0xf]
      %v1597 = vld [vmem:[%s2 + $0xbc] sm:$0xf]
      %v1598 = vld [vmem:[%s2 + $0xc0] sm:$0xf]
      %v1599 = vld [vmem:[%s2 + $0xc4] sm:$0xf]
      %v1600 = vld [vmem:[%s2 + $0xc8] sm:$0xf]
      %v1601 = vld [vmem:[%s2 + $0xcc] sm:$0xf]
      %v1602 = vld [vmem:[%s2 + $0xd0] sm:$0xf]
      %v1603 = vld [vmem:[%s2 + $0xd4] sm:$0xf]
      %v1604 = vld [vmem:[%s2 + $0xd8] sm:$0xf]
      %v1605 = vld [vmem:[%s2 + $0xdc] sm:$0xf]
      %v1606 = vld [vmem:[%s2 + $0xe0] sm:$0xf]
      %v1607 = vld [vmem:[%s2 + $0xe4] sm:$0xf]
      %v1608 = vld [vmem:[%s2 + $0xe8] sm:$0xf]
      %v1609 = vld [vmem:[%s2 + $0xec] sm:$0xf]
      %v1610 = vld [vmem:[%s2 + $0xf0] sm:$0xf]
      %v1611 = vld [vmem:[%s2 + $0xf4] sm:$0xf]
      %v1612 = vld [vmem:[%s2 + $0xf8] sm:$0xf]
      %v1613 = vld [vmem:[%s2 + $0xfc] sm:$0xf]
      %v1614 = vld [vmem:[%s2 + $0x100] sm:$0xf]
      %v1615 = vld [vmem:[%s2 + $0x104] sm:$0xf]
      %v1616 = vld [vmem:[%s2 + $0x108] sm:$0xf]
      %v1617 = vld [vmem:[%s2 + $0x10c] sm:$0xf]
      %v1618 = vld [vmem:[%s2 + $0x110] sm:$0xf]
      %v1619 = vld [vmem:[%s2 + $0x114] sm:$0xf]
      %v1620 = vld [vmem:[%s2 + $0x118] sm:$0xf]
      %v1621 = vld [vmem:[%s2 + $0x11c] sm:$0xf]
      %v1622 = vld [vmem:[%s2 + $0x120] sm:$0xf]
      %v1623 = vld [vmem:[%s2 + $0x124] sm:$0xf]
      %v1624 = vld [vmem:[%s2 + $0x128] sm:$0xf]
      %v1625 = vld [vmem:[%s2 + $0x12c] sm:$0xf]
      %v1626 = vld [vmem:[%s2 + $0x130] sm:$0xf]
      %v1627 = vld [vmem:[%s2 + $0x134] sm:$0xf]
      %v1628 = vld [vmem:[%s2 + $0x138] sm:$0xf]
      %v1629 = vld [vmem:[%s2 + $0x13c] sm:$0xf]
      %v1630 = vld [vmem:[%s2 + $0x140] sm:$0xf]
      %v1631 = vld [vmem:[%s2 + $0x144] sm:$0xf]
      %v1632 = vld [vmem:[%s2 + $0x148] sm:$0xf]
      %v1633 = vld [vmem:[%s2 + $0x14c] sm:$0xf]
      %v1634 = vld [vmem:[%s2 + $0x150] sm:$0xf]
      %v1635 = vld [vmem:[%s2 + $0x154] sm:$0xf]
      %v1636 = vld [vmem:[%s2 + $0x158] sm:$0xf]
      %v1637 = vld [vmem:[%s2 + $0x15c] sm:$0xf]
      %v1638 = vld [vmem:[%s2 + $0x160] sm:$0xf]
      %v1639 = vld [vmem:[%s2 + $0x164] sm:$0xf]
      %v1640 = vld [vmem:[%s2 + $0x168] sm:$0xf]
      %v1641 = vld [vmem:[%s2 + $0x16c] sm:$0xf]
      %v1642 = vld [vmem:[%s2 + $0x170] sm:$0xf]
      %v1643 = vld [vmem:[%s2 + $0x174] sm:$0xf]
      %v1644 = vld [vmem:[%s2 + $0x178] sm:$0xf]
      %v1645 = vld [vmem:[%s2 + $0x17c] sm:$0xf]
      %v1646 = vld [vmem:[%s2 + $0x180] sm:$0xf]
      %v1647 = vld [vmem:[%s2 + $0x184] sm:$0xf]
      %v1648 = vld [vmem:[%s2 + $0x188] sm:$0xf]
      %v1649 = vld [vmem:[%s2 + $0x18c] sm:$0xf]
      %v1650 = vld [vmem:[%s2 + $0x190] sm:$0xf]
      %v1651 = vld [vmem:[%s2 + $0x194] sm:$0xf]
      %v1652 = vld [vmem:[%s2 + $0x198] sm:$0xf]
      %v1653 = vld [vmem:[%s2 + $0x19c] sm:$0xf]
      %v1654 = vld [vmem:[%s2 + $0x1a0] sm:$0xf]
      %v1655 = vld [vmem:[%s2 + $0x1a4] sm:$0xf]
      %v1656 = vld [vmem:[%s2 + $0x1a8] sm:$0xf]
      %v1657 = vld [vmem:[%s2 + $0x1ac] sm:$0xf]
      %v1658 = vld [vmem:[%s2 + $0x1b0] sm:$0xf]
      %v1659 = vld [vmem:[%s2 + $0x1b4] sm:$0xf]
      %v1660 = vld [vmem:[%s2 + $0x1b8] sm:$0xf]
      %v1661 = vld [vmem:[%s2 + $0x1bc] sm:$0xf]
      %v1662 = vld [vmem:[%s2 + $0x1c0] sm:$0xf]
      %v1663 = vld [vmem:[%s2 + $0x1c4] sm:$0xf]
      %v1664 = vld [vmem:[%s2 + $0x1c8] sm:$0xf]
      %v1665 = vld [vmem:[%s2 + $0x1cc] sm:$0xf]
      %v1666 = vld [vmem:[%s2 + $0x1d0] sm:$0xf]
      %v1667 = vld [vmem:[%s2 + $0x1d4] sm:$0xf]
      %v1668 = vld [vmem:[%s2 + $0x1d8] sm:$0xf]
      %v1669 = vld [vmem:[%s2 + $0x1dc] sm:$0xf]
      %v1670 = vld [vmem:[%s2 + $0x1e0] sm:$0xf]
      %v1671 = vld [vmem:[%s2 + $0x1e4] sm:$0xf]
      %v1672 = vld [vmem:[%s2 + $0x1e8] sm:$0xf]
      %v1673 = vld [vmem:[%s2 + $0x1ec] sm:$0xf]
      %v1674 = vld [vmem:[%s2 + $0x1f0] sm:$0xf]
      %v1675 = vld [vmem:[%s2 + $0x1f4] sm:$0xf]
      %v1676 = vld [vmem:[%s2 + $0x1f8] sm:$0xf]
      %v1677 = vld [vmem:[%s2 + $0x1fc] sm:$0xf]
      %v1806 = vunpack.c.l.b16 %v1550
      %v1807 = vunpack.c.l.b16 %v1551
      %v1808 = vunpack.c.l.b16 %v1552
      %v1809 = vunpack.c.l.b16 %v1553
      %v1810 = vunpack.c.l.b16 %v1554
      %v1811 = vunpack.c.l.b16 %v1555
      %v1812 = vunpack.c.l.b16 %v1556
      %v1813 = vunpack.c.l.b16 %v1557
      %v1814 = vunpack.c.l.b16 %v1558
      %v1815 = vunpack.c.l.b16 %v1559
      %v1816 = vunpack.c.l.b16 %v1560
      %v1817 = vunpack.c.l.b16 %v1561
      %v1818 = vunpack.c.l.b16 %v1562
      %v1819 = vunpack.c.l.b16 %v1563
      %v1820 = vunpack.c.l.b16 %v1564
      %v1821 = vunpack.c.l.b16 %v1565
      %v1822 = vunpack.c.l.b16 %v1566
      %v1823 = vunpack.c.l.b16 %v1567
      %v1824 = vunpack.c.l.b16 %v1568
      %v1825 = vunpack.c.l.b16 %v1569
      %v1826 = vunpack.c.l.b16 %v1570
      %v1827 = vunpack.c.l.b16 %v1571
      %v1828 = vunpack.c.l.b16 %v1572
      %v1829 = vunpack.c.l.b16 %v1573
      %v1830 = vunpack.c.l.b16 %v1574
      %v1831 = vunpack.c.l.b16 %v1575
      %v1832 = vunpack.c.l.b16 %v1576
      %v1833 = vunpack.c.l.b16 %v1577
      %v1834 = vunpack.c.l.b16 %v1578
      %v1835 = vunpack.c.l.b16 %v1579
      %v1836 = vunpack.c.l.b16 %v1580
      %v1837 = vunpack.c.l.b16 %v1581
      %v1838 = vunpack.c.l.b16 %v1582
      %v1839 = vunpack.c.l.b16 %v1583
      %v1840 = vunpack.c.l.b16 %v1584
      %v1841 = vunpack.c.l.b16 %v1585
      %v1842 = vunpack.c.l.b16 %v1586
      %v1843 = vunpack.c.l.b16 %v1587
      %v1844 = vunpack.c.l.b16 %v1588
      %v1845 = vunpack.c.l.b16 %v1589
      %v1846 = vunpack.c.l.b16 %v1590
      %v1847 = vunpack.c.l.b16 %v1591
      %v1848 = vunpack.c.l.b16 %v1592
      %v1849 = vunpack.c.l.b16 %v1593
      %v1850 = vunpack.c.l.b16 %v1594
      %v1851 = vunpack.c.l.b16 %v1595
      %v1852 = vunpack.c.l.b16 %v1596
      %v1853 = vunpack.c.l.b16 %v1597
      %v1854 = vunpack.c.l.b16 %v1598
      %v1855 = vunpack.c.l.b16 %v1599
      %v1856 = vunpack.c.l.b16 %v1600
      %v1857 = vunpack.c.l.b16 %v1601
      %v1858 = vunpack.c.l.b16 %v1602
      %v1859 = vunpack.c.l.b16 %v1603
      %v1860 = vunpack.c.l.b16 %v1604
      %v1861 = vunpack.c.l.b16 %v1605
      %v1862 = vunpack.c.l.b16 %v1606
      %v1863 = vunpack.c.l.b16 %v1607
      %v1864 = vunpack.c.l.b16 %v1608
      %v1865 = vunpack.c.l.b16 %v1609
      %v1866 = vunpack.c.l.b16 %v1610
      %v1867 = vunpack.c.l.b16 %v1611
      %v1868 = vunpack.c.l.b16 %v1612
      %v1869 = vunpack.c.l.b16 %v1613
      %v1870 = vunpack.c.l.b16 %v1614
      %v1871 = vunpack.c.l.b16 %v1615
      %v1872 = vunpack.c.l.b16 %v1616
      %v1873 = vunpack.c.l.b16 %v1617
      %v1874 = vunpack.c.l.b16 %v1618
      %v1875 = vunpack.c.l.b16 %v1619
      %v1876 = vunpack.c.l.b16 %v1620
      %v1877 = vunpack.c.l.b16 %v1621
      %v1878 = vunpack.c.l.b16 %v1622
      %v1879 = vunpack.c.l.b16 %v1623
      %v1880 = vunpack.c.l.b16 %v1624
      %v1881 = vunpack.c.l.b16 %v1625
      %v1882 = vunpack.c.l.b16 %v1626
      %v1883 = vunpack.c.l.b16 %v1627
      %v1884 = vunpack.c.l.b16 %v1628
      %v1885 = vunpack.c.l.b16 %v1629
      %v1886 = vunpack.c.l.b16 %v1630
      %v1887 = vunpack.c.l.b16 %v1631
      %v1888 = vunpack.c.l.b16 %v1632
      %v1889 = vunpack.c.l.b16 %v1633
      %v1890 = vunpack.c.l.b16 %v1634
      %v1891 = vunpack.c.l.b16 %v1635
      %v1892 = vunpack.c.l.b16 %v1636
      %v1893 = vunpack.c.l.b16 %v1637
      %v1894 = vunpack.c.l.b16 %v1638
      %v1895 = vunpack.c.l.b16 %v1639
      %v1896 = vunpack.c.l.b16 %v1640
      %v1897 = vunpack.c.l.b16 %v1641
      %v1898 = vunpack.c.l.b16 %v1642
      %v1899 = vunpack.c.l.b16 %v1643
      %v1900 = vunpack.c.l.b16 %v1644
      %v1901 = vunpack.c.l.b16 %v1645
      %v1902 = vunpack.c.l.b16 %v1646
      %v1903 = vunpack.c.l.b16 %v1647
      %v1904 = vunpack.c.l.b16 %v1648
      %v1905 = vunpack.c.l.b16 %v1649
      %v1906 = vunpack.c.l.b16 %v1650
      %v1907 = vunpack.c.l.b16 %v1651
      %v1908 = vunpack.c.l.b16 %v1652
      %v1909 = vunpack.c.l.b16 %v1653
      %v1910 = vunpack.c.l.b16 %v1654
      %v1911 = vunpack.c.l.b16 %v1655
      %v1912 = vunpack.c.l.b16 %v1656
      %v1913 = vunpack.c.l.b16 %v1657
      %v1914 = vunpack.c.l.b16 %v1658
      %v1915 = vunpack.c.l.b16 %v1659
      %v1916 = vunpack.c.l.b16 %v1660
      %v1917 = vunpack.c.l.b16 %v1661
      %v1918 = vunpack.c.l.b16 %v1662
      %v1919 = vunpack.c.l.b16 %v1663
      %v1920 = vunpack.c.l.b16 %v1664
      %v1921 = vunpack.c.l.b16 %v1665
      %v1922 = vunpack.c.l.b16 %v1666
      %v1923 = vunpack.c.l.b16 %v1667
      %v1924 = vunpack.c.l.b16 %v1668
      %v1925 = vunpack.c.l.b16 %v1669
      %v1926 = vunpack.c.l.b16 %v1670
      %v1927 = vunpack.c.l.b16 %v1671
      %v1928 = vunpack.c.l.b16 %v1672
      %v1929 = vunpack.c.l.b16 %v1673
      %v1930 = vunpack.c.l.b16 %v1674
      %v1931 = vunpack.c.l.b16 %v1675
      %v1932 = vunpack.c.l.b16 %v1676
      %v1933 = vunpack.c.l.b16 %v1677
      %v1934 = vpack.c.b16 %v1807, %v1806
      %v1935 = vpack.c.b16 %v1809, %v1808
      %v1936 = vpack.c.b16 %v1811, %v1810
      %v1937 = vpack.c.b16 %v1813, %v1812
      %v1938 = vpack.c.b16 %v1815, %v1814
      %v1939 = vpack.c.b16 %v1817, %v1816
      %v1940 = vpack.c.b16 %v1819, %v1818
      %v1941 = vpack.c.b16 %v1821, %v1820
      %v1942 = vpack.c.b16 %v1823, %v1822
      %v1943 = vpack.c.b16 %v1825, %v1824
      %v1944 = vpack.c.b16 %v1827, %v1826
      %v1945 = vpack.c.b16 %v1829, %v1828
      %v1946 = vpack.c.b16 %v1831, %v1830
      %v1947 = vpack.c.b16 %v1833, %v1832
      %v1948 = vpack.c.b16 %v1835, %v1834
      %v1949 = vpack.c.b16 %v1837, %v1836
      %v1950 = vpack.c.b16 %v1839, %v1838
      %v1951 = vpack.c.b16 %v1841, %v1840
      %v1952 = vpack.c.b16 %v1843, %v1842
      %v1953 = vpack.c.b16 %v1845, %v1844
      %v1954 = vpack.c.b16 %v1847, %v1846
      %v1955 = vpack.c.b16 %v1849, %v1848
      %v1956 = vpack.c.b16 %v1851, %v1850
      %v1957 = vpack.c.b16 %v1853, %v1852
      %v1958 = vpack.c.b16 %v1855, %v1854
      %v1959 = vpack.c.b16 %v1857, %v1856
      %v1960 = vpack.c.b16 %v1859, %v1858
      %v1961 = vpack.c.b16 %v1861, %v1860
      %v1962 = vpack.c.b16 %v1863, %v1862
      %v1963 = vpack.c.b16 %v1865, %v1864
      %v1964 = vpack.c.b16 %v1867, %v1866
      %v1965 = vpack.c.b16 %v1869, %v1868
      %v1966 = vpack.c.b16 %v1871, %v1870
      %v1967 = vpack.c.b16 %v1873, %v1872
      %v1968 = vpack.c.b16 %v1875, %v1874
      %v1969 = vpack.c.b16 %v1877, %v1876
      %v1970 = vpack.c.b16 %v1879, %v1878
      %v1971 = vpack.c.b16 %v1881, %v1880
      %v1972 = vpack.c.b16 %v1883, %v1882
      %v1973 = vpack.c.b16 %v1885, %v1884
      %v1974 = vpack.c.b16 %v1887, %v1886
      %v1975 = vpack.c.b16 %v1889, %v1888
      %v1976 = vpack.c.b16 %v1891, %v1890
      %v1977 = vpack.c.b16 %v1893, %v1892
      %v1978 = vpack.c.b16 %v1895, %v1894
      %v1979 = vpack.c.b16 %v1897, %v1896
      %v1980 = vpack.c.b16 %v1899, %v1898
      %v1981 = vpack.c.b16 %v1901, %v1900
      %v1982 = vpack.c.b16 %v1903, %v1902
      %v1983 = vpack.c.b16 %v1905, %v1904
      %v1984 = vpack.c.b16 %v1907, %v1906
      %v1985 = vpack.c.b16 %v1909, %v1908
      %v1986 = vpack.c.b16 %v1911, %v1910
      %v1987 = vpack.c.b16 %v1913, %v1912
      %v1988 = vpack.c.b16 %v1915, %v1914
      %v1989 = vpack.c.b16 %v1917, %v1916
      %v1990 = vpack.c.b16 %v1919, %v1918
      %v1991 = vpack.c.b16 %v1921, %v1920
      %v1992 = vpack.c.b16 %v1923, %v1922
      %v1993 = vpack.c.b16 %v1925, %v1924
      %v1994 = vpack.c.b16 %v1927, %v1926
      %v1995 = vpack.c.b16 %v1929, %v1928
      %v1996 = vpack.c.b16 %v1931, %v1930
      %v1997 = vpack.c.b16 %v1933, %v1932
      %2062 = vmatpush.bf16.msra.mxu0 %v1941
      %2063 = vmatpush.bf16.msra.mxu0 %v1940
      %2064 = vmatpush.bf16.msra.mxu0 %v1939
      %2065 = vmatpush.bf16.msra.mxu0 %v1938
      %2066 = vmatpush.bf16.msra.mxu0 %v1937
      %2067 = vmatpush.bf16.msra.mxu0 %v1936
      %2068 = vmatpush.bf16.msra.mxu0 %v1935
      %2069 = vmatpush.bf16.msra.mxu0 %v1934
      %2070 = vmatmul.bf16.gmra.mxu0 %v1534
      %v2071 = vpop.f32.mrf.mxu0
      %v2072 = vadd.f32 0.0, %v2071
      %v2073 = vpop.f32.mrf.mxu0
      %v2074 = vadd.f32 0.0, %v2073
      %2075 = vmatmul.bf16.gmra.mxu0 %v1542
      %v2076 = vpop.f32.mrf.mxu0
      %v2077 = vadd.f32 0.0, %v2076
      %v2078 = vpop.f32.mrf.mxu0
      %v2079 = vadd.f32 0.0, %v2078
      %2080 = vdwg.mxu0
      %2081 = vmatpush.bf16.msra.mxu0 %v1949
      %2082 = vmatpush.bf16.msra.mxu0 %v1948
      %2083 = vmatpush.bf16.msra.mxu0 %v1947
      %2084 = vmatpush.bf16.msra.mxu0 %v1946
      %2085 = vmatpush.bf16.msra.mxu0 %v1945
      %2086 = vmatpush.bf16.msra.mxu0 %v1944
      %2087 = vmatpush.bf16.msra.mxu0 %v1943
      %2088 = vmatpush.bf16.msra.mxu0 %v1942
      %2089 = vmatmul.bf16.gmra.mxu0 %v1535
      %v2090 = vpop.f32.mrf.mxu0
      %v2091 = vadd.f32 %v2072, %v2090
      %v2092 = vpop.f32.mrf.mxu0
      %v2093 = vadd.f32 %v2074, %v2092
      %2094 = vmatmul.bf16.gmra.mxu0 %v1543
      %v2095 = vpop.f32.mrf.mxu0
      %v2096 = vadd.f32 %v2077, %v2095
      %v2097 = vpop.f32.mrf.mxu0
      %v2098 = vadd.f32 %v2079, %v2097
      %2099 = vdwg.mxu0
      %2100 = vmatpush.bf16.msra.mxu0 %v1957
      %2101 = vmatpush.bf16.msra.mxu0 %v1956
      %2102 = vmatpush.bf16.msra.mxu0 %v1955
      %2103 = vmatpush.bf16.msra.mxu0 %v1954
      %2104 = vmatpush.bf16.msra.mxu0 %v1953
      %2105 = vmatpush.bf16.msra.mxu0 %v1952
      %2106 = vmatpush.bf16.msra.mxu0 %v1951
      %2107 = vmatpush.bf16.msra.mxu0 %v1950
      %2108 = vmatmul.bf16.gmra.mxu0 %v1536
      %v2109 = vpop.f32.mrf.mxu0
      %v2110 = vadd.f32 %v2091, %v2109
      %v2111 = vpop.f32.mrf.mxu0
      %v2112 = vadd.f32 %v2093, %v2111
      %2113 = vmatmul.bf16.gmra.mxu0 %v1544
      %v2114 = vpop.f32.mrf.mxu0
      %v2115 = vadd.f32 %v2096, %v2114
      %v2116 = vpop.f32.mrf.mxu0
      %v2117 = vadd.f32 %v2098, %v2116
      %2118 = vdwg.mxu0
      %2119 = vmatpush.bf16.msra.mxu0 %v1965
      %2120 = vmatpush.bf16.msra.mxu0 %v1964
      %2121 = vmatpush.bf16.msra.mxu0 %v1963
      %2122 = vmatpush.bf16.msra.mxu0 %v1962
      %2123 = vmatpush.bf16.msra.mxu0 %v1961
      %2124 = vmatpush.bf16.msra.mxu0 %v1960
      %2125 = vmatpush.bf16.msra.mxu0 %v1959
      %2126 = vmatpush.bf16.msra.mxu0 %v1958
      %2127 = vmatmul.bf16.gmra.mxu0 %v1537
      %v2128 = vpop.f32.mrf.mxu0
      %v2129 = vadd.f32 %v2110, %v2128
      %v2130 = vpop.f32.mrf.mxu0
      %v2131 = vadd.f32 %v2112, %v2130
      %2132 = vmatmul.bf16.gmra.mxu0 %v1545
      %v2133 = vpop.f32.mrf.mxu0
      %v2134 = vadd.f32 %v2115, %v2133
      %v2135 = vpop.f32.mrf.mxu0
      %v2136 = vadd.f32 %v2117, %v2135
      %2137 = vdwg.mxu0
      %2138 = vmatpush.bf16.msra.mxu0 %v1973
      %2139 = vmatpush.bf16.msra.mxu0 %v1972
      %2140 = vmatpush.bf16.msra.mxu0 %v1971
      %2141 = vmatpush.bf16.msra.mxu0 %v1970
      %2142 = vmatpush.bf16.msra.mxu0 %v1969
      %2143 = vmatpush.bf16.msra.mxu0 %v1968
      %2144 = vmatpush.bf16.msra.mxu0 %v1967
      %2145 = vmatpush.bf16.msra.mxu0 %v1966
      %2146 = vmatmul.bf16.gmra.mxu0 %v1538
      %v2147 = vpop.f32.mrf.mxu0
      %v2148 = vadd.f32 %v2129, %v2147
      %v2149 = vpop.f32.mrf.mxu0
      %v2150 = vadd.f32 %v2131, %v2149
      %2151 = vmatmul.bf16.gmra.mxu0 %v1546
      %v2152 = vpop.f32.mrf.mxu0
      %v2153 = vadd.f32 %v2134, %v2152
      %v2154 = vpop.f32.mrf.mxu0
      %v2155 = vadd.f32 %v2136, %v2154
      %2156 = vdwg.mxu0
      %2157 = vmatpush.bf16.msra.mxu0 %v1981
      %2158 = vmatpush.bf16.msra.mxu0 %v1980
      %2159 = vmatpush.bf16.msra.mxu0 %v1979
      %2160 = vmatpush.bf16.msra.mxu0 %v1978
      %2161 = vmatpush.bf16.msra.mxu0 %v1977
      %2162 = vmatpush.bf16.msra.mxu0 %v1976
      %2163 = vmatpush.bf16.msra.mxu0 %v1975
      %2164 = vmatpush.bf16.msra.mxu0 %v1974
      %2165 = vmatmul.bf16.gmra.mxu0 %v1539
      %v2166 = vpop.f32.mrf.mxu0
      %v2167 = vadd.f32 %v2148, %v2166
      %v2168 = vpop.f32.mrf.mxu0
      %v2169 = vadd.f32 %v2150, %v2168
      %2170 = vmatmul.bf16.gmra.mxu0 %v1547
      %v2171 = vpop.f32.mrf.mxu0
      %v2172 = vadd.f32 %v2153, %v2171
      %v2173 = vpop.f32.mrf.mxu0
      %v2174 = vadd.f32 %v2155, %v2173
      %2175 = vdwg.mxu0
      %2176 = vmatpush.bf16.msra.mxu0 %v1989
      %2177 = vmatpush.bf16.msra.mxu0 %v1988
      %2178 = vmatpush.bf16.msra.mxu0 %v1987
      %2179 = vmatpush.bf16.msra.mxu0 %v1986
      %2180 = vmatpush.bf16.msra.mxu0 %v1985
      %2181 = vmatpush.bf16.msra.mxu0 %v1984
      %2182 = vmatpush.bf16.msra.mxu0 %v1983
      %2183 = vmatpush.bf16.msra.mxu0 %v1982
      %2184 = vmatmul.bf16.gmra.mxu0 %v1540
      %v2185 = vpop.f32.mrf.mxu0
      %v2186 = vadd.f32 %v2167, %v2185
      %v2187 = vpop.f32.mrf.mxu0
      %v2188 = vadd.f32 %v2169, %v2187
      %2189 = vmatmul.bf16.gmra.mxu0 %v1548
      %v2190 = vpop.f32.mrf.mxu0
      %v2191 = vadd.f32 %v2172, %v2190
      %v2192 = vpop.f32.mrf.mxu0
      %v2193 = vadd.f32 %v2174, %v2192
      %2194 = vdwg.mxu0
      %2195 = vmatpush.bf16.msra.mxu0 %v1997
      %2196 = vmatpush.bf16.msra.mxu0 %v1996
      %2197 = vmatpush.bf16.msra.mxu0 %v1995
      %2198 = vmatpush.bf16.msra.mxu0 %v1994
      %2199 = vmatpush.bf16.msra.mxu0 %v1993
      %2200 = vmatpush.bf16.msra.mxu0 %v1992
      %2201 = vmatpush.bf16.msra.mxu0 %v1991
      %2202 = vmatpush.bf16.msra.mxu0 %v1990
      %2203 = vmatmul.bf16.gmra.mxu0 %v1541
      %v2204 = vpop.f32.mrf.mxu0
      %v2205 = vadd.f32 %v2186, %v2204
      %v2206 = vpop.f32.mrf.mxu0
      %v2207 = vadd.f32 %v2188, %v2206
      %2208 = vmatmul.bf16.gmra.mxu0 %v1549
      %v2209 = vpop.f32.mrf.mxu0
      %v2210 = vadd.f32 %v2191, %v2209
      %v2211 = vpop.f32.mrf.mxu0
      %v2212 = vadd.f32 %v2193, %v2211
      %2213 = vdwg.mxu0
      %vm2214 = vcmask 261120
      %v2215 = vsel %vm2214, %v2205, 0.0
      %v2216 = vsel %vm2214, %v2207, 0.0
      %v2217 = vadd.f32 %v2215, %v2216
      %v2218 = vsel %vm2214, %v2210, 0.0
      %v2219 = vadd.f32 %v2217, %v2218
      %v2220 = vsel %vm2214, %v2212, 0.0
      %v2221 = vadd.f32 %v2219, %v2220
      %v2222 = vrot.slane %v2221, 4
      %v2223 = vadd.f32 %v2221, %v2222
      %v2224 = vrot.slane %v2223, 2
      %v2225 = vadd.f32 %v2223, %v2224
      %v2226 = vrot.slane %v2225, 1
      %v2227 = vadd.f32 %v2225, %v2226
      %v2228 = vrcp.pop 32.0
      %v2229 = vmul.f32 32.0, %v2228
      %v2230 = vsub.f32 1.0, %v2229
      %v2231 = vmul.f32 %v2228, %v2230
      %v2232 = vadd.f32 %v2228, %v2231
      %vm2233 = vweird.f32 %v2228
      %v2234 = vsel %vm2233, %v2228, %v2232
      %v2235 = vmul.f32 %v2227, %v2234
      %v2236 = vsub.f32 %v2205, %v2235
      %v2237 = vsub.f32 %v2207, %v2235
      %v2238 = vsub.f32 %v2210, %v2235
      %v2239 = vsub.f32 %v2212, %v2235
      %2240 = vxpose.xlu0.b32.start [1/16] %v2236, 128
      %2241 = vxpose.xlu0.b32.cont [2/16] %v2237, 128
      %2242 = vxpose.xlu0.b32.cont [3/16] %v2238, 128
      %2243 = vxpose.xlu0.b32.cont [4/16] %v2239, 128
      %2244 = vxpose.xlu0.b32.cont [5/16] 0.0, 128
      %2245 = vxpose.xlu0.b32.cont [6/16] 0.0, 128
      %2246 = vxpose.xlu0.b32.cont [7/16] 0.0, 128
      %2247 = vxpose.xlu0.b32.cont [8/16] 0.0, 128
      %2248 = vxpose.xlu0.b32.cont [9/16] 0.0, 128
      %2249 = vxpose.xlu0.b32.cont [10/16] 0.0, 128
      %2250 = vxpose.xlu0.b32.cont [11/16] 0.0, 128
      %2251 = vxpose.xlu0.b32.cont [12/16] 0.0, 128
      %2252 = vxpose.xlu0.b32.cont [13/16] 0.0, 128
      %2253 = vxpose.xlu0.b32.cont [14/16] 0.0, 128
      %2254 = vxpose.xlu0.b32.cont [15/16] 0.0, 128
      %2255 = vxpose.xlu0.b32.end [16/16] 0.0, 128
      %v2256 = vpop.trf.xlu0
      %v2257 = vpop.trf.xlu0
      %v2258 = vpop.trf.xlu0
      %v2259 = vpop.trf.xlu0
      %v2260 = vpop.trf.xlu0
      %v2261 = vpop.trf.xlu0
      %v2262 = vpop.trf.xlu0
      %v2263 = vpop.trf.xlu0
      %v2264 = vpop.trf.xlu0
      %v2265 = vpop.trf.xlu0
      %v2266 = vpop.trf.xlu0
      %v2267 = vpop.trf.xlu0
      %v2268 = vpop.trf.xlu0
      %v2269 = vpop.trf.xlu0
      %v2270 = vpop.trf.xlu0
      %v2271 = vpop.trf.xlu0
      %v2273 = vsel %vm2214, %v2256, 0
      %v2276 = vsel %vm2214, %v2257, 0
      %v2279 = vsel %vm2214, %v2258, 0
      %v2282 = vsel %vm2214, %v2259, 0
      %2284 = vmatpush.msra.mxu0 0.0
      %2285 = vmatpush.msra.mxu0 0.0
      %2286 = vmatpush.msra.mxu0 0.0
      %2287 = vmatpush.msra.mxu0 0.0
      %2288 = vmatpush.msra.mxu0 0.0
      %2289 = vmatpush.msra.mxu0 0.0
      %2290 = vmatpush.msra.mxu0 0.0
      %2291 = vmatpush.msra.mxu0 0.0
      %2292 = vmatpush.msra.mxu0 0.0
      %2293 = vmatpush.msra.mxu0 0.0
      %2294 = vmatpush.msra.mxu0 0.0
      %2295 = vmatpush.msra.mxu0 0.0
      %2296 = vmatpush.msra.mxu0 %v2239
      %2297 = vmatpush.msra.mxu0 %v2238
      %2298 = vmatpush.msra.mxu0 %v2237
      %2299 = vmatpush.msra.mxu0 %v2236
      %2300 = vmatmul.f32.gmra.mxu0 %v2273
      %v2301 = vpop.f32.mrf.mxu0
      %v2302 = vadd.f32 0.0, %v2301
      %2303 = vmatmul.f32.gmra.mxu0 %v2276
      %v2304 = vpop.f32.mrf.mxu0
      %v2305 = vadd.f32 0.0, %v2304
      %2306 = vmatmul.f32.gmra.mxu0 %v2279
      %v2307 = vpop.f32.mrf.mxu0
      %v2308 = vadd.f32 0.0, %v2307
      %2309 = vmatmul.f32.gmra.mxu0 %v2282
      %v2310 = vpop.f32.mrf.mxu0
      %v2311 = vadd.f32 0.0, %v2310
      %2312 = vdwg.mxu0
      %v2313 = vrcp.pop 31.0
      %v2314 = vmul.f32 31.0, %v2313
      %v2315 = vsub.f32 1.0, %v2314
      %v2316 = vmul.f32 %v2313, %v2315
      %v2317 = vadd.f32 %v2313, %v2316
      %vm2318 = vweird.f32 %v2313
      %v2319 = vsel %vm2318, %v2313, %v2317
      %v2320 = vmul.f32 %v2302, %v2319
      %v2321 = vmul.f32 %v2305, %v2319
      %v2322 = vmul.f32 %v2308, %v2319
      %v2323 = vmul.f32 %v2311, %v2319
      %v2324 = vld [vmem:[%s3] sm:$0xff]
      %v2325 = vld [vmem:[%s3 + $0x8] sm:$0xff]
      %v2326 = vld [vmem:[%s3 + $0x10] sm:$0xff]
      %v2327 = vld [vmem:[%s3 + $0x18] sm:$0xff]
      %v2328 = vadd.f32 %v2320, %v2324
      %v2329 = vadd.f32 %v2321, %v2325
      %v2330 = vadd.f32 %v2322, %v2326
      %v2331 = vadd.f32 %v2323, %v2327
      %2332 = vst.msk [vmem:[%s202] sm:$0xff] %vm2214, %v2328
      %2333 = vst.msk [vmem:[%s202 + $0x8] sm:$0xff] %vm2214, %v2329
      %2334 = vst.msk [vmem:[%s202 + $0x10] sm:$0xff] %vm2214, %v2330
      %2335 = vst.msk [vmem:[%s202 + $0x18] sm:$0xff] %vm2214, %v2331
      %p2336 = scmp.lt.s32.totalorder %s15, 1
      %s2337 = scalar_select %p2336, %s15, 1
      %s2338 = smul.addr %s2337, 4
      %s2339 = smul.addr %s2338, 8
      %s2340 = scalar_lea.vmem %s4, %s2339
      // Predicated region
      $region37: #{starnet_forward.1} parent=35 // pred_check
        %p2341 = pneg %p122
      $region38: #{starnet_forward.1} parent=35 // pred_check_branch
        %2343 = sbr.rel (%p2341) target = $region40
      $region39: #{starnet_forward.1} parent=35 // pred_region
        _
      $region40: #{starnet_forward.1} parent=35 // pred_fallthru
        _
    $region36: #{starnet_forward.1} parent=5 // pred_fallthru
      _
    %p2344 = scmp.le.s32.totalorder 2, %s10
    // Predicated region
    $region41: #{starnet_forward.1} parent=5 // pred_check
      %p2345 = pneg %p2344
    $region42: #{starnet_forward.1} parent=5 // pred_check_branch
      %2347 = sbr.rel (%p2345) target = $region44
    $region43: #{starnet_forward.1} parent=5 // pred_region
      %s2348 = ssub.s32 %s10, 2
      // Predicated region
      $region45: #{starnet_forward.1} parent=43 // pred_check
        %p2349 = pneg %p128
      $region46: #{starnet_forward.1} parent=43 // pred_check_branch
        %2351 = sbr.rel (%p2349) target = $region48
      $region47: #{starnet_forward.1} parent=43 // pred_region
        %p2352 = scmp.lt.s32.totalorder %s16, 1
        %s2353 = scalar_select %p2352, %s16, 1
        %s2354 = smul.addr %s2353, 4
        %s2355 = smul.addr %s2354, 8
        %s2356 = scalar_lea.vmem %s4, %s2355
      $region48: #{starnet_forward.1} parent=43 // pred_fallthru
        _
    $region44: #{starnet_forward.1} parent=5 // pred_fallthru
      _
  $region6: #{starnet_forward.1} parent=0 // loop_footer
    %s14 = sadd.s32 1, %s10
  $region7: #{starnet_forward.1} parent=0 // loop_footer_branch
    %9 = sbr.rel target = $region3
  $region8: #{starnet_forward.1} parent=0 // loop_exit
    _

</llo_original>
